<compile_context>
chip_gen: v7x
topology: tpu7x:2x2x1
jax: 0.10.0
libtpu: 0.0.40
codegen_flags: <defaults>
</compile_context>

<pallas_src>
import functools

import jax
import jax.numpy as jnp
from jax import lax
from jax.experimental import pallas as pl
from jax.experimental.pallas import tpu as pltpu


RESWEIGHT = 0.1  # ReZero gate; PyTorch default init is 0.0 (identity encoder).


# ------------------------------ fused kernel -------------------------------

def _stransformer_kernel(x_ref, emw_ref, emb_ref, d1w_ref, d1b_ref,
                         d2w_ref, d2b_ref, pe_ref,
                         wq_ref, bq_ref, wk_ref, bk_ref, wv_ref, bv_ref,
                         wo_ref, ob_ref, w1_ref, b1_ref, w2_ref, b2_ref,
                         fcw_ref, fcb_ref,
                         out_ref, y_ref,
                         *, nhead, seq_len, b_tile, n_layers, resweight):
    """One grid step = (token tile t, encoder layer l)."""
    l = pl.program_id(1)
    S = seq_len
    M, E = y_ref.shape                      # M = b_tile * S tokens, E = d_embed

    # ---------- l == 0: embedding MLP + positional encoding prologue ----------
    @pl.when(l == 0)
    def _():
        t = jnp.dot(x_ref[...].astype(jnp.bfloat16), emw_ref[...],
                    preferred_element_type=jnp.float32) + emb_ref[...]
        t = jnp.maximum(t, 0.0)
        t = jnp.dot(t.astype(jnp.bfloat16), d1w_ref[...],
                    preferred_element_type=jnp.float32) + d1b_ref[...]
        t = jnp.maximum(t, 0.0)
        t = jnp.dot(t.astype(jnp.bfloat16), d2w_ref[...],
                    preferred_element_type=jnp.float32) + d2b_ref[...]
        t = jnp.maximum(t, 0.0)
        y_ref[...] = t + pe_ref[...]

    # ---------------------- RZTX encoder layer l (eval) -----------------------
    y = y_ref[...]                          # (M, E) f32, VMEM-resident
    y_bf = y.astype(jnp.bfloat16)

    # Per-head attention with the out-projection accumulated per head:
    #   concat_h(o_h) @ Wout == sum_h o_h @ Wout_h
    proj = jnp.zeros((M, E), jnp.float32)
    for h in range(nhead):
        # 1/sqrt(head_dim) is folded into wq / bq at init.
        q = jnp.dot(y_bf, wq_ref[h], preferred_element_type=jnp.float32) + bq_ref[h]
        k = jnp.dot(y_bf, wk_ref[h], preferred_element_type=jnp.float32) + bk_ref[h]
        v = jnp.dot(y_bf, wv_ref[h], preferred_element_type=jnp.float32) + bv_ref[h]
        q_bf = q.astype(jnp.bfloat16)
        k_bf = k.astype(jnp.bfloat16)
        v_bf = v.astype(jnp.bfloat16)

        # Attention is within-sequence: handle each of the b_tile sequences of
        # this token tile separately (tiny (S, S) scores, sublane-aligned rows).
        o_parts = []
        for b in range(b_tile):
            r0 = b * S
            s = lax.dot_general(q_bf[r0:r0 + S], k_bf[r0:r0 + S],
                                (((1,), (1,)), ((), ())),
                                preferred_element_type=jnp.float32)     # (S, S)
            m = jnp.max(s, axis=-1, keepdims=True)
            p = jnp.exp(s - m)
            p = p * pl.reciprocal(jnp.sum(p, axis=-1, keepdims=True), approx=True)
            o_parts.append(jnp.dot(p.astype(jnp.bfloat16), v_bf[r0:r0 + S],
                                   preferred_element_type=jnp.float32))  # (S, hd)
        o_h = o_parts[0] if b_tile == 1 else jnp.concatenate(o_parts, axis=0)
        proj = proj + jnp.dot(o_h.astype(jnp.bfloat16), wo_ref[h],
                              preferred_element_type=jnp.float32)

    y1 = y + resweight * (proj + ob_ref[...])          # ReZero residual 1

    f = jnp.dot(y1.astype(jnp.bfloat16), w1_ref[...],
                preferred_element_type=jnp.float32) + b1_ref[...]
    f = jnp.maximum(f, 0.0)
    y2 = y1 + resweight * (jnp.dot(f.astype(jnp.bfloat16), w2_ref[...],
                                   preferred_element_type=jnp.float32)
                           + b2_ref[...])              # ReZero residual 2
    y_ref[...] = y2

    # ------------- l == L-1: ReLU -> fc -> log_softmax head (fused) -----------
    # Computed for every token row of the tile (cheap, lane-sparse output);
    # the last-token row per sequence is selected outside the kernel.
    @pl.when(l == n_layers - 1)
    def _():
        yr = jnp.maximum(y2, 0.0)
        logits = jnp.dot(yr.astype(jnp.bfloat16), fcw_ref[...],
                         preferred_element_type=jnp.float32) + fcb_ref[...]
        zm = logits - jnp.max(logits, axis=-1, keepdims=True)
        out_ref[...] = zm - jnp.log(jnp.sum(jnp.exp(zm), axis=-1, keepdims=True))


# -------------------------------- model glue --------------------------------

def positional_encoding(S, d_model):
    position = jnp.arange(S, dtype=jnp.float32)[:, None]
    div_term = jnp.exp(jnp.arange(0, d_model, 2, dtype=jnp.float32)
                       * (-jnp.log(10000.0) / d_model))
    pe = jnp.zeros((S, d_model), jnp.float32)
    pe = pe.at[:, 0::2].set(jnp.sin(position * div_term))
    pe = pe.at[:, 1::2].set(jnp.cos(position * div_term))
    return pe


def stransformers_forward(x, params, nhead, num_layer):
    S, B, d_obj = x.shape
    E = params["emb_w"].shape[1]
    Dh = params["den1_w"].shape[1]
    F = params["w1"].shape[2]
    C = params["fc_w"].shape[1]
    hd = E // nhead

    # Batch-major token slab (B*S, d_obj): lane-dense blocks, whole sequences
    # stay contiguous so attention is self-contained within a token tile.
    x2d = jnp.transpose(x, (1, 0, 2)).reshape(B * S, d_obj)

    # Token tile = b_tile whole sequences (target >=128 rows, capped at B).
    b_tile = min(B, max(1, 128 // S))
    while B % b_tile:
        b_tile -= 1
    T = B // b_tile
    M = b_tile * S

    pe_tile = jnp.tile(positional_encoding(S, E), (b_tile, 1))     # (M, E)

    kern = functools.partial(_stransformer_kernel, nhead=nhead, seq_len=S,
                             b_tile=b_tile, n_layers=num_layer,
                             resweight=RESWEIGHT)

    # TODO(synk): at production sizes (d_ff=2048, num_layer=6, large S) tile
    # attention over KV (flash-style online softmax), set vmem_limit_bytes, and
    # consider pipeline_mode=pl.Buffered(3) on the stacked weight specs so the
    # next layer's weight slab streams during the current layer on v5e/v6e.
    out_all = pl.pallas_call(
        kern,
        out_shape=jax.ShapeDtypeStruct((T, M, C), jnp.float32),
        grid=(T, num_layer),
        in_specs=[
            pl.BlockSpec((M, d_obj), lambda t, l: (t, 0)),          # x tile
            pl.BlockSpec((d_obj, E), lambda t, l: (0, 0)),          # embedding
            pl.BlockSpec((1, E), lambda t, l: (0, 0)),
            pl.BlockSpec((E, Dh), lambda t, l: (0, 0)),             # denoise
            pl.BlockSpec((1, Dh), lambda t, l: (0, 0)),
            pl.BlockSpec((Dh, E), lambda t, l: (0, 0)),             # denoise2
            pl.BlockSpec((1, E), lambda t, l: (0, 0)),
            pl.BlockSpec((M, E), lambda t, l: (0, 0)),              # pos-enc
            pl.BlockSpec((None, nhead, E, hd), lambda t, l: (l, 0, 0, 0)),  # wq
            pl.BlockSpec((None, nhead, 1, hd), lambda t, l: (l, 0, 0, 0)),  # bq
            pl.BlockSpec((None, nhead, E, hd), lambda t, l: (l, 0, 0, 0)),  # wk
            pl.BlockSpec((None, nhead, 1, hd), lambda t, l: (l, 0, 0, 0)),  # bk
            pl.BlockSpec((None, nhead, E, hd), lambda t, l: (l, 0, 0, 0)),  # wv
            pl.BlockSpec((None, nhead, 1, hd), lambda t, l: (l, 0, 0, 0)),  # bv
            pl.BlockSpec((None, nhead, hd, E), lambda t, l: (l, 0, 0, 0)),  # wo
            pl.BlockSpec((None, 1, E), lambda t, l: (l, 0, 0)),             # ob
            pl.BlockSpec((None, E, F), lambda t, l: (l, 0, 0)),             # ffn w1
            pl.BlockSpec((None, 1, F), lambda t, l: (l, 0, 0)),
            pl.BlockSpec((None, F, E), lambda t, l: (l, 0, 0)),             # ffn w2
            pl.BlockSpec((None, 1, E), lambda t, l: (l, 0, 0)),
            pl.BlockSpec((E, C), lambda t, l: (0, 0)),              # fc head
            pl.BlockSpec((1, C), lambda t, l: (0, 0)),
        ],
        out_specs=pl.BlockSpec((None, M, C), lambda t, l: (t, 0, 0)),
        scratch_shapes=[pltpu.VMEM((M, E), jnp.float32)],           # resident y
        compiler_params=pltpu.CompilerParams(
            dimension_semantics=("parallel", "arbitrary")),
    )(x2d, params["emb_w"], params["emb_b"], params["den1_w"], params["den1_b"],
      params["den2_w"], params["den2_b"], pe_tile,
      params["wq"], params["bq"], params["wk"], params["bk"],
      params["wv"], params["bv"], params["wo"], params["ob"],
      params["w1"], params["b1"], params["w2"], params["b2"],
      params["fc_w"], params["fc_b"])

    # (T, M, C) -> (B, S, C); keep only the last sequence position per batch.
    return out_all.reshape(B, S, C)[:, S - 1, :]


# -------------------------------- param init --------------------------------

def init_params(key, d_obj, nhead, num_layer, d_embed, d_class, d_ff,
                d_hidden=256, scale=0.05):
    E, hd, L = d_embed, d_embed // nhead, num_layer
    ks = jax.random.split(key, 5)

    def lin(k, din, dout):
        kw, kb = jax.random.split(k)
        w = (jax.random.normal(kw, (din, dout), jnp.float32) * scale
             ).astype(jnp.bfloat16)
        b = jax.random.normal(kb, (1, dout), jnp.float32) * scale
        return w, b

    p = {}
    p["emb_w"], p["emb_b"] = lin(ks[0], d_obj, E)
    p["den1_w"], p["den1_b"] = lin(ks[1], E, d_hidden)
    p["den2_w"], p["den2_b"] = lin(ks[2], d_hidden, E)
    p["fc_w"], p["fc_b"] = lin(ks[3], E, d_class)

    lk = jax.random.split(ks[4], 12)
    qk_scale = 1.0 / float(hd) ** 0.5
    # Per-head projection weights, layer-stacked.  1/sqrt(hd) folded into Q.
    p["wq"] = (jax.random.normal(lk[0], (L, nhead, E, hd), jnp.float32)
               * scale * qk_scale).astype(jnp.bfloat16)
    p["bq"] = jax.random.normal(lk[1], (L, nhead, 1, hd), jnp.float32) * scale * qk_scale
    p["wk"] = (jax.random.normal(lk[2], (L, nhead, E, hd), jnp.float32)
               * scale).astype(jnp.bfloat16)
    p["bk"] = jax.random.normal(lk[3], (L, nhead, 1, hd), jnp.float32) * scale
    p["wv"] = (jax.random.normal(lk[4], (L, nhead, E, hd), jnp.float32)
               * scale).astype(jnp.bfloat16)
    p["bv"] = jax.random.normal(lk[5], (L, nhead, 1, hd), jnp.float32) * scale
    p["wo"] = (jax.random.normal(lk[6], (L, nhead, hd, E), jnp.float32)
               * scale).astype(jnp.bfloat16)
    p["ob"] = jax.random.normal(lk[7], (L, 1, E), jnp.float32) * scale
    p["w1"] = (jax.random.normal(lk[8], (L, E, d_ff), jnp.float32)
               * scale).astype(jnp.bfloat16)
    p["b1"] = jax.random.normal(lk[9], (L, 1, d_ff), jnp.float32) * scale
    p["w2"] = (jax.random.normal(lk[10], (L, d_ff, E), jnp.float32)
               * scale).astype(jnp.bfloat16)
    p["b2"] = jax.random.normal(lk[11], (L, 1, E), jnp.float32) * scale
    return p


# ----------------------------------- main ------------------------------------

if __name__ == "__main__":
    # Small shapes consistent with Stransformers(d_obj, nhead):
    S, B = 8, 2            # sequence length, batch
    d_obj = 16             # input feature dim
    nhead = 4
    num_layer = 2          # small stack (module default is 6)
    d_embed = 128          # module default
    d_class = 4            # module default
    d_ff = 256             # small FFN width (RZTX default is 2048)

    key = jax.random.PRNGKey(0)
    kx, kp = jax.random.split(key)
    x = jax.random.normal(kx, (S, B, d_obj), jnp.float32)
    params = init_params(kp, d_obj, nhead, num_layer, d_embed, d_class, d_ff)

    fwd = jax.jit(functools.partial(stransformers_forward,
                                    nhead=nhead, num_layer=num_layer))
    out = jax.block_until_ready(fwd(x, params))

    assert out.shape == (B, d_class), out.shape
    assert bool(jnp.all(jnp.isfinite(out)))
    # log_softmax sanity: probabilities sum to 1 per row.
    assert bool(jnp.allclose(jnp.sum(jnp.exp(out), axis=-1), 1.0, atol=1e-4))
    print("KERNEL_OK")
</pallas_src>

<mosaic_0001>
module attributes {stable_mosaic.version = 11 : i64} {
  func.func @_stransformer_kernel(%arg0: i32, %arg1: i32, %arg2: memref<16x16xf32, #tpu.memory_space<vmem>>, %arg3: memref<16x128xbf16, #tpu.memory_space<vmem>>, %arg4: memref<1x128xf32, #tpu.memory_space<vmem>>, %arg5: memref<128x256xbf16, #tpu.memory_space<vmem>>, %arg6: memref<1x256xf32, #tpu.memory_space<vmem>>, %arg7: memref<256x128xbf16, #tpu.memory_space<vmem>>, %arg8: memref<1x128xf32, #tpu.memory_space<vmem>>, %arg9: memref<16x128xf32, #tpu.memory_space<vmem>>, %arg10: memref<1x4x128x32xbf16, #tpu.memory_space<vmem>>, %arg11: memref<1x4x1x32xf32, #tpu.memory_space<vmem>>, %arg12: memref<1x4x128x32xbf16, #tpu.memory_space<vmem>>, %arg13: memref<1x4x1x32xf32, #tpu.memory_space<vmem>>, %arg14: memref<1x4x128x32xbf16, #tpu.memory_space<vmem>>, %arg15: memref<1x4x1x32xf32, #tpu.memory_space<vmem>>, %arg16: memref<1x4x32x128xbf16, #tpu.memory_space<vmem>>, %arg17: memref<1x1x128xf32, #tpu.memory_space<vmem>>, %arg18: memref<1x128x256xbf16, #tpu.memory_space<vmem>>, %arg19: memref<1x1x256xf32, #tpu.memory_space<vmem>>, %arg20: memref<1x256x128xbf16, #tpu.memory_space<vmem>>, %arg21: memref<1x1x128xf32, #tpu.memory_space<vmem>>, %arg22: memref<128x4xbf16, #tpu.memory_space<vmem>>, %arg23: memref<1x4xf32, #tpu.memory_space<vmem>>, %arg24: memref<1x16x4xf32, #tpu.memory_space<vmem>>, %arg25: memref<16x128xf32, #tpu.memory_space<vmem>>) attributes {dimension_semantics = [#tpu.dimension_semantics<parallel>, #tpu.dimension_semantics<arbitrary>], iteration_bounds = array<i64: 1, 2>, scalar_prefetch = 0 : i64, scratch_operands = 1 : i64, tpu.core_type = #tpu.core_type<tc>, window_params = [{transform_indices = @transform_0, window_bounds = array<i64: 16, 16>}, {pipeline_mode = #tpu.pipeline_mode<synchronous>, transform_indices = @transform_1, window_bounds = array<i64: 16, 128>}, {pipeline_mode = #tpu.pipeline_mode<synchronous>, transform_indices = @transform_2, window_bounds = array<i64: 1, 128>}, {pipeline_mode = #tpu.pipeline_mode<synchronous>, transform_indices = @transform_3, window_bounds = array<i64: 128, 256>}, {pipeline_mode = #tpu.pipeline_mode<synchronous>, transform_indices = @transform_4, window_bounds = array<i64: 1, 256>}, {pipeline_mode = #tpu.pipeline_mode<synchronous>, transform_indices = @transform_5, window_bounds = array<i64: 256, 128>}, {pipeline_mode = #tpu.pipeline_mode<synchronous>, transform_indices = @transform_6, window_bounds = array<i64: 1, 128>}, {pipeline_mode = #tpu.pipeline_mode<synchronous>, transform_indices = @transform_7, window_bounds = array<i64: 16, 128>}, {transform_indices = @transform_8, window_bounds = array<i64: 1, 4, 128, 32>}, {transform_indices = @transform_9, window_bounds = array<i64: 1, 4, 1, 32>}, {transform_indices = @transform_10, window_bounds = array<i64: 1, 4, 128, 32>}, {transform_indices = @transform_11, window_bounds = array<i64: 1, 4, 1, 32>}, {transform_indices = @transform_12, window_bounds = array<i64: 1, 4, 128, 32>}, {transform_indices = @transform_13, window_bounds = array<i64: 1, 4, 1, 32>}, {transform_indices = @transform_14, window_bounds = array<i64: 1, 4, 32, 128>}, {transform_indices = @transform_15, window_bounds = array<i64: 1, 1, 128>}, {transform_indices = @transform_16, window_bounds = array<i64: 1, 128, 256>}, {transform_indices = @transform_17, window_bounds = array<i64: 1, 1, 256>}, {transform_indices = @transform_18, window_bounds = array<i64: 1, 256, 128>}, {transform_indices = @transform_19, window_bounds = array<i64: 1, 1, 128>}, {pipeline_mode = #tpu.pipeline_mode<synchronous>, transform_indices = @transform_20, window_bounds = array<i64: 128, 4>}, {pipeline_mode = #tpu.pipeline_mode<synchronous>, transform_indices = @transform_21, window_bounds = array<i64: 1, 4>}, {transform_indices = @transform_22, window_bounds = array<i64: 1, 16, 4>}]} {
    %c0_i32 = arith.constant 0 : i32
    %0 = arith.cmpi eq, %arg1, %c0_i32 : i32
    %1 = arith.extui %0 : i1 to i32
    %c0_i32_0 = arith.constant 0 : i32
    %2 = arith.cmpi ne, %1, %c0_i32_0 : i32
    scf.if %2 {
      %c0_182 = arith.constant 0 : index
      %c0_183 = arith.constant 0 : index
      %286 = vector.load %arg2[%c0_182, %c0_183] : memref<16x16xf32, #tpu.memory_space<vmem>>, vector<16x16xf32>
      %287 = arith.truncf %286 : vector<16x16xf32> to vector<16x16xbf16>
      %c0_184 = arith.constant 0 : index
      %c0_185 = arith.constant 0 : index
      %288 = vector.load %arg3[%c0_184, %c0_185] : memref<16x128xbf16, #tpu.memory_space<vmem>>, vector<16x128xbf16>
      %cst_186 = arith.constant dense<0.000000e+00> : vector<16x128xf32>
      %289 = tpu.matmul %287, %288, %cst_186 {dimension_numbers = #tpu.dot_dimension_numbers<[1], [0], [0], [1], [0, 0, 1, 1], [], []>} : vector<16x16xbf16>, vector<16x128xbf16>, vector<16x128xf32> -> vector<16x128xf32>
      %c0_187 = arith.constant 0 : index
      %c0_188 = arith.constant 0 : index
      %290 = vector.load %arg4[%c0_187, %c0_188] : memref<1x128xf32, #tpu.memory_space<vmem>>, vector<1x128xf32>
      %291 = vector.broadcast %290 : vector<1x128xf32> to vector<16x128xf32>
      %292 = arith.addf %289, %291 : vector<16x128xf32>
      %cst_189 = arith.constant 0.000000e+00 : f32
      %293 = vector.broadcast %cst_189 : f32 to vector<16x128xf32>
      %294 = arith.maximumf %292, %293 : vector<16x128xf32>
      %295 = arith.truncf %294 : vector<16x128xf32> to vector<16x128xbf16>
      %c0_190 = arith.constant 0 : index
      %c0_191 = arith.constant 0 : index
      %296 = vector.load %arg5[%c0_190, %c0_191] : memref<128x256xbf16, #tpu.memory_space<vmem>>, vector<128x256xbf16>
      %cst_192 = arith.constant dense<0.000000e+00> : vector<16x256xf32>
      %297 = tpu.matmul %295, %296, %cst_192 {dimension_numbers = #tpu.dot_dimension_numbers<[1], [0], [0], [1], [0, 0, 1, 1], [], []>} : vector<16x128xbf16>, vector<128x256xbf16>, vector<16x256xf32> -> vector<16x256xf32>
      %c0_193 = arith.constant 0 : index
      %c0_194 = arith.constant 0 : index
      %298 = vector.load %arg6[%c0_193, %c0_194] : memref<1x256xf32, #tpu.memory_space<vmem>>, vector<1x256xf32>
      %299 = vector.broadcast %298 : vector<1x256xf32> to vector<16x256xf32>
      %300 = arith.addf %297, %299 : vector<16x256xf32>
      %cst_195 = arith.constant 0.000000e+00 : f32
      %301 = vector.broadcast %cst_195 : f32 to vector<16x256xf32>
      %302 = arith.maximumf %300, %301 : vector<16x256xf32>
      %303 = arith.truncf %302 : vector<16x256xf32> to vector<16x256xbf16>
      %c0_196 = arith.constant 0 : index
      %c0_197 = arith.constant 0 : index
      %304 = vector.load %arg7[%c0_196, %c0_197] : memref<256x128xbf16, #tpu.memory_space<vmem>>, vector<256x128xbf16>
      %cst_198 = arith.constant dense<0.000000e+00> : vector<16x128xf32>
      %305 = tpu.matmul %303, %304, %cst_198 {dimension_numbers = #tpu.dot_dimension_numbers<[1], [0], [0], [1], [0, 0, 1, 1], [], []>} : vector<16x256xbf16>, vector<256x128xbf16>, vector<16x128xf32> -> vector<16x128xf32>
      %c0_199 = arith.constant 0 : index
      %c0_200 = arith.constant 0 : index
      %306 = vector.load %arg8[%c0_199, %c0_200] : memref<1x128xf32, #tpu.memory_space<vmem>>, vector<1x128xf32>
      %307 = vector.broadcast %306 : vector<1x128xf32> to vector<16x128xf32>
      %308 = arith.addf %305, %307 : vector<16x128xf32>
      %cst_201 = arith.constant 0.000000e+00 : f32
      %309 = vector.broadcast %cst_201 : f32 to vector<16x128xf32>
      %310 = arith.maximumf %308, %309 : vector<16x128xf32>
      %c0_202 = arith.constant 0 : index
      %c0_203 = arith.constant 0 : index
      %311 = vector.load %arg9[%c0_202, %c0_203] : memref<16x128xf32, #tpu.memory_space<vmem>>, vector<16x128xf32>
      %312 = arith.addf %310, %311 : vector<16x128xf32>
      %c0_204 = arith.constant 0 : index
      %c0_205 = arith.constant 0 : index
      %313 = vector.load %arg25[%c0_204, %c0_205] : memref<16x128xf32, #tpu.memory_space<vmem>>, vector<16x128xf32>
      tpu.vector_store %arg25[%c0_204, %c0_205], %312 {strides = array<i32>} : memref<16x128xf32, #tpu.memory_space<vmem>>, vector<16x128xf32>,
    } else {
    }
    %c0 = arith.constant 0 : index
    %c0_1 = arith.constant 0 : index
    %3 = vector.load %arg25[%c0, %c0_1] : memref<16x128xf32, #tpu.memory_space<vmem>>, vector<16x128xf32>
    %4 = arith.truncf %3 : vector<16x128xf32> to vector<16x128xbf16>
    %cst = arith.constant 0.000000e+00 : f32
    %5 = vector.broadcast %cst : f32 to vector<16x128xf32>
    %c0_2 = arith.constant 0 : index
    %c0_3 = arith.constant 0 : index
    %c0_4 = arith.constant 0 : index
    %c0_5 = arith.constant 0 : index
    %6 = vector.load %arg10[%c0_2, %c0_3, %c0_4, %c0_5] : memref<1x4x128x32xbf16, #tpu.memory_space<vmem>>, vector<1x1x128x32xbf16>
    %7 = vector.shape_cast %6 : vector<1x1x128x32xbf16> to vector<128x32xbf16>
    %cst_6 = arith.constant dense<0.000000e+00> : vector<16x32xf32>
    %8 = tpu.matmul %4, %7, %cst_6 {dimension_numbers = #tpu.dot_dimension_numbers<[1], [0], [0], [1], [0, 0, 1, 1], [], []>} : vector<16x128xbf16>, vector<128x32xbf16>, vector<16x32xf32> -> vector<16x32xf32>
    %c0_7 = arith.constant 0 : index
    %c0_8 = arith.constant 0 : index
    %c0_9 = arith.constant 0 : index
    %c0_10 = arith.constant 0 : index
    %9 = vector.load %arg11[%c0_7, %c0_8, %c0_9, %c0_10] : memref<1x4x1x32xf32, #tpu.memory_space<vmem>>, vector<1x1x1x32xf32>
    %10 = vector.shape_cast %9 : vector<1x1x1x32xf32> to vector<1x32xf32>
    %11 = vector.broadcast %10 : vector<1x32xf32> to vector<16x32xf32>
    %12 = arith.addf %8, %11 : vector<16x32xf32>
    %c0_11 = arith.constant 0 : index
    %c0_12 = arith.constant 0 : index
    %c0_13 = arith.constant 0 : index
    %c0_14 = arith.constant 0 : index
    %13 = vector.load %arg12[%c0_11, %c0_12, %c0_13, %c0_14] : memref<1x4x128x32xbf16, #tpu.memory_space<vmem>>, vector<1x1x128x32xbf16>
    %14 = vector.shape_cast %13 : vector<1x1x128x32xbf16> to vector<128x32xbf16>
    %cst_15 = arith.constant dense<0.000000e+00> : vector<16x32xf32>
    %15 = tpu.matmul %4, %14, %cst_15 {dimension_numbers = #tpu.dot_dimension_numbers<[1], [0], [0], [1], [0, 0, 1, 1], [], []>} : vector<16x128xbf16>, vector<128x32xbf16>, vector<16x32xf32> -> vector<16x32xf32>
    %c0_16 = arith.constant 0 : index
    %c0_17 = arith.constant 0 : index
    %c0_18 = arith.constant 0 : index
    %c0_19 = arith.constant 0 : index
    %16 = vector.load %arg13[%c0_16, %c0_17, %c0_18, %c0_19] : memref<1x4x1x32xf32, #tpu.memory_space<vmem>>, vector<1x1x1x32xf32>
    %17 = vector.shape_cast %16 : vector<1x1x1x32xf32> to vector<1x32xf32>
    %18 = vector.broadcast %17 : vector<1x32xf32> to vector<16x32xf32>
    %19 = arith.addf %15, %18 : vector<16x32xf32>
    %c0_20 = arith.constant 0 : index
    %c0_21 = arith.constant 0 : index
    %c0_22 = arith.constant 0 : index
    %c0_23 = arith.constant 0 : index
    %20 = vector.load %arg14[%c0_20, %c0_21, %c0_22, %c0_23] : memref<1x4x128x32xbf16, #tpu.memory_space<vmem>>, vector<1x1x128x32xbf16>
    %21 = vector.shape_cast %20 : vector<1x1x128x32xbf16> to vector<128x32xbf16>
    %cst_24 = arith.constant dense<0.000000e+00> : vector<16x32xf32>
    %22 = tpu.matmul %4, %21, %cst_24 {dimension_numbers = #tpu.dot_dimension_numbers<[1], [0], [0], [1], [0, 0, 1, 1], [], []>} : vector<16x128xbf16>, vector<128x32xbf16>, vector<16x32xf32> -> vector<16x32xf32>
    %c0_25 = arith.constant 0 : index
    %c0_26 = arith.constant 0 : index
    %c0_27 = arith.constant 0 : index
    %c0_28 = arith.constant 0 : index
    %23 = vector.load %arg15[%c0_25, %c0_26, %c0_27, %c0_28] : memref<1x4x1x32xf32, #tpu.memory_space<vmem>>, vector<1x1x1x32xf32>
    %24 = vector.shape_cast %23 : vector<1x1x1x32xf32> to vector<1x32xf32>
    %25 = vector.broadcast %24 : vector<1x32xf32> to vector<16x32xf32>
    %26 = arith.addf %22, %25 : vector<16x32xf32>
    %27 = arith.truncf %12 : vector<16x32xf32> to vector<16x32xbf16>
    %28 = arith.truncf %19 : vector<16x32xf32> to vector<16x32xbf16>
    %29 = arith.truncf %26 : vector<16x32xf32> to vector<16x32xbf16>
    %30 = vector.extract_strided_slice %27 {offsets = [0, 0], sizes = [8, 32], strides = [1, 1]} : vector<16x32xbf16> to vector<8x32xbf16>
    %31 = vector.extract_strided_slice %28 {offsets = [0, 0], sizes = [8, 32], strides = [1, 1]} : vector<16x32xbf16> to vector<8x32xbf16>
    %cst_29 = arith.constant dense<0.000000e+00> : vector<8x8xf32>
    %32 = tpu.matmul %30, %31, %cst_29 {dimension_numbers = #tpu.dot_dimension_numbers<[1], [1], [0], [0], [0, 0, 1, 0], [], []>} : vector<8x32xbf16>, vector<8x32xbf16>, vector<8x8xf32> -> vector<8x8xf32>
    %cst_30 = arith.constant dense<0xFF800000> : vector<8xf32>
    %33 = vector.multi_reduction <maximumf>, %32, %cst_30 [1] : vector<8x8xf32> to vector<8xf32>
    %34 = vector.shape_cast %33 : vector<8xf32> to vector<8x1xf32>
    %35 = vector.broadcast %34 : vector<8x1xf32> to vector<8x8xf32>
    %36 = arith.subf %32, %35 : vector<8x8xf32>
    %37 = math.exp %36 : vector<8x8xf32>
    %cst_31 = arith.constant dense<0.000000e+00> : vector<8xf32>
    %38 = vector.multi_reduction <add>, %37, %cst_31 [1] : vector<8x8xf32> to vector<8xf32>
    %39 = vector.shape_cast %38 : vector<8xf32> to vector<8x1xf32>
    %40 = tpu.reciprocal %39 {approx = true} : vector<8x1xf32> -> vector<8x1xf32>
    %41 = vector.broadcast %40 : vector<8x1xf32> to vector<8x8xf32>
    %42 = arith.mulf %37, %41 : vector<8x8xf32>
    %43 = arith.truncf %42 : vector<8x8xf32> to vector<8x8xbf16>
    %44 = vector.extract_strided_slice %29 {offsets = [0, 0], sizes = [8, 32], strides = [1, 1]} : vector<16x32xbf16> to vector<8x32xbf16>
    %cst_32 = arith.constant dense<0.000000e+00> : vector<8x32xf32>
    %45 = tpu.matmul %43, %44, %cst_32 {dimension_numbers = #tpu.dot_dimension_numbers<[1], [0], [0], [1], [0, 0, 1, 1], [], []>} : vector<8x8xbf16>, vector<8x32xbf16>, vector<8x32xf32> -> vector<8x32xf32>
    %46 = vector.extract_strided_slice %27 {offsets = [8, 0], sizes = [8, 32], strides = [1, 1]} : vector<16x32xbf16> to vector<8x32xbf16>
    %47 = vector.extract_strided_slice %28 {offsets = [8, 0], sizes = [8, 32], strides = [1, 1]} : vector<16x32xbf16> to vector<8x32xbf16>
    %cst_33 = arith.constant dense<0.000000e+00> : vector<8x8xf32>
    %48 = tpu.matmul %46, %47, %cst_33 {dimension_numbers = #tpu.dot_dimension_numbers<[1], [1], [0], [0], [0, 0, 1, 0], [], []>} : vector<8x32xbf16>, vector<8x32xbf16>, vector<8x8xf32> -> vector<8x8xf32>
    %cst_34 = arith.constant dense<0xFF800000> : vector<8xf32>
    %49 = vector.multi_reduction <maximumf>, %48, %cst_34 [1] : vector<8x8xf32> to vector<8xf32>
    %50 = vector.shape_cast %49 : vector<8xf32> to vector<8x1xf32>
    %51 = vector.broadcast %50 : vector<8x1xf32> to vector<8x8xf32>
    %52 = arith.subf %48, %51 : vector<8x8xf32>
    %53 = math.exp %52 : vector<8x8xf32>
    %cst_35 = arith.constant dense<0.000000e+00> : vector<8xf32>
    %54 = vector.multi_reduction <add>, %53, %cst_35 [1] : vector<8x8xf32> to vector<8xf32>
    %55 = vector.shape_cast %54 : vector<8xf32> to vector<8x1xf32>
    %56 = tpu.reciprocal %55 {approx = true} : vector<8x1xf32> -> vector<8x1xf32>
    %57 = vector.broadcast %56 : vector<8x1xf32> to vector<8x8xf32>
    %58 = arith.mulf %53, %57 : vector<8x8xf32>
    %59 = arith.truncf %58 : vector<8x8xf32> to vector<8x8xbf16>
    %60 = vector.extract_strided_slice %29 {offsets = [8, 0], sizes = [8, 32], strides = [1, 1]} : vector<16x32xbf16> to vector<8x32xbf16>
    %cst_36 = arith.constant dense<0.000000e+00> : vector<8x32xf32>
    %61 = tpu.matmul %59, %60, %cst_36 {dimension_numbers = #tpu.dot_dimension_numbers<[1], [0], [0], [1], [0, 0, 1, 1], [], []>} : vector<8x8xbf16>, vector<8x32xbf16>, vector<8x32xf32> -> vector<8x32xf32>
    %62 = tpu.concatenate %45, %61 in 0 : vector<8x32xf32>, vector<8x32xf32> -> vector<16x32xf32>
    %63 = arith.truncf %62 : vector<16x32xf32> to vector<16x32xbf16>
    %c0_37 = arith.constant 0 : index
    %c0_38 = arith.constant 0 : index
    %c0_39 = arith.constant 0 : index
    %c0_40 = arith.constant 0 : index
    %64 = vector.load %arg16[%c0_37, %c0_38, %c0_39, %c0_40] : memref<1x4x32x128xbf16, #tpu.memory_space<vmem>>, vector<1x1x32x128xbf16>
    %65 = vector.shape_cast %64 : vector<1x1x32x128xbf16> to vector<32x128xbf16>
    %cst_41 = arith.constant dense<0.000000e+00> : vector<16x128xf32>
    %66 = tpu.matmul %63, %65, %cst_41 {dimension_numbers = #tpu.dot_dimension_numbers<[1], [0], [0], [1], [0, 0, 1, 1], [], []>} : vector<16x32xbf16>, vector<32x128xbf16>, vector<16x128xf32> -> vector<16x128xf32>
    %67 = arith.addf %5, %66 : vector<16x128xf32>
    %c0_42 = arith.constant 0 : index
    %c1 = arith.constant 1 : index
    %c0_43 = arith.constant 0 : index
    %c0_44 = arith.constant 0 : index
    %68 = vector.load %arg10[%c0_42, %c1, %c0_43, %c0_44] : memref<1x4x128x32xbf16, #tpu.memory_space<vmem>>, vector<1x1x128x32xbf16>
    %69 = vector.shape_cast %68 : vector<1x1x128x32xbf16> to vector<128x32xbf16>
    %cst_45 = arith.constant dense<0.000000e+00> : vector<16x32xf32>
    %70 = tpu.matmul %4, %69, %cst_45 {dimension_numbers = #tpu.dot_dimension_numbers<[1], [0], [0], [1], [0, 0, 1, 1], [], []>} : vector<16x128xbf16>, vector<128x32xbf16>, vector<16x32xf32> -> vector<16x32xf32>
    %c0_46 = arith.constant 0 : index
    %c1_47 = arith.constant 1 : index
    %c0_48 = arith.constant 0 : index
    %c0_49 = arith.constant 0 : index
    %71 = vector.load %arg11[%c0_46, %c1_47, %c0_48, %c0_49] : memref<1x4x1x32xf32, #tpu.memory_space<vmem>>, vector<1x1x1x32xf32>
    %72 = vector.shape_cast %71 : vector<1x1x1x32xf32> to vector<1x32xf32>
    %73 = vector.broadcast %72 : vector<1x32xf32> to vector<16x32xf32>
    %74 = arith.addf %70, %73 : vector<16x32xf32>
    %c0_50 = arith.constant 0 : index
    %c1_51 = arith.constant 1 : index
    %c0_52 = arith.constant 0 : index
    %c0_53 = arith.constant 0 : index
    %75 = vector.load %arg12[%c0_50, %c1_51, %c0_52, %c0_53] : memref<1x4x128x32xbf16, #tpu.memory_space<vmem>>, vector<1x1x128x32xbf16>
    %76 = vector.shape_cast %75 : vector<1x1x128x32xbf16> to vector<128x32xbf16>
    %cst_54 = arith.constant dense<0.000000e+00> : vector<16x32xf32>
    %77 = tpu.matmul %4, %76, %cst_54 {dimension_numbers = #tpu.dot_dimension_numbers<[1], [0], [0], [1], [0, 0, 1, 1], [], []>} : vector<16x128xbf16>, vector<128x32xbf16>, vector<16x32xf32> -> vector<16x32xf32>
    %c0_55 = arith.constant 0 : index
    %c1_56 = arith.constant 1 : index
    %c0_57 = arith.constant 0 : index
    %c0_58 = arith.constant 0 : index
    %78 = vector.load %arg13[%c0_55, %c1_56, %c0_57, %c0_58] : memref<1x4x1x32xf32, #tpu.memory_space<vmem>>, vector<1x1x1x32xf32>
    %79 = vector.shape_cast %78 : vector<1x1x1x32xf32> to vector<1x32xf32>
    %80 = vector.broadcast %79 : vector<1x32xf32> to vector<16x32xf32>
    %81 = arith.addf %77, %80 : vector<16x32xf32>
    %c0_59 = arith.constant 0 : index
    %c1_60 = arith.constant 1 : index
    %c0_61 = arith.constant 0 : index
    %c0_62 = arith.constant 0 : index
    %82 = vector.load %arg14[%c0_59, %c1_60, %c0_61, %c0_62] : memref<1x4x128x32xbf16, #tpu.memory_space<vmem>>, vector<1x1x128x32xbf16>
    %83 = vector.shape_cast %82 : vector<1x1x128x32xbf16> to vector<128x32xbf16>
    %cst_63 = arith.constant dense<0.000000e+00> : vector<16x32xf32>
    %84 = tpu.matmul %4, %83, %cst_63 {dimension_numbers = #tpu.dot_dimension_numbers<[1], [0], [0], [1], [0, 0, 1, 1], [], []>} : vector<16x128xbf16>, vector<128x32xbf16>, vector<16x32xf32> -> vector<16x32xf32>
    %c0_64 = arith.constant 0 : index
    %c1_65 = arith.constant 1 : index
    %c0_66 = arith.constant 0 : index
    %c0_67 = arith.constant 0 : index
    %85 = vector.load %arg15[%c0_64, %c1_65, %c0_66, %c0_67] : memref<1x4x1x32xf32, #tpu.memory_space<vmem>>, vector<1x1x1x32xf32>
    %86 = vector.shape_cast %85 : vector<1x1x1x32xf32> to vector<1x32xf32>
    %87 = vector.broadcast %86 : vector<1x32xf32> to vector<16x32xf32>
    %88 = arith.addf %84, %87 : vector<16x32xf32>
    %89 = arith.truncf %74 : vector<16x32xf32> to vector<16x32xbf16>
    %90 = arith.truncf %81 : vector<16x32xf32> to vector<16x32xbf16>
    %91 = arith.truncf %88 : vector<16x32xf32> to vector<16x32xbf16>
    %92 = vector.extract_strided_slice %89 {offsets = [0, 0], sizes = [8, 32], strides = [1, 1]} : vector<16x32xbf16> to vector<8x32xbf16>
    %93 = vector.extract_strided_slice %90 {offsets = [0, 0], sizes = [8, 32], strides = [1, 1]} : vector<16x32xbf16> to vector<8x32xbf16>
    %cst_68 = arith.constant dense<0.000000e+00> : vector<8x8xf32>
    %94 = tpu.matmul %92, %93, %cst_68 {dimension_numbers = #tpu.dot_dimension_numbers<[1], [1], [0], [0], [0, 0, 1, 0], [], []>} : vector<8x32xbf16>, vector<8x32xbf16>, vector<8x8xf32> -> vector<8x8xf32>
    %cst_69 = arith.constant dense<0xFF800000> : vector<8xf32>
    %95 = vector.multi_reduction <maximumf>, %94, %cst_69 [1] : vector<8x8xf32> to vector<8xf32>
    %96 = vector.shape_cast %95 : vector<8xf32> to vector<8x1xf32>
    %97 = vector.broadcast %96 : vector<8x1xf32> to vector<8x8xf32>
    %98 = arith.subf %94, %97 : vector<8x8xf32>
    %99 = math.exp %98 : vector<8x8xf32>
    %cst_70 = arith.constant dense<0.000000e+00> : vector<8xf32>
    %100 = vector.multi_reduction <add>, %99, %cst_70 [1] : vector<8x8xf32> to vector<8xf32>
    %101 = vector.shape_cast %100 : vector<8xf32> to vector<8x1xf32>
    %102 = tpu.reciprocal %101 {approx = true} : vector<8x1xf32> -> vector<8x1xf32>
    %103 = vector.broadcast %102 : vector<8x1xf32> to vector<8x8xf32>
    %104 = arith.mulf %99, %103 : vector<8x8xf32>
    %105 = arith.truncf %104 : vector<8x8xf32> to vector<8x8xbf16>
    %106 = vector.extract_strided_slice %91 {offsets = [0, 0], sizes = [8, 32], strides = [1, 1]} : vector<16x32xbf16> to vector<8x32xbf16>
    %cst_71 = arith.constant dense<0.000000e+00> : vector<8x32xf32>
    %107 = tpu.matmul %105, %106, %cst_71 {dimension_numbers = #tpu.dot_dimension_numbers<[1], [0], [0], [1], [0, 0, 1, 1], [], []>} : vector<8x8xbf16>, vector<8x32xbf16>, vector<8x32xf32> -> vector<8x32xf32>
    %108 = vector.extract_strided_slice %89 {offsets = [8, 0], sizes = [8, 32], strides = [1, 1]} : vector<16x32xbf16> to vector<8x32xbf16>
    %109 = vector.extract_strided_slice %90 {offsets = [8, 0], sizes = [8, 32], strides = [1, 1]} : vector<16x32xbf16> to vector<8x32xbf16>
    %cst_72 = arith.constant dense<0.000000e+00> : vector<8x8xf32>
    %110 = tpu.matmul %108, %109, %cst_72 {dimension_numbers = #tpu.dot_dimension_numbers<[1], [1], [0], [0], [0, 0, 1, 0], [], []>} : vector<8x32xbf16>, vector<8x32xbf16>, vector<8x8xf32> -> vector<8x8xf32>
    %cst_73 = arith.constant dense<0xFF800000> : vector<8xf32>
    %111 = vector.multi_reduction <maximumf>, %110, %cst_73 [1] : vector<8x8xf32> to vector<8xf32>
    %112 = vector.shape_cast %111 : vector<8xf32> to vector<8x1xf32>
    %113 = vector.broadcast %112 : vector<8x1xf32> to vector<8x8xf32>
    %114 = arith.subf %110, %113 : vector<8x8xf32>
    %115 = math.exp %114 : vector<8x8xf32>
    %cst_74 = arith.constant dense<0.000000e+00> : vector<8xf32>
    %116 = vector.multi_reduction <add>, %115, %cst_74 [1] : vector<8x8xf32> to vector<8xf32>
    %117 = vector.shape_cast %116 : vector<8xf32> to vector<8x1xf32>
    %118 = tpu.reciprocal %117 {approx = true} : vector<8x1xf32> -> vector<8x1xf32>
    %119 = vector.broadcast %118 : vector<8x1xf32> to vector<8x8xf32>
    %120 = arith.mulf %115, %119 : vector<8x8xf32>
    %121 = arith.truncf %120 : vector<8x8xf32> to vector<8x8xbf16>
    %122 = vector.extract_strided_slice %91 {offsets = [8, 0], sizes = [8, 32], strides = [1, 1]} : vector<16x32xbf16> to vector<8x32xbf16>
    %cst_75 = arith.constant dense<0.000000e+00> : vector<8x32xf32>
    %123 = tpu.matmul %121, %122, %cst_75 {dimension_numbers = #tpu.dot_dimension_numbers<[1], [0], [0], [1], [0, 0, 1, 1], [], []>} : vector<8x8xbf16>, vector<8x32xbf16>, vector<8x32xf32> -> vector<8x32xf32>
    %124 = tpu.concatenate %107, %123 in 0 : vector<8x32xf32>, vector<8x32xf32> -> vector<16x32xf32>
    %125 = arith.truncf %124 : vector<16x32xf32> to vector<16x32xbf16>
    %c0_76 = arith.constant 0 : index
    %c1_77 = arith.constant 1 : index
    %c0_78 = arith.constant 0 : index
    %c0_79 = arith.constant 0 : index
    %126 = vector.load %arg16[%c0_76, %c1_77, %c0_78, %c0_79] : memref<1x4x32x128xbf16, #tpu.memory_space<vmem>>, vector<1x1x32x128xbf16>
    %127 = vector.shape_cast %126 : vector<1x1x32x128xbf16> to vector<32x128xbf16>
    %cst_80 = arith.constant dense<0.000000e+00> : vector<16x128xf32>
    %128 = tpu.matmul %125, %127, %cst_80 {dimension_numbers = #tpu.dot_dimension_numbers<[1], [0], [0], [1], [0, 0, 1, 1], [], []>} : vector<16x32xbf16>, vector<32x128xbf16>, vector<16x128xf32> -> vector<16x128xf32>
    %129 = arith.addf %67, %128 : vector<16x128xf32>
    %c0_81 = arith.constant 0 : index
    %c2 = arith.constant 2 : index
    %c0_82 = arith.constant 0 : index
    %c0_83 = arith.constant 0 : index
    %130 = vector.load %arg10[%c0_81, %c2, %c0_82, %c0_83] : memref<1x4x128x32xbf16, #tpu.memory_space<vmem>>, vector<1x1x128x32xbf16>
    %131 = vector.shape_cast %130 : vector<1x1x128x32xbf16> to vector<128x32xbf16>
    %cst_84 = arith.constant dense<0.000000e+00> : vector<16x32xf32>
    %132 = tpu.matmul %4, %131, %cst_84 {dimension_numbers = #tpu.dot_dimension_numbers<[1], [0], [0], [1], [0, 0, 1, 1], [], []>} : vector<16x128xbf16>, vector<128x32xbf16>, vector<16x32xf32> -> vector<16x32xf32>
    %c0_85 = arith.constant 0 : index
    %c2_86 = arith.constant 2 : index
    %c0_87 = arith.constant 0 : index
    %c0_88 = arith.constant 0 : index
    %133 = vector.load %arg11[%c0_85, %c2_86, %c0_87, %c0_88] : memref<1x4x1x32xf32, #tpu.memory_space<vmem>>, vector<1x1x1x32xf32>
    %134 = vector.shape_cast %133 : vector<1x1x1x32xf32> to vector<1x32xf32>
    %135 = vector.broadcast %134 : vector<1x32xf32> to vector<16x32xf32>
    %136 = arith.addf %132, %135 : vector<16x32xf32>
    %c0_89 = arith.constant 0 : index
    %c2_90 = arith.constant 2 : index
    %c0_91 = arith.constant 0 : index
    %c0_92 = arith.constant 0 : index
    %137 = vector.load %arg12[%c0_89, %c2_90, %c0_91, %c0_92] : memref<1x4x128x32xbf16, #tpu.memory_space<vmem>>, vector<1x1x128x32xbf16>
    %138 = vector.shape_cast %137 : vector<1x1x128x32xbf16> to vector<128x32xbf16>
    %cst_93 = arith.constant dense<0.000000e+00> : vector<16x32xf32>
    %139 = tpu.matmul %4, %138, %cst_93 {dimension_numbers = #tpu.dot_dimension_numbers<[1], [0], [0], [1], [0, 0, 1, 1], [], []>} : vector<16x128xbf16>, vector<128x32xbf16>, vector<16x32xf32> -> vector<16x32xf32>
    %c0_94 = arith.constant 0 : index
    %c2_95 = arith.constant 2 : index
    %c0_96 = arith.constant 0 : index
    %c0_97 = arith.constant 0 : index
    %140 = vector.load %arg13[%c0_94, %c2_95, %c0_96, %c0_97] : memref<1x4x1x32xf32, #tpu.memory_space<vmem>>, vector<1x1x1x32xf32>
    %141 = vector.shape_cast %140 : vector<1x1x1x32xf32> to vector<1x32xf32>
    %142 = vector.broadcast %141 : vector<1x32xf32> to vector<16x32xf32>
    %143 = arith.addf %139, %142 : vector<16x32xf32>
    %c0_98 = arith.constant 0 : index
    %c2_99 = arith.constant 2 : index
    %c0_100 = arith.constant 0 : index
    %c0_101 = arith.constant 0 : index
    %144 = vector.load %arg14[%c0_98, %c2_99, %c0_100, %c0_101] : memref<1x4x128x32xbf16, #tpu.memory_space<vmem>>, vector<1x1x128x32xbf16>
    %145 = vector.shape_cast %144 : vector<1x1x128x32xbf16> to vector<128x32xbf16>
    %cst_102 = arith.constant dense<0.000000e+00> : vector<16x32xf32>
    %146 = tpu.matmul %4, %145, %cst_102 {dimension_numbers = #tpu.dot_dimension_numbers<[1], [0], [0], [1], [0, 0, 1, 1], [], []>} : vector<16x128xbf16>, vector<128x32xbf16>, vector<16x32xf32> -> vector<16x32xf32>
    %c0_103 = arith.constant 0 : index
    %c2_104 = arith.constant 2 : index
    %c0_105 = arith.constant 0 : index
    %c0_106 = arith.constant 0 : index
    %147 = vector.load %arg15[%c0_103, %c2_104, %c0_105, %c0_106] : memref<1x4x1x32xf32, #tpu.memory_space<vmem>>, vector<1x1x1x32xf32>
    %148 = vector.shape_cast %147 : vector<1x1x1x32xf32> to vector<1x32xf32>
    %149 = vector.broadcast %148 : vector<1x32xf32> to vector<16x32xf32>
    %150 = arith.addf %146, %149 : vector<16x32xf32>
    %151 = arith.truncf %136 : vector<16x32xf32> to vector<16x32xbf16>
    %152 = arith.truncf %143 : vector<16x32xf32> to vector<16x32xbf16>
    %153 = arith.truncf %150 : vector<16x32xf32> to vector<16x32xbf16>
    %154 = vector.extract_strided_slice %151 {offsets = [0, 0], sizes = [8, 32], strides = [1, 1]} : vector<16x32xbf16> to vector<8x32xbf16>
    %155 = vector.extract_strided_slice %152 {offsets = [0, 0], sizes = [8, 32], strides = [1, 1]} : vector<16x32xbf16> to vector<8x32xbf16>
    %cst_107 = arith.constant dense<0.000000e+00> : vector<8x8xf32>
    %156 = tpu.matmul %154, %155, %cst_107 {dimension_numbers = #tpu.dot_dimension_numbers<[1], [1], [0], [0], [0, 0, 1, 0], [], []>} : vector<8x32xbf16>, vector<8x32xbf16>, vector<8x8xf32> -> vector<8x8xf32>
    %cst_108 = arith.constant dense<0xFF800000> : vector<8xf32>
    %157 = vector.multi_reduction <maximumf>, %156, %cst_108 [1] : vector<8x8xf32> to vector<8xf32>
    %158 = vector.shape_cast %157 : vector<8xf32> to vector<8x1xf32>
    %159 = vector.broadcast %158 : vector<8x1xf32> to vector<8x8xf32>
    %160 = arith.subf %156, %159 : vector<8x8xf32>
    %161 = math.exp %160 : vector<8x8xf32>
    %cst_109 = arith.constant dense<0.000000e+00> : vector<8xf32>
    %162 = vector.multi_reduction <add>, %161, %cst_109 [1] : vector<8x8xf32> to vector<8xf32>
    %163 = vector.shape_cast %162 : vector<8xf32> to vector<8x1xf32>
    %164 = tpu.reciprocal %163 {approx = true} : vector<8x1xf32> -> vector<8x1xf32>
    %165 = vector.broadcast %164 : vector<8x1xf32> to vector<8x8xf32>
    %166 = arith.mulf %161, %165 : vector<8x8xf32>
    %167 = arith.truncf %166 : vector<8x8xf32> to vector<8x8xbf16>
    %168 = vector.extract_strided_slice %153 {offsets = [0, 0], sizes = [8, 32], strides = [1, 1]} : vector<16x32xbf16> to vector<8x32xbf16>
    %cst_110 = arith.constant dense<0.000000e+00> : vector<8x32xf32>
    %169 = tpu.matmul %167, %168, %cst_110 {dimension_numbers = #tpu.dot_dimension_numbers<[1], [0], [0], [1], [0, 0, 1, 1], [], []>} : vector<8x8xbf16>, vector<8x32xbf16>, vector<8x32xf32> -> vector<8x32xf32>
    %170 = vector.extract_strided_slice %151 {offsets = [8, 0], sizes = [8, 32], strides = [1, 1]} : vector<16x32xbf16> to vector<8x32xbf16>
    %171 = vector.extract_strided_slice %152 {offsets = [8, 0], sizes = [8, 32], strides = [1, 1]} : vector<16x32xbf16> to vector<8x32xbf16>
    %cst_111 = arith.constant dense<0.000000e+00> : vector<8x8xf32>
    %172 = tpu.matmul %170, %171, %cst_111 {dimension_numbers = #tpu.dot_dimension_numbers<[1], [1], [0], [0], [0, 0, 1, 0], [], []>} : vector<8x32xbf16>, vector<8x32xbf16>, vector<8x8xf32> -> vector<8x8xf32>
    %cst_112 = arith.constant dense<0xFF800000> : vector<8xf32>
    %173 = vector.multi_reduction <maximumf>, %172, %cst_112 [1] : vector<8x8xf32> to vector<8xf32>
    %174 = vector.shape_cast %173 : vector<8xf32> to vector<8x1xf32>
    %175 = vector.broadcast %174 : vector<8x1xf32> to vector<8x8xf32>
    %176 = arith.subf %172, %175 : vector<8x8xf32>
    %177 = math.exp %176 : vector<8x8xf32>
    %cst_113 = arith.constant dense<0.000000e+00> : vector<8xf32>
    %178 = vector.multi_reduction <add>, %177, %cst_113 [1] : vector<8x8xf32> to vector<8xf32>
    %179 = vector.shape_cast %178 : vector<8xf32> to vector<8x1xf32>
    %180 = tpu.reciprocal %179 {approx = true} : vector<8x1xf32> -> vector<8x1xf32>
    %181 = vector.broadcast %180 : vector<8x1xf32> to vector<8x8xf32>
    %182 = arith.mulf %177, %181 : vector<8x8xf32>
    %183 = arith.truncf %182 : vector<8x8xf32> to vector<8x8xbf16>
    %184 = vector.extract_strided_slice %153 {offsets = [8, 0], sizes = [8, 32], strides = [1, 1]} : vector<16x32xbf16> to vector<8x32xbf16>
    %cst_114 = arith.constant dense<0.000000e+00> : vector<8x32xf32>
    %185 = tpu.matmul %183, %184, %cst_114 {dimension_numbers = #tpu.dot_dimension_numbers<[1], [0], [0], [1], [0, 0, 1, 1], [], []>} : vector<8x8xbf16>, vector<8x32xbf16>, vector<8x32xf32> -> vector<8x32xf32>
    %186 = tpu.concatenate %169, %185 in 0 : vector<8x32xf32>, vector<8x32xf32> -> vector<16x32xf32>
    %187 = arith.truncf %186 : vector<16x32xf32> to vector<16x32xbf16>
    %c0_115 = arith.constant 0 : index
    %c2_116 = arith.constant 2 : index
    %c0_117 = arith.constant 0 : index
    %c0_118 = arith.constant 0 : index
    %188 = vector.load %arg16[%c0_115, %c2_116, %c0_117, %c0_118] : memref<1x4x32x128xbf16, #tpu.memory_space<vmem>>, vector<1x1x32x128xbf16>
    %189 = vector.shape_cast %188 : vector<1x1x32x128xbf16> to vector<32x128xbf16>
    %cst_119 = arith.constant dense<0.000000e+00> : vector<16x128xf32>
    %190 = tpu.matmul %187, %189, %cst_119 {dimension_numbers = #tpu.dot_dimension_numbers<[1], [0], [0], [1], [0, 0, 1, 1], [], []>} : vector<16x32xbf16>, vector<32x128xbf16>, vector<16x128xf32> -> vector<16x128xf32>
    %191 = arith.addf %129, %190 : vector<16x128xf32>
    %c0_120 = arith.constant 0 : index
    %c3 = arith.constant 3 : index
    %c0_121 = arith.constant 0 : index
    %c0_122 = arith.constant 0 : index
    %192 = vector.load %arg10[%c0_120, %c3, %c0_121, %c0_122] : memref<1x4x128x32xbf16, #tpu.memory_space<vmem>>, vector<1x1x128x32xbf16>
    %193 = vector.shape_cast %192 : vector<1x1x128x32xbf16> to vector<128x32xbf16>
    %cst_123 = arith.constant dense<0.000000e+00> : vector<16x32xf32>
    %194 = tpu.matmul %4, %193, %cst_123 {dimension_numbers = #tpu.dot_dimension_numbers<[1], [0], [0], [1], [0, 0, 1, 1], [], []>} : vector<16x128xbf16>, vector<128x32xbf16>, vector<16x32xf32> -> vector<16x32xf32>
    %c0_124 = arith.constant 0 : index
    %c3_125 = arith.constant 3 : index
    %c0_126 = arith.constant 0 : index
    %c0_127 = arith.constant 0 : index
    %195 = vector.load %arg11[%c0_124, %c3_125, %c0_126, %c0_127] : memref<1x4x1x32xf32, #tpu.memory_space<vmem>>, vector<1x1x1x32xf32>
    %196 = vector.shape_cast %195 : vector<1x1x1x32xf32> to vector<1x32xf32>
    %197 = vector.broadcast %196 : vector<1x32xf32> to vector<16x32xf32>
    %198 = arith.addf %194, %197 : vector<16x32xf32>
    %c0_128 = arith.constant 0 : index
    %c3_129 = arith.constant 3 : index
    %c0_130 = arith.constant 0 : index
    %c0_131 = arith.constant 0 : index
    %199 = vector.load %arg12[%c0_128, %c3_129, %c0_130, %c0_131] : memref<1x4x128x32xbf16, #tpu.memory_space<vmem>>, vector<1x1x128x32xbf16>
    %200 = vector.shape_cast %199 : vector<1x1x128x32xbf16> to vector<128x32xbf16>
    %cst_132 = arith.constant dense<0.000000e+00> : vector<16x32xf32>
    %201 = tpu.matmul %4, %200, %cst_132 {dimension_numbers = #tpu.dot_dimension_numbers<[1], [0], [0], [1], [0, 0, 1, 1], [], []>} : vector<16x128xbf16>, vector<128x32xbf16>, vector<16x32xf32> -> vector<16x32xf32>
    %c0_133 = arith.constant 0 : index
    %c3_134 = arith.constant 3 : index
    %c0_135 = arith.constant 0 : index
    %c0_136 = arith.constant 0 : index
    %202 = vector.load %arg13[%c0_133, %c3_134, %c0_135, %c0_136] : memref<1x4x1x32xf32, #tpu.memory_space<vmem>>, vector<1x1x1x32xf32>
    %203 = vector.shape_cast %202 : vector<1x1x1x32xf32> to vector<1x32xf32>
    %204 = vector.broadcast %203 : vector<1x32xf32> to vector<16x32xf32>
    %205 = arith.addf %201, %204 : vector<16x32xf32>
    %c0_137 = arith.constant 0 : index
    %c3_138 = arith.constant 3 : index
    %c0_139 = arith.constant 0 : index
    %c0_140 = arith.constant 0 : index
    %206 = vector.load %arg14[%c0_137, %c3_138, %c0_139, %c0_140] : memref<1x4x128x32xbf16, #tpu.memory_space<vmem>>, vector<1x1x128x32xbf16>
    %207 = vector.shape_cast %206 : vector<1x1x128x32xbf16> to vector<128x32xbf16>
    %cst_141 = arith.constant dense<0.000000e+00> : vector<16x32xf32>
    %208 = tpu.matmul %4, %207, %cst_141 {dimension_numbers = #tpu.dot_dimension_numbers<[1], [0], [0], [1], [0, 0, 1, 1], [], []>} : vector<16x128xbf16>, vector<128x32xbf16>, vector<16x32xf32> -> vector<16x32xf32>
    %c0_142 = arith.constant 0 : index
    %c3_143 = arith.constant 3 : index
    %c0_144 = arith.constant 0 : index
    %c0_145 = arith.constant 0 : index
    %209 = vector.load %arg15[%c0_142, %c3_143, %c0_144, %c0_145] : memref<1x4x1x32xf32, #tpu.memory_space<vmem>>, vector<1x1x1x32xf32>
    %210 = vector.shape_cast %209 : vector<1x1x1x32xf32> to vector<1x32xf32>
    %211 = vector.broadcast %210 : vector<1x32xf32> to vector<16x32xf32>
    %212 = arith.addf %208, %211 : vector<16x32xf32>
    %213 = arith.truncf %198 : vector<16x32xf32> to vector<16x32xbf16>
    %214 = arith.truncf %205 : vector<16x32xf32> to vector<16x32xbf16>
    %215 = arith.truncf %212 : vector<16x32xf32> to vector<16x32xbf16>
    %216 = vector.extract_strided_slice %213 {offsets = [0, 0], sizes = [8, 32], strides = [1, 1]} : vector<16x32xbf16> to vector<8x32xbf16>
    %217 = vector.extract_strided_slice %214 {offsets = [0, 0], sizes = [8, 32], strides = [1, 1]} : vector<16x32xbf16> to vector<8x32xbf16>
    %cst_146 = arith.constant dense<0.000000e+00> : vector<8x8xf32>
    %218 = tpu.matmul %216, %217, %cst_146 {dimension_numbers = #tpu.dot_dimension_numbers<[1], [1], [0], [0], [0, 0, 1, 0], [], []>} : vector<8x32xbf16>, vector<8x32xbf16>, vector<8x8xf32> -> vector<8x8xf32>
    %cst_147 = arith.constant dense<0xFF800000> : vector<8xf32>
    %219 = vector.multi_reduction <maximumf>, %218, %cst_147 [1] : vector<8x8xf32> to vector<8xf32>
    %220 = vector.shape_cast %219 : vector<8xf32> to vector<8x1xf32>
    %221 = vector.broadcast %220 : vector<8x1xf32> to vector<8x8xf32>
    %222 = arith.subf %218, %221 : vector<8x8xf32>
    %223 = math.exp %222 : vector<8x8xf32>
    %cst_148 = arith.constant dense<0.000000e+00> : vector<8xf32>
    %224 = vector.multi_reduction <add>, %223, %cst_148 [1] : vector<8x8xf32> to vector<8xf32>
    %225 = vector.shape_cast %224 : vector<8xf32> to vector<8x1xf32>
    %226 = tpu.reciprocal %225 {approx = true} : vector<8x1xf32> -> vector<8x1xf32>
    %227 = vector.broadcast %226 : vector<8x1xf32> to vector<8x8xf32>
    %228 = arith.mulf %223, %227 : vector<8x8xf32>
    %229 = arith.truncf %228 : vector<8x8xf32> to vector<8x8xbf16>
    %230 = vector.extract_strided_slice %215 {offsets = [0, 0], sizes = [8, 32], strides = [1, 1]} : vector<16x32xbf16> to vector<8x32xbf16>
    %cst_149 = arith.constant dense<0.000000e+00> : vector<8x32xf32>
    %231 = tpu.matmul %229, %230, %cst_149 {dimension_numbers = #tpu.dot_dimension_numbers<[1], [0], [0], [1], [0, 0, 1, 1], [], []>} : vector<8x8xbf16>, vector<8x32xbf16>, vector<8x32xf32> -> vector<8x32xf32>
    %232 = vector.extract_strided_slice %213 {offsets = [8, 0], sizes = [8, 32], strides = [1, 1]} : vector<16x32xbf16> to vector<8x32xbf16>
    %233 = vector.extract_strided_slice %214 {offsets = [8, 0], sizes = [8, 32], strides = [1, 1]} : vector<16x32xbf16> to vector<8x32xbf16>
    %cst_150 = arith.constant dense<0.000000e+00> : vector<8x8xf32>
    %234 = tpu.matmul %232, %233, %cst_150 {dimension_numbers = #tpu.dot_dimension_numbers<[1], [1], [0], [0], [0, 0, 1, 0], [], []>} : vector<8x32xbf16>, vector<8x32xbf16>, vector<8x8xf32> -> vector<8x8xf32>
    %cst_151 = arith.constant dense<0xFF800000> : vector<8xf32>
    %235 = vector.multi_reduction <maximumf>, %234, %cst_151 [1] : vector<8x8xf32> to vector<8xf32>
    %236 = vector.shape_cast %235 : vector<8xf32> to vector<8x1xf32>
    %237 = vector.broadcast %236 : vector<8x1xf32> to vector<8x8xf32>
    %238 = arith.subf %234, %237 : vector<8x8xf32>
    %239 = math.exp %238 : vector<8x8xf32>
    %cst_152 = arith.constant dense<0.000000e+00> : vector<8xf32>
    %240 = vector.multi_reduction <add>, %239, %cst_152 [1] : vector<8x8xf32> to vector<8xf32>
    %241 = vector.shape_cast %240 : vector<8xf32> to vector<8x1xf32>
    %242 = tpu.reciprocal %241 {approx = true} : vector<8x1xf32> -> vector<8x1xf32>
    %243 = vector.broadcast %242 : vector<8x1xf32> to vector<8x8xf32>
    %244 = arith.mulf %239, %243 : vector<8x8xf32>
    %245 = arith.truncf %244 : vector<8x8xf32> to vector<8x8xbf16>
    %246 = vector.extract_strided_slice %215 {offsets = [8, 0], sizes = [8, 32], strides = [1, 1]} : vector<16x32xbf16> to vector<8x32xbf16>
    %cst_153 = arith.constant dense<0.000000e+00> : vector<8x32xf32>
    %247 = tpu.matmul %245, %246, %cst_153 {dimension_numbers = #tpu.dot_dimension_numbers<[1], [0], [0], [1], [0, 0, 1, 1], [], []>} : vector<8x8xbf16>, vector<8x32xbf16>, vector<8x32xf32> -> vector<8x32xf32>
    %248 = tpu.concatenate %231, %247 in 0 : vector<8x32xf32>, vector<8x32xf32> -> vector<16x32xf32>
    %249 = arith.truncf %248 : vector<16x32xf32> to vector<16x32xbf16>
    %c0_154 = arith.constant 0 : index
    %c3_155 = arith.constant 3 : index
    %c0_156 = arith.constant 0 : index
    %c0_157 = arith.constant 0 : index
    %250 = vector.load %arg16[%c0_154, %c3_155, %c0_156, %c0_157] : memref<1x4x32x128xbf16, #tpu.memory_space<vmem>>, vector<1x1x32x128xbf16>
    %251 = vector.shape_cast %250 : vector<1x1x32x128xbf16> to vector<32x128xbf16>
    %cst_158 = arith.constant dense<0.000000e+00> : vector<16x128xf32>
    %252 = tpu.matmul %249, %251, %cst_158 {dimension_numbers = #tpu.dot_dimension_numbers<[1], [0], [0], [1], [0, 0, 1, 1], [], []>} : vector<16x32xbf16>, vector<32x128xbf16>, vector<16x128xf32> -> vector<16x128xf32>
    %253 = arith.addf %191, %252 : vector<16x128xf32>
    %c0_159 = arith.constant 0 : index
    %c0_160 = arith.constant 0 : index
    %c0_161 = arith.constant 0 : index
    %254 = vector.load %arg17[%c0_159, %c0_160, %c0_161] : memref<1x1x128xf32, #tpu.memory_space<vmem>>, vector<1x1x128xf32>
    %255 = vector.shape_cast %254 : vector<1x1x128xf32> to vector<1x128xf32>
    %256 = vector.broadcast %255 : vector<1x128xf32> to vector<16x128xf32>
    %257 = arith.addf %253, %256 : vector<16x128xf32>
    %cst_162 = arith.constant 1.000000e-01 : f32
    %258 = vector.broadcast %cst_162 : f32 to vector<16x128xf32>
    %259 = arith.mulf %258, %257 : vector<16x128xf32>
    %260 = arith.addf %3, %259 : vector<16x128xf32>
    %261 = arith.truncf %260 : vector<16x128xf32> to vector<16x128xbf16>
    %c0_163 = arith.constant 0 : index
    %c0_164 = arith.constant 0 : index
    %c0_165 = arith.constant 0 : index
    %262 = vector.load %arg18[%c0_163, %c0_164, %c0_165] : memref<1x128x256xbf16, #tpu.memory_space<vmem>>, vector<1x128x256xbf16>
    %263 = vector.shape_cast %262 : vector<1x128x256xbf16> to vector<128x256xbf16>
    %cst_166 = arith.constant dense<0.000000e+00> : vector<16x256xf32>
    %264 = tpu.matmul %261, %263, %cst_166 {dimension_numbers = #tpu.dot_dimension_numbers<[1], [0], [0], [1], [0, 0, 1, 1], [], []>} : vector<16x128xbf16>, vector<128x256xbf16>, vector<16x256xf32> -> vector<16x256xf32>
    %c0_167 = arith.constant 0 : index
    %c0_168 = arith.constant 0 : index
    %c0_169 = arith.constant 0 : index
    %265 = vector.load %arg19[%c0_167, %c0_168, %c0_169] : memref<1x1x256xf32, #tpu.memory_space<vmem>>, vector<1x1x256xf32>
    %266 = vector.shape_cast %265 : vector<1x1x256xf32> to vector<1x256xf32>
    %267 = vector.broadcast %266 : vector<1x256xf32> to vector<16x256xf32>
    %268 = arith.addf %264, %267 : vector<16x256xf32>
    %cst_170 = arith.constant 0.000000e+00 : f32
    %269 = vector.broadcast %cst_170 : f32 to vector<16x256xf32>
    %270 = arith.maximumf %268, %269 : vector<16x256xf32>
    %271 = arith.truncf %270 : vector<16x256xf32> to vector<16x256xbf16>
    %c0_171 = arith.constant 0 : index
    %c0_172 = arith.constant 0 : index
    %c0_173 = arith.constant 0 : index
    %272 = vector.load %arg20[%c0_171, %c0_172, %c0_173] : memref<1x256x128xbf16, #tpu.memory_space<vmem>>, vector<1x256x128xbf16>
    %273 = vector.shape_cast %272 : vector<1x256x128xbf16> to vector<256x128xbf16>
    %cst_174 = arith.constant dense<0.000000e+00> : vector<16x128xf32>
    %274 = tpu.matmul %271, %273, %cst_174 {dimension_numbers = #tpu.dot_dimension_numbers<[1], [0], [0], [1], [0, 0, 1, 1], [], []>} : vector<16x256xbf16>, vector<256x128xbf16>, vector<16x128xf32> -> vector<16x128xf32>
    %c0_175 = arith.constant 0 : index
    %c0_176 = arith.constant 0 : index
    %c0_177 = arith.constant 0 : index
    %275 = vector.load %arg21[%c0_175, %c0_176, %c0_177] : memref<1x1x128xf32, #tpu.memory_space<vmem>>, vector<1x1x128xf32>
    %276 = vector.shape_cast %275 : vector<1x1x128xf32> to vector<1x128xf32>
    %277 = vector.broadcast %276 : vector<1x128xf32> to vector<16x128xf32>
    %278 = arith.addf %274, %277 : vector<16x128xf32>
    %cst_178 = arith.constant 1.000000e-01 : f32
    %279 = vector.broadcast %cst_178 : f32 to vector<16x128xf32>
    %280 = arith.mulf %279, %278 : vector<16x128xf32>
    %281 = arith.addf %260, %280 : vector<16x128xf32>
    %c0_179 = arith.constant 0 : index
    %c0_180 = arith.constant 0 : index
    %282 = vector.load %arg25[%c0_179, %c0_180] : memref<16x128xf32, #tpu.memory_space<vmem>>, vector<16x128xf32>
    tpu.vector_store %arg25[%c0_179, %c0_180], %281 {strides = array<i32>} : memref<16x128xf32, #tpu.memory_space<vmem>>, vector<16x128xf32>,
    %c1_i32 = arith.constant 1 : i32
    %283 = arith.cmpi eq, %arg1, %c1_i32 : i32
    %284 = arith.extui %283 : i1 to i32
    %c0_i32_181 = arith.constant 0 : i32
    %285 = arith.cmpi ne, %284, %c0_i32_181 : i32
    scf.if %285 {
      %cst_182 = arith.constant 0.000000e+00 : f32
      %286 = vector.broadcast %cst_182 : f32 to vector<16x128xf32>
      %287 = arith.maximumf %281, %286 : vector<16x128xf32>
      %288 = arith.truncf %287 : vector<16x128xf32> to vector<16x128xbf16>
      %c0_183 = arith.constant 0 : index
      %c0_184 = arith.constant 0 : index
      %289 = vector.load %arg22[%c0_183, %c0_184] : memref<128x4xbf16, #tpu.memory_space<vmem>>, vector<128x4xbf16>
      %cst_185 = arith.constant dense<0.000000e+00> : vector<16x4xf32>
      %290 = tpu.matmul %288, %289, %cst_185 {dimension_numbers = #tpu.dot_dimension_numbers<[1], [0], [0], [1], [0, 0, 1, 1], [], []>} : vector<16x128xbf16>, vector<128x4xbf16>, vector<16x4xf32> -> vector<16x4xf32>
      %c0_186 = arith.constant 0 : index
      %c0_187 = arith.constant 0 : index
      %291 = vector.load %arg23[%c0_186, %c0_187] : memref<1x4xf32, #tpu.memory_space<vmem>>, vector<1x4xf32>
      %292 = vector.broadcast %291 : vector<1x4xf32> to vector<16x4xf32>
      %293 = arith.addf %290, %292 : vector<16x4xf32>
      %cst_188 = arith.constant dense<0xFF800000> : vector<16xf32>
      %294 = vector.multi_reduction <maximumf>, %293, %cst_188 [1] : vector<16x4xf32> to vector<16xf32>
      %295 = vector.shape_cast %294 : vector<16xf32> to vector<16x1xf32>
      %296 = vector.broadcast %295 : vector<16x1xf32> to vector<16x4xf32>
      %297 = arith.subf %293, %296 : vector<16x4xf32>
      %298 = math.exp %297 : vector<16x4xf32>
      %cst_189 = arith.constant dense<0.000000e+00> : vector<16xf32>
      %299 = vector.multi_reduction <add>, %298, %cst_189 [1] : vector<16x4xf32> to vector<16xf32>
      %300 = vector.shape_cast %299 : vector<16xf32> to vector<16x1xf32>
      %301 = math.log %300 : vector<16x1xf32>
      %302 = vector.broadcast %301 : vector<16x1xf32> to vector<16x4xf32>
      %303 = arith.subf %297, %302 : vector<16x4xf32>
      %c0_190 = arith.constant 0 : index
      %c0_191 = arith.constant 0 : index
      %c0_192 = arith.constant 0 : index
      %304 = vector.load %arg24[%c0_190, %c0_191, %c0_192] : memref<1x16x4xf32, #tpu.memory_space<vmem>>, vector<1x16x4xf32>
      %305 = vector.shape_cast %304 : vector<1x16x4xf32> to vector<16x4xf32>
      %306 = vector.shape_cast %303 : vector<16x4xf32> to vector<1x16x4xf32>
      tpu.vector_store %arg24[%c0_190, %c0_191, %c0_192], %306 {strides = array<i32>} : memref<1x16x4xf32, #tpu.memory_space<vmem>>, vector<1x16x4xf32>,
    } else {
    }
    return
  }
  func.func @transform_0(%arg0: i32, %arg1: i32) -> (i32, i32) {
    %c0_i32 = arith.constant 0 : i32
    %c0_i32_0 = arith.constant 0 : i32
    return %arg0, %c0_i32 : i32, i32
  }
  func.func @transform_1(%arg0: i32, %arg1: i32) -> (i32, i32) {
    %c0_i32 = arith.constant 0 : i32
    %c0_i32_0 = arith.constant 0 : i32
    %c0_i32_1 = arith.constant 0 : i32
    return %c0_i32, %c0_i32_0 : i32, i32
  }
  func.func @transform_2(%arg0: i32, %arg1: i32) -> (i32, i32) {
    %c0_i32 = arith.constant 0 : i32
    %c0_i32_0 = arith.constant 0 : i32
    %c0_i32_1 = arith.constant 0 : i32
    return %c0_i32, %c0_i32_0 : i32, i32
  }
  func.func @transform_3(%arg0: i32, %arg1: i32) -> (i32, i32) {
    %c0_i32 = arith.constant 0 : i32
    %c0_i32_0 = arith.constant 0 : i32
    %c0_i32_1 = arith.constant 0 : i32
    return %c0_i32, %c0_i32_0 : i32, i32
  }
  func.func @transform_4(%arg0: i32, %arg1: i32) -> (i32, i32) {
    %c0_i32 = arith.constant 0 : i32
    %c0_i32_0 = arith.constant 0 : i32
    %c0_i32_1 = arith.constant 0 : i32
    return %c0_i32, %c0_i32_0 : i32, i32
  }
  func.func @transform_5(%arg0: i32, %arg1: i32) -> (i32, i32) {
    %c0_i32 = arith.constant 0 : i32
    %c0_i32_0 = arith.constant 0 : i32
    %c0_i32_1 = arith.constant 0 : i32
    return %c0_i32, %c0_i32_0 : i32, i32
  }
  func.func @transform_6(%arg0: i32, %arg1: i32) -> (i32, i32) {
    %c0_i32 = arith.constant 0 : i32
    %c0_i32_0 = arith.constant 0 : i32
    %c0_i32_1 = arith.constant 0 : i32
    return %c0_i32, %c0_i32_0 : i32, i32
  }
  func.func @transform_7(%arg0: i32, %arg1: i32) -> (i32, i32) {
    %c0_i32 = arith.constant 0 : i32
    %c0_i32_0 = arith.constant 0 : i32
    %c0_i32_1 = arith.constant 0 : i32
    return %c0_i32, %c0_i32_0 : i32, i32
  }
  func.func @transform_8(%arg0: i32, %arg1: i32) -> (i32, i32, i32, i32) {
    %c0_i32 = arith.constant 0 : i32
    %c0_i32_0 = arith.constant 0 : i32
    %c0_i32_1 = arith.constant 0 : i32
    %c0_i32_2 = arith.constant 0 : i32
    return %arg1, %c0_i32, %c0_i32_0, %c0_i32_1 : i32, i32, i32, i32
  }
  func.func @transform_9(%arg0: i32, %arg1: i32) -> (i32, i32, i32, i32) {
    %c0_i32 = arith.constant 0 : i32
    %c0_i32_0 = arith.constant 0 : i32
    %c0_i32_1 = arith.constant 0 : i32
    %c0_i32_2 = arith.constant 0 : i32
    return %arg1, %c0_i32, %c0_i32_0, %c0_i32_1 : i32, i32, i32, i32
  }
  func.func @transform_10(%arg0: i32, %arg1: i32) -> (i32, i32, i32, i32) {
    %c0_i32 = arith.constant 0 : i32
    %c0_i32_0 = arith.constant 0 : i32
    %c0_i32_1 = arith.constant 0 : i32
    %c0_i32_2 = arith.constant 0 : i32
    return %arg1, %c0_i32, %c0_i32_0, %c0_i32_1 : i32, i32, i32, i32
  }
  func.func @transform_11(%arg0: i32, %arg1: i32) -> (i32, i32, i32, i32) {
    %c0_i32 = arith.constant 0 : i32
    %c0_i32_0 = arith.constant 0 : i32
    %c0_i32_1 = arith.constant 0 : i32
    %c0_i32_2 = arith.constant 0 : i32
    return %arg1, %c0_i32, %c0_i32_0, %c0_i32_1 : i32, i32, i32, i32
  }
  func.func @transform_12(%arg0: i32, %arg1: i32) -> (i32, i32, i32, i32) {
    %c0_i32 = arith.constant 0 : i32
    %c0_i32_0 = arith.constant 0 : i32
    %c0_i32_1 = arith.constant 0 : i32
    %c0_i32_2 = arith.constant 0 : i32
    return %arg1, %c0_i32, %c0_i32_0, %c0_i32_1 : i32, i32, i32, i32
  }
  func.func @transform_13(%arg0: i32, %arg1: i32) -> (i32, i32, i32, i32) {
    %c0_i32 = arith.constant 0 : i32
    %c0_i32_0 = arith.constant 0 : i32
    %c0_i32_1 = arith.constant 0 : i32
    %c0_i32_2 = arith.constant 0 : i32
    return %arg1, %c0_i32, %c0_i32_0, %c0_i32_1 : i32, i32, i32, i32
  }
  func.func @transform_14(%arg0: i32, %arg1: i32) -> (i32, i32, i32, i32) {
    %c0_i32 = arith.constant 0 : i32
    %c0_i32_0 = arith.constant 0 : i32
    %c0_i32_1 = arith.constant 0 : i32
    %c0_i32_2 = arith.constant 0 : i32
    return %arg1, %c0_i32, %c0_i32_0, %c0_i32_1 : i32, i32, i32, i32
  }
  func.func @transform_15(%arg0: i32, %arg1: i32) -> (i32, i32, i32) {
    %c0_i32 = arith.constant 0 : i32
    %c0_i32_0 = arith.constant 0 : i32
    %c0_i32_1 = arith.constant 0 : i32
    return %arg1, %c0_i32, %c0_i32_0 : i32, i32, i32
  }
  func.func @transform_16(%arg0: i32, %arg1: i32) -> (i32, i32, i32) {
    %c0_i32 = arith.constant 0 : i32
    %c0_i32_0 = arith.constant 0 : i32
    %c0_i32_1 = arith.constant 0 : i32
    return %arg1, %c0_i32, %c0_i32_0 : i32, i32, i32
  }
  func.func @transform_17(%arg0: i32, %arg1: i32) -> (i32, i32, i32) {
    %c0_i32 = arith.constant 0 : i32
    %c0_i32_0 = arith.constant 0 : i32
    %c0_i32_1 = arith.constant 0 : i32
    return %arg1, %c0_i32, %c0_i32_0 : i32, i32, i32
  }
  func.func @transform_18(%arg0: i32, %arg1: i32) -> (i32, i32, i32) {
    %c0_i32 = arith.constant 0 : i32
    %c0_i32_0 = arith.constant 0 : i32
    %c0_i32_1 = arith.constant 0 : i32
    return %arg1, %c0_i32, %c0_i32_0 : i32, i32, i32
  }
  func.func @transform_19(%arg0: i32, %arg1: i32) -> (i32, i32, i32) {
    %c0_i32 = arith.constant 0 : i32
    %c0_i32_0 = arith.constant 0 : i32
    %c0_i32_1 = arith.constant 0 : i32
    return %arg1, %c0_i32, %c0_i32_0 : i32, i32, i32
  }
  func.func @transform_20(%arg0: i32, %arg1: i32) -> (i32, i32) {
    %c0_i32 = arith.constant 0 : i32
    %c0_i32_0 = arith.constant 0 : i32
    %c0_i32_1 = arith.constant 0 : i32
    return %c0_i32, %c0_i32_0 : i32, i32
  }
  func.func @transform_21(%arg0: i32, %arg1: i32) -> (i32, i32) {
    %c0_i32 = arith.constant 0 : i32
    %c0_i32_0 = arith.constant 0 : i32
    %c0_i32_1 = arith.constant 0 : i32
    return %c0_i32, %c0_i32_0 : i32, i32
  }
  func.func @transform_22(%arg0: i32, %arg1: i32) -> (i32, i32, i32) {
    %c0_i32 = arith.constant 0 : i32
    %c0_i32_0 = arith.constant 0 : i32
    %c0_i32_1 = arith.constant 0 : i32
    return %arg0, %c0_i32, %c0_i32_0 : i32, i32, i32
  }
}

</mosaic_0001>

<llo_original>
// kernel: stransformers_forward.1
$region0: #{stransformers_forward.1}
  #allocation0 [shape = 'u32[]', space=smem, size = 0x4, offset = 0x4, fixed_abs, tag = 'smem constant byte address 0x4 - core index']
  #allocation1 [shape = 'u32[144,128]{1,0:T(1,128)}', space=vmem, size = 0x12000, scoped, tag = 'internal scratch']
  #allocation2 [shape = 'f32[16,128]{1,0:T(8,128)}', space=vmem, size = 0x2000, scoped, tag = 'scratch operand']
  %s0 = inlined_call_operand.vmem [shape: f32[16,16], index: 0, kind: input, shape index: {}]
  %s1 = inlined_call_operand.vmem [shape: bf16[16,128], index: 1, kind: input, shape index: {}]
  %s2 = inlined_call_operand.vmem [shape: f32[1,128], index: 2, kind: input, shape index: {}]
  %s3 = inlined_call_operand.vmem [shape: bf16[128,256], index: 3, kind: input, shape index: {}]
  %s4 = inlined_call_operand.vmem [shape: f32[1,256], index: 4, kind: input, shape index: {}]
  %s5 = inlined_call_operand.vmem [shape: bf16[256,128], index: 5, kind: input, shape index: {}]
  %s6 = inlined_call_operand.vmem [shape: f32[1,128], index: 6, kind: input, shape index: {}]
  %s7 = inlined_call_operand.vmem [shape: f32[16,128], index: 7, kind: input, shape index: {}]
  %s8 = inlined_call_operand.vmem [shape: bf16[2,4,128,32], index: 8, kind: input, shape index: {}]
  %s9 = inlined_call_operand.vmem [shape: f32[2,4,1,32], index: 9, kind: input, shape index: {}]
  %s10 = inlined_call_operand.vmem [shape: bf16[2,4,128,32], index: 10, kind: input, shape index: {}]
  %s11 = inlined_call_operand.vmem [shape: f32[2,4,1,32], index: 11, kind: input, shape index: {}]
  %s12 = inlined_call_operand.vmem [shape: bf16[2,4,128,32], index: 12, kind: input, shape index: {}]
  %s13 = inlined_call_operand.vmem [shape: f32[2,4,1,32], index: 13, kind: input, shape index: {}]
  %s14 = inlined_call_operand.vmem [shape: bf16[2,4,32,128], index: 14, kind: input, shape index: {}]
  %s15 = inlined_call_operand.vmem [shape: f32[2,1,128], index: 15, kind: input, shape index: {}]
  %s16 = inlined_call_operand.vmem [shape: bf16[2,128,256], index: 16, kind: input, shape index: {}]
  %s17 = inlined_call_operand.vmem [shape: f32[2,1,256], index: 17, kind: input, shape index: {}]
  %s18 = inlined_call_operand.vmem [shape: bf16[2,256,128], index: 18, kind: input, shape index: {}]
  %s19 = inlined_call_operand.vmem [shape: f32[2,1,128], index: 19, kind: input, shape index: {}]
  %s20 = inlined_call_operand.vmem [shape: bf16[128,4], index: 20, kind: input, shape index: {}]
  %s21 = inlined_call_operand.vmem [shape: f32[1,4], index: 21, kind: input, shape index: {}]
  %s22 = inlined_call_operand.vmem [shape: f32[1,16,4], index: 22, kind: output, shape index: {}]
  %s23 = sld [smem:[#allocation0]]
  $region129: #{stransformers_forward.1} parent=0
    _
  %s25 = ssub.s32 1, %s23
  %s26 = scalar_select 0, %s25, %s23
  loop: start=0, step=1, limit=4
  $region2: #{stransformers_forward.1} parent=0 // loop_pre_header
    _
  $region3: #{stransformers_forward.1} parent=0 // loop_header
    %s28 = sphi 0, %s32
    %p29 = scmp.ge.s32.totalorder %s28, 4
    %s35 = sphi 0, %s47
    %s36 = sphi 0, %s43
    %s37 = sphi 0, %s35
    %s38 = sphi 0, %s36
    %s39 = sphi 0, %s37
    %s40 = sphi 0, %s38
    %s50 = sphi 0, %s52
    %s53 = sphi 0, %s50
    %s54 = sphi 0, %s53
    %s70 = sphi 0, %s54
    %s74 = sphi 0, %s74
    %s76 = sphi 0, %s74
    %s77 = sphi 0, %s76
    %s91 = sphi 0, %s77
    %s95 = sphi 0, %s95
    %s97 = sphi 0, %s95
    %s98 = sphi 0, %s97
    %s112 = sphi 0, %s98
    %s116 = sphi 0, %s116
    %s118 = sphi 0, %s116
    %s119 = sphi 0, %s118
    %s133 = sphi 0, %s119
    %s137 = sphi 0, %s137
    %s139 = sphi 0, %s137
    %s140 = sphi 0, %s139
    %s154 = sphi 0, %s140
    %s158 = sphi 0, %s158
    %s160 = sphi 0, %s158
    %s161 = sphi 0, %s160
    %s175 = sphi 0, %s161
    %s179 = sphi 0, %s179
    %s181 = sphi 0, %s179
    %s182 = sphi 0, %s181
    %s196 = sphi 0, %s182
    %s200 = sphi 0, %s200
    %s202 = sphi 0, %s200
    %s203 = sphi 0, %s202
    %s217 = sphi 0, %s203
    %s223 = sphi 0, %s225
    %s226 = sphi 0, %s223
    %s227 = sphi 0, %s226
    %s243 = sphi 0, %s227
    %s249 = sphi 0, %s251
    %s252 = sphi 0, %s249
    %s253 = sphi 0, %s252
    %s269 = sphi 0, %s253
    %s275 = sphi 0, %s277
    %s278 = sphi 0, %s275
    %s279 = sphi 0, %s278
    %s295 = sphi 0, %s279
    %s301 = sphi 0, %s303
    %s304 = sphi 0, %s301
    %s305 = sphi 0, %s304
    %s321 = sphi 0, %s305
    %s327 = sphi 0, %s329
    %s330 = sphi 0, %s327
    %s331 = sphi 0, %s330
    %s347 = sphi 0, %s331
    %s353 = sphi 0, %s355
    %s356 = sphi 0, %s353
    %s357 = sphi 0, %s356
    %s373 = sphi 0, %s357
    %s379 = sphi 0, %s381
    %s382 = sphi 0, %s379
    %s383 = sphi 0, %s382
    %s399 = sphi 0, %s383
    %s405 = sphi 0, %s407
    %s408 = sphi 0, %s405
    %s409 = sphi 0, %s408
    %s425 = sphi 0, %s409
    %s431 = sphi 0, %s433
    %s434 = sphi 0, %s431
    %s435 = sphi 0, %s434
    %s451 = sphi 0, %s435
    %s457 = sphi 0, %s459
    %s460 = sphi 0, %s457
    %s461 = sphi 0, %s460
    %s477 = sphi 0, %s461
    %s483 = sphi 0, %s485
    %s486 = sphi 0, %s483
    %s487 = sphi 0, %s486
    %s503 = sphi 0, %s487
    %s509 = sphi 0, %s511
    %s512 = sphi 0, %s509
    %s513 = sphi 0, %s512
    %s529 = sphi 0, %s513
    %s533 = sphi 0, %s533
    %s535 = sphi 0, %s533
    %s536 = sphi 0, %s535
    %s550 = sphi 0, %s536
    %s554 = sphi 0, %s554
    %s556 = sphi 0, %s554
    %s557 = sphi 0, %s556
    %s571 = sphi 0, %s557
    %s577 = sphi 0, %s579
    %s580 = sphi 0, %s577
    %s581 = sphi 0, %s580
    %s597 = sphi 0, %s581
  $region4: #{stransformers_forward.1} parent=0 // loop_header_branch
    %31 = sbr.rel (%p29) target = $region8
  $region5: #{stransformers_forward.1} parent=0 // loop_body
    %s33 = ssub.s32 %s28, 1
    %s34 = ssub.s32 %s28, 2
    %s41 = sadd.s32 1, %s36
    %p42 = scmp.ge.s32.totalorder %s41, 2
    %s43 = scalar_select %p42, 0, %s41
    %s44 = sadd.s32 1, %s35
    %s45 = scalar_select %p42, %s44, %s35
    %p46 = scmp.ge.s32.totalorder %s45, 1
    %s47 = scalar_select %p46, 0, %s45
    %s48 = ssub.s32 %s35, %s47
    %p49 = scmp.eq.s32.totalorder %s48, 0
    %s51 = sadd.s32 %s50, 1
    %s52 = scalar_select %p49, %s50, %s51
    %p55 = pneg %p49
    %p56 = scmp.eq.s32.totalorder %s28, 1
    %p57 = por %p55, %p56
    %p58 = scmp.ne.s32.totalorder %s50, %s53
    %p59 = scmp.eq.s32.totalorder %s28, 0
    %p60 = por %p58, %p59
    %p61 = scmp.ne.s32.totalorder %s50, %s53
    %p62 = scmp.eq.s32.totalorder %s33, 1
    %p63 = por %p61, %p62
    %p64 = scmp.ne.s32.totalorder %s53, %s54
    %p65 = scmp.eq.s32.totalorder %s33, 0
    %p66 = por %p64, %p65
    %p67 = scmp.ne.s32.totalorder %s53, %s54
    %p68 = scmp.eq.s32.totalorder %s34, 1
    %p69 = por %p67, %p68
    %p71 = scmp.ne.s32.totalorder %s54, %s70
    %p72 = scmp.eq.s32.totalorder %s34, 0
    %p73 = por %p71, %p72
    %s75 = sadd.s32 %s74, 1
    %p78 = scmp.eq.s32.totalorder %s28, 1
    %p79 = scmp.ne.s32.totalorder %s74, %s76
    %p80 = scmp.eq.s32.totalorder %s28, 0
    %p81 = por %p79, %p80
    %p82 = scmp.ne.s32.totalorder %s74, %s76
    %p83 = scmp.eq.s32.totalorder %s33, 1
    %p84 = por %p82, %p83
    %p85 = scmp.ne.s32.totalorder %s76, %s77
    %p86 = scmp.eq.s32.totalorder %s33, 0
    %p87 = por %p85, %p86
    %p88 = scmp.ne.s32.totalorder %s76, %s77
    %p89 = scmp.eq.s32.totalorder %s34, 1
    %p90 = por %p88, %p89
    %p92 = scmp.ne.s32.totalorder %s77, %s91
    %p93 = scmp.eq.s32.totalorder %s34, 0
    %p94 = por %p92, %p93
    %s96 = sadd.s32 %s95, 1
    %p99 = scmp.eq.s32.totalorder %s28, 1
    %p100 = scmp.ne.s32.totalorder %s95, %s97
    %p101 = scmp.eq.s32.totalorder %s28, 0
    %p102 = por %p100, %p101
    %p103 = scmp.ne.s32.totalorder %s95, %s97
    %p104 = scmp.eq.s32.totalorder %s33, 1
    %p105 = por %p103, %p104
    %p106 = scmp.ne.s32.totalorder %s97, %s98
    %p107 = scmp.eq.s32.totalorder %s33, 0
    %p108 = por %p106, %p107
    %p109 = scmp.ne.s32.totalorder %s97, %s98
    %p110 = scmp.eq.s32.totalorder %s34, 1
    %p111 = por %p109, %p110
    %p113 = scmp.ne.s32.totalorder %s98, %s112
    %p114 = scmp.eq.s32.totalorder %s34, 0
    %p115 = por %p113, %p114
    %s117 = sadd.s32 %s116, 1
    %p120 = scmp.eq.s32.totalorder %s28, 1
    %p121 = scmp.ne.s32.totalorder %s116, %s118
    %p122 = scmp.eq.s32.totalorder %s28, 0
    %p123 = por %p121, %p122
    %p124 = scmp.ne.s32.totalorder %s116, %s118
    %p125 = scmp.eq.s32.totalorder %s33, 1
    %p126 = por %p124, %p125
    %p127 = scmp.ne.s32.totalorder %s118, %s119
    %p128 = scmp.eq.s32.totalorder %s33, 0
    %p129 = por %p127, %p128
    %p130 = scmp.ne.s32.totalorder %s118, %s119
    %p131 = scmp.eq.s32.totalorder %s34, 1
    %p132 = por %p130, %p131
    %p134 = scmp.ne.s32.totalorder %s119, %s133
    %p135 = scmp.eq.s32.totalorder %s34, 0
    %p136 = por %p134, %p135
    %s138 = sadd.s32 %s137, 1
    %p141 = scmp.eq.s32.totalorder %s28, 1
    %p142 = scmp.ne.s32.totalorder %s137, %s139
    %p143 = scmp.eq.s32.totalorder %s28, 0
    %p144 = por %p142, %p143
    %p145 = scmp.ne.s32.totalorder %s137, %s139
    %p146 = scmp.eq.s32.totalorder %s33, 1
    %p147 = por %p145, %p146
    %p148 = scmp.ne.s32.totalorder %s139, %s140
    %p149 = scmp.eq.s32.totalorder %s33, 0
    %p150 = por %p148, %p149
    %p151 = scmp.ne.s32.totalorder %s139, %s140
    %p152 = scmp.eq.s32.totalorder %s34, 1
    %p153 = por %p151, %p152
    %p155 = scmp.ne.s32.totalorder %s140, %s154
    %p156 = scmp.eq.s32.totalorder %s34, 0
    %p157 = por %p155, %p156
    %s159 = sadd.s32 %s158, 1
    %p162 = scmp.eq.s32.totalorder %s28, 1
    %p163 = scmp.ne.s32.totalorder %s158, %s160
    %p164 = scmp.eq.s32.totalorder %s28, 0
    %p165 = por %p163, %p164
    %p166 = scmp.ne.s32.totalorder %s158, %s160
    %p167 = scmp.eq.s32.totalorder %s33, 1
    %p168 = por %p166, %p167
    %p169 = scmp.ne.s32.totalorder %s160, %s161
    %p170 = scmp.eq.s32.totalorder %s33, 0
    %p171 = por %p169, %p170
    %p172 = scmp.ne.s32.totalorder %s160, %s161
    %p173 = scmp.eq.s32.totalorder %s34, 1
    %p174 = por %p172, %p173
    %p176 = scmp.ne.s32.totalorder %s161, %s175
    %p177 = scmp.eq.s32.totalorder %s34, 0
    %p178 = por %p176, %p177
    %s180 = sadd.s32 %s179, 1
    %p183 = scmp.eq.s32.totalorder %s28, 1
    %p184 = scmp.ne.s32.totalorder %s179, %s181
    %p185 = scmp.eq.s32.totalorder %s28, 0
    %p186 = por %p184, %p185
    %p187 = scmp.ne.s32.totalorder %s179, %s181
    %p188 = scmp.eq.s32.totalorder %s33, 1
    %p189 = por %p187, %p188
    %p190 = scmp.ne.s32.totalorder %s181, %s182
    %p191 = scmp.eq.s32.totalorder %s33, 0
    %p192 = por %p190, %p191
    %p193 = scmp.ne.s32.totalorder %s181, %s182
    %p194 = scmp.eq.s32.totalorder %s34, 1
    %p195 = por %p193, %p194
    %p197 = scmp.ne.s32.totalorder %s182, %s196
    %p198 = scmp.eq.s32.totalorder %s34, 0
    %p199 = por %p197, %p198
    %s201 = sadd.s32 %s200, 1
    %p204 = scmp.eq.s32.totalorder %s28, 1
    %p205 = scmp.ne.s32.totalorder %s200, %s202
    %p206 = scmp.eq.s32.totalorder %s28, 0
    %p207 = por %p205, %p206
    %p208 = scmp.ne.s32.totalorder %s200, %s202
    %p209 = scmp.eq.s32.totalorder %s33, 1
    %p210 = por %p208, %p209
    %p211 = scmp.ne.s32.totalorder %s202, %s203
    %p212 = scmp.eq.s32.totalorder %s33, 0
    %p213 = por %p211, %p212
    %p214 = scmp.ne.s32.totalorder %s202, %s203
    %p215 = scmp.eq.s32.totalorder %s34, 1
    %p216 = por %p214, %p215
    %p218 = scmp.ne.s32.totalorder %s203, %s217
    %p219 = scmp.eq.s32.totalorder %s34, 0
    %p220 = por %p218, %p219
    %s221 = ssub.s32 %s36, %s43
    %p222 = scmp.eq.s32.totalorder %s221, 0
    %s224 = sadd.s32 %s223, 1
    %s225 = scalar_select %p222, %s223, %s224
    %p228 = pneg %p222
    %p229 = scmp.eq.s32.totalorder %s28, 1
    %p230 = por %p228, %p229
    %p231 = scmp.ne.s32.totalorder %s223, %s226
    %p232 = scmp.eq.s32.totalorder %s28, 0
    %p233 = por %p231, %p232
    %p234 = scmp.ne.s32.totalorder %s223, %s226
    %p235 = scmp.eq.s32.totalorder %s33, 1
    %p236 = por %p234, %p235
    %p237 = scmp.ne.s32.totalorder %s226, %s227
    %p238 = scmp.eq.s32.totalorder %s33, 0
    %p239 = por %p237, %p238
    %p240 = scmp.ne.s32.totalorder %s226, %s227
    %p241 = scmp.eq.s32.totalorder %s34, 1
    %p242 = por %p240, %p241
    %p244 = scmp.ne.s32.totalorder %s227, %s243
    %p245 = scmp.eq.s32.totalorder %s34, 0
    %p246 = por %p244, %p245
    %s247 = ssub.s32 %s36, %s43
    %p248 = scmp.eq.s32.totalorder %s247, 0
    %s250 = sadd.s32 %s249, 1
    %s251 = scalar_select %p248, %s249, %s250
    %p254 = pneg %p248
    %p255 = scmp.eq.s32.totalorder %s28, 1
    %p256 = por %p254, %p255
    %p257 = scmp.ne.s32.totalorder %s249, %s252
    %p258 = scmp.eq.s32.totalorder %s28, 0
    %p259 = por %p257, %p258
    %p260 = scmp.ne.s32.totalorder %s249, %s252
    %p261 = scmp.eq.s32.totalorder %s33, 1
    %p262 = por %p260, %p261
    %p263 = scmp.ne.s32.totalorder %s252, %s253
    %p264 = scmp.eq.s32.totalorder %s33, 0
    %p265 = por %p263, %p264
    %p266 = scmp.ne.s32.totalorder %s252, %s253
    %p267 = scmp.eq.s32.totalorder %s34, 1
    %p268 = por %p266, %p267
    %p270 = scmp.ne.s32.totalorder %s253, %s269
    %p271 = scmp.eq.s32.totalorder %s34, 0
    %p272 = por %p270, %p271
    %s273 = ssub.s32 %s36, %s43
    %p274 = scmp.eq.s32.totalorder %s273, 0
    %s276 = sadd.s32 %s275, 1
    %s277 = scalar_select %p274, %s275, %s276
    %p280 = pneg %p274
    %p281 = scmp.eq.s32.totalorder %s28, 1
    %p282 = por %p280, %p281
    %p283 = scmp.ne.s32.totalorder %s275, %s278
    %p284 = scmp.eq.s32.totalorder %s28, 0
    %p285 = por %p283, %p284
    %p286 = scmp.ne.s32.totalorder %s275, %s278
    %p287 = scmp.eq.s32.totalorder %s33, 1
    %p288 = por %p286, %p287
    %p289 = scmp.ne.s32.totalorder %s278, %s279
    %p290 = scmp.eq.s32.totalorder %s33, 0
    %p291 = por %p289, %p290
    %p292 = scmp.ne.s32.totalorder %s278, %s279
    %p293 = scmp.eq.s32.totalorder %s34, 1
    %p294 = por %p292, %p293
    %p296 = scmp.ne.s32.totalorder %s279, %s295
    %p297 = scmp.eq.s32.totalorder %s34, 0
    %p298 = por %p296, %p297
    %s299 = ssub.s32 %s36, %s43
    %p300 = scmp.eq.s32.totalorder %s299, 0
    %s302 = sadd.s32 %s301, 1
    %s303 = scalar_select %p300, %s301, %s302
    %p306 = pneg %p300
    %p307 = scmp.eq.s32.totalorder %s28, 1
    %p308 = por %p306, %p307
    %p309 = scmp.ne.s32.totalorder %s301, %s304
    %p310 = scmp.eq.s32.totalorder %s28, 0
    %p311 = por %p309, %p310
    %p312 = scmp.ne.s32.totalorder %s301, %s304
    %p313 = scmp.eq.s32.totalorder %s33, 1
    %p314 = por %p312, %p313
    %p315 = scmp.ne.s32.totalorder %s304, %s305
    %p316 = scmp.eq.s32.totalorder %s33, 0
    %p317 = por %p315, %p316
    %p318 = scmp.ne.s32.totalorder %s304, %s305
    %p319 = scmp.eq.s32.totalorder %s34, 1
    %p320 = por %p318, %p319
    %p322 = scmp.ne.s32.totalorder %s305, %s321
    %p323 = scmp.eq.s32.totalorder %s34, 0
    %p324 = por %p322, %p323
    %s325 = ssub.s32 %s36, %s43
    %p326 = scmp.eq.s32.totalorder %s325, 0
    %s328 = sadd.s32 %s327, 1
    %s329 = scalar_select %p326, %s327, %s328
    %p332 = pneg %p326
    %p333 = scmp.eq.s32.totalorder %s28, 1
    %p334 = por %p332, %p333
    %p335 = scmp.ne.s32.totalorder %s327, %s330
    %p336 = scmp.eq.s32.totalorder %s28, 0
    %p337 = por %p335, %p336
    %p338 = scmp.ne.s32.totalorder %s327, %s330
    %p339 = scmp.eq.s32.totalorder %s33, 1
    %p340 = por %p338, %p339
    %p341 = scmp.ne.s32.totalorder %s330, %s331
    %p342 = scmp.eq.s32.totalorder %s33, 0
    %p343 = por %p341, %p342
    %p344 = scmp.ne.s32.totalorder %s330, %s331
    %p345 = scmp.eq.s32.totalorder %s34, 1
    %p346 = por %p344, %p345
    %p348 = scmp.ne.s32.totalorder %s331, %s347
    %p349 = scmp.eq.s32.totalorder %s34, 0
    %p350 = por %p348, %p349
    %s351 = ssub.s32 %s36, %s43
    %p352 = scmp.eq.s32.totalorder %s351, 0
    %s354 = sadd.s32 %s353, 1
    %s355 = scalar_select %p352, %s353, %s354
    %p358 = pneg %p352
    %p359 = scmp.eq.s32.totalorder %s28, 1
    %p360 = por %p358, %p359
    %p361 = scmp.ne.s32.totalorder %s353, %s356
    %p362 = scmp.eq.s32.totalorder %s28, 0
    %p363 = por %p361, %p362
    %p364 = scmp.ne.s32.totalorder %s353, %s356
    %p365 = scmp.eq.s32.totalorder %s33, 1
    %p366 = por %p364, %p365
    %p367 = scmp.ne.s32.totalorder %s356, %s357
    %p368 = scmp.eq.s32.totalorder %s33, 0
    %p369 = por %p367, %p368
    %p370 = scmp.ne.s32.totalorder %s356, %s357
    %p371 = scmp.eq.s32.totalorder %s34, 1
    %p372 = por %p370, %p371
    %p374 = scmp.ne.s32.totalorder %s357, %s373
    %p375 = scmp.eq.s32.totalorder %s34, 0
    %p376 = por %p374, %p375
    %s377 = ssub.s32 %s36, %s43
    %p378 = scmp.eq.s32.totalorder %s377, 0
    %s380 = sadd.s32 %s379, 1
    %s381 = scalar_select %p378, %s379, %s380
    %p384 = pneg %p378
    %p385 = scmp.eq.s32.totalorder %s28, 1
    %p386 = por %p384, %p385
    %p387 = scmp.ne.s32.totalorder %s379, %s382
    %p388 = scmp.eq.s32.totalorder %s28, 0
    %p389 = por %p387, %p388
    %p390 = scmp.ne.s32.totalorder %s379, %s382
    %p391 = scmp.eq.s32.totalorder %s33, 1
    %p392 = por %p390, %p391
    %p393 = scmp.ne.s32.totalorder %s382, %s383
    %p394 = scmp.eq.s32.totalorder %s33, 0
    %p395 = por %p393, %p394
    %p396 = scmp.ne.s32.totalorder %s382, %s383
    %p397 = scmp.eq.s32.totalorder %s34, 1
    %p398 = por %p396, %p397
    %p400 = scmp.ne.s32.totalorder %s383, %s399
    %p401 = scmp.eq.s32.totalorder %s34, 0
    %p402 = por %p400, %p401
    %s403 = ssub.s32 %s36, %s43
    %p404 = scmp.eq.s32.totalorder %s403, 0
    %s406 = sadd.s32 %s405, 1
    %s407 = scalar_select %p404, %s405, %s406
    %p410 = pneg %p404
    %p411 = scmp.eq.s32.totalorder %s28, 1
    %p412 = por %p410, %p411
    %p413 = scmp.ne.s32.totalorder %s405, %s408
    %p414 = scmp.eq.s32.totalorder %s28, 0
    %p415 = por %p413, %p414
    %p416 = scmp.ne.s32.totalorder %s405, %s408
    %p417 = scmp.eq.s32.totalorder %s33, 1
    %p418 = por %p416, %p417
    %p419 = scmp.ne.s32.totalorder %s408, %s409
    %p420 = scmp.eq.s32.totalorder %s33, 0
    %p421 = por %p419, %p420
    %p422 = scmp.ne.s32.totalorder %s408, %s409
    %p423 = scmp.eq.s32.totalorder %s34, 1
    %p424 = por %p422, %p423
    %p426 = scmp.ne.s32.totalorder %s409, %s425
    %p427 = scmp.eq.s32.totalorder %s34, 0
    %p428 = por %p426, %p427
    %s429 = ssub.s32 %s36, %s43
    %p430 = scmp.eq.s32.totalorder %s429, 0
    %s432 = sadd.s32 %s431, 1
    %s433 = scalar_select %p430, %s431, %s432
    %p436 = pneg %p430
    %p437 = scmp.eq.s32.totalorder %s28, 1
    %p438 = por %p436, %p437
    %p439 = scmp.ne.s32.totalorder %s431, %s434
    %p440 = scmp.eq.s32.totalorder %s28, 0
    %p441 = por %p439, %p440
    %p442 = scmp.ne.s32.totalorder %s431, %s434
    %p443 = scmp.eq.s32.totalorder %s33, 1
    %p444 = por %p442, %p443
    %p445 = scmp.ne.s32.totalorder %s434, %s435
    %p446 = scmp.eq.s32.totalorder %s33, 0
    %p447 = por %p445, %p446
    %p448 = scmp.ne.s32.totalorder %s434, %s435
    %p449 = scmp.eq.s32.totalorder %s34, 1
    %p450 = por %p448, %p449
    %p452 = scmp.ne.s32.totalorder %s435, %s451
    %p453 = scmp.eq.s32.totalorder %s34, 0
    %p454 = por %p452, %p453
    %s455 = ssub.s32 %s36, %s43
    %p456 = scmp.eq.s32.totalorder %s455, 0
    %s458 = sadd.s32 %s457, 1
    %s459 = scalar_select %p456, %s457, %s458
    %p462 = pneg %p456
    %p463 = scmp.eq.s32.totalorder %s28, 1
    %p464 = por %p462, %p463
    %p465 = scmp.ne.s32.totalorder %s457, %s460
    %p466 = scmp.eq.s32.totalorder %s28, 0
    %p467 = por %p465, %p466
    %p468 = scmp.ne.s32.totalorder %s457, %s460
    %p469 = scmp.eq.s32.totalorder %s33, 1
    %p470 = por %p468, %p469
    %p471 = scmp.ne.s32.totalorder %s460, %s461
    %p472 = scmp.eq.s32.totalorder %s33, 0
    %p473 = por %p471, %p472
    %p474 = scmp.ne.s32.totalorder %s460, %s461
    %p475 = scmp.eq.s32.totalorder %s34, 1
    %p476 = por %p474, %p475
    %p478 = scmp.ne.s32.totalorder %s461, %s477
    %p479 = scmp.eq.s32.totalorder %s34, 0
    %p480 = por %p478, %p479
    %s481 = ssub.s32 %s36, %s43
    %p482 = scmp.eq.s32.totalorder %s481, 0
    %s484 = sadd.s32 %s483, 1
    %s485 = scalar_select %p482, %s483, %s484
    %p488 = pneg %p482
    %p489 = scmp.eq.s32.totalorder %s28, 1
    %p490 = por %p488, %p489
    %p491 = scmp.ne.s32.totalorder %s483, %s486
    %p492 = scmp.eq.s32.totalorder %s28, 0
    %p493 = por %p491, %p492
    %p494 = scmp.ne.s32.totalorder %s483, %s486
    %p495 = scmp.eq.s32.totalorder %s33, 1
    %p496 = por %p494, %p495
    %p497 = scmp.ne.s32.totalorder %s486, %s487
    %p498 = scmp.eq.s32.totalorder %s33, 0
    %p499 = por %p497, %p498
    %p500 = scmp.ne.s32.totalorder %s486, %s487
    %p501 = scmp.eq.s32.totalorder %s34, 1
    %p502 = por %p500, %p501
    %p504 = scmp.ne.s32.totalorder %s487, %s503
    %p505 = scmp.eq.s32.totalorder %s34, 0
    %p506 = por %p504, %p505
    %s507 = ssub.s32 %s36, %s43
    %p508 = scmp.eq.s32.totalorder %s507, 0
    %s510 = sadd.s32 %s509, 1
    %s511 = scalar_select %p508, %s509, %s510
    %p514 = pneg %p508
    %p515 = scmp.eq.s32.totalorder %s28, 1
    %p516 = por %p514, %p515
    %p517 = scmp.ne.s32.totalorder %s509, %s512
    %p518 = scmp.eq.s32.totalorder %s28, 0
    %p519 = por %p517, %p518
    %p520 = scmp.ne.s32.totalorder %s509, %s512
    %p521 = scmp.eq.s32.totalorder %s33, 1
    %p522 = por %p520, %p521
    %p523 = scmp.ne.s32.totalorder %s512, %s513
    %p524 = scmp.eq.s32.totalorder %s33, 0
    %p525 = por %p523, %p524
    %p526 = scmp.ne.s32.totalorder %s512, %s513
    %p527 = scmp.eq.s32.totalorder %s34, 1
    %p528 = por %p526, %p527
    %p530 = scmp.ne.s32.totalorder %s513, %s529
    %p531 = scmp.eq.s32.totalorder %s34, 0
    %p532 = por %p530, %p531
    %s534 = sadd.s32 %s533, 1
    %p537 = scmp.eq.s32.totalorder %s28, 1
    %p538 = scmp.ne.s32.totalorder %s533, %s535
    %p539 = scmp.eq.s32.totalorder %s28, 0
    %p540 = por %p538, %p539
    %p541 = scmp.ne.s32.totalorder %s533, %s535
    %p542 = scmp.eq.s32.totalorder %s33, 1
    %p543 = por %p541, %p542
    %p544 = scmp.ne.s32.totalorder %s535, %s536
    %p545 = scmp.eq.s32.totalorder %s33, 0
    %p546 = por %p544, %p545
    %p547 = scmp.ne.s32.totalorder %s535, %s536
    %p548 = scmp.eq.s32.totalorder %s34, 1
    %p549 = por %p547, %p548
    %p551 = scmp.ne.s32.totalorder %s536, %s550
    %p552 = scmp.eq.s32.totalorder %s34, 0
    %p553 = por %p551, %p552
    %s555 = sadd.s32 %s554, 1
    %p558 = scmp.eq.s32.totalorder %s28, 1
    %p559 = scmp.ne.s32.totalorder %s554, %s556
    %p560 = scmp.eq.s32.totalorder %s28, 0
    %p561 = por %p559, %p560
    %p562 = scmp.ne.s32.totalorder %s554, %s556
    %p563 = scmp.eq.s32.totalorder %s33, 1
    %p564 = por %p562, %p563
    %p565 = scmp.ne.s32.totalorder %s556, %s557
    %p566 = scmp.eq.s32.totalorder %s33, 0
    %p567 = por %p565, %p566
    %p568 = scmp.ne.s32.totalorder %s556, %s557
    %p569 = scmp.eq.s32.totalorder %s34, 1
    %p570 = por %p568, %p569
    %p572 = scmp.ne.s32.totalorder %s557, %s571
    %p573 = scmp.eq.s32.totalorder %s34, 0
    %p574 = por %p572, %p573
    %s575 = ssub.s32 %s35, %s47
    %p576 = scmp.eq.s32.totalorder %s575, 0
    %s578 = sadd.s32 %s577, 1
    %s579 = scalar_select %p576, %s577, %s578
    %p582 = pneg %p576
    %p583 = scmp.eq.s32.totalorder %s28, 1
    %p584 = por %p582, %p583
    %p585 = scmp.ne.s32.totalorder %s577, %s580
    %p586 = scmp.eq.s32.totalorder %s28, 0
    %p587 = por %p585, %p586
    %p588 = scmp.ne.s32.totalorder %s577, %s580
    %p589 = scmp.eq.s32.totalorder %s33, 1
    %p590 = por %p588, %p589
    %p591 = scmp.ne.s32.totalorder %s580, %s581
    %p592 = scmp.eq.s32.totalorder %s33, 0
    %p593 = por %p591, %p592
    %p594 = scmp.ne.s32.totalorder %s580, %s581
    %p595 = scmp.eq.s32.totalorder %s34, 1
    %p596 = por %p594, %p595
    %p598 = scmp.ne.s32.totalorder %s581, %s597
    %p599 = scmp.eq.s32.totalorder %s34, 0
    %p600 = por %p598, %p599
    %p601 = scmp.le.s32.totalorder 1, %s28
    %p602 = scmp.lt.s32.totalorder %s28, 3
    %p603 = pnand %p601, %p602
    %p604 = pneg %p603
    // Predicated region
    $region9: #{stransformers_forward.1} parent=5 // pred_check
      _
    $region10: #{stransformers_forward.1} parent=5 // pred_check_branch
      %606 = sbr.rel (%p603) target = $region12
    $region11: #{stransformers_forward.1} parent=5 // pred_region
      %s607 = ssub.s32 %s28, 1
      // Predicated region
      $region13: #{stransformers_forward.1} parent=11 // pred_check
        %p608 = pneg %p66
      $region14: #{stransformers_forward.1} parent=11 // pred_check_branch
        %610 = sbr.rel (%p608) target = $region16
      $region15: #{stransformers_forward.1} parent=11 // pred_region
        %s611 = smul.u32 2, %s37
        %p612 = scmp.lt.s32.totalorder %s611, 1
        %s613 = scalar_select %p612, %s611, 1
        %s614 = smul.addr %s613, 8
        %s615 = scalar_lea.vmem %s0, %s614
        %s616 = smul.u32 2, %s37
      $region16: #{stransformers_forward.1} parent=11 // pred_fallthru
        _
      // Predicated region
      $region17: #{stransformers_forward.1} parent=11 // pred_check
        %p617 = pneg %p87
      $region18: #{stransformers_forward.1} parent=11 // pred_check_branch
        %619 = sbr.rel (%p617) target = $region20
      $region19: #{stransformers_forward.1} parent=11 // pred_region
        _
      $region20: #{stransformers_forward.1} parent=11 // pred_fallthru
        _
      // Predicated region
      $region21: #{stransformers_forward.1} parent=11 // pred_check
        %p620 = pneg %p108
      $region22: #{stransformers_forward.1} parent=11 // pred_check_branch
        %622 = sbr.rel (%p620) target = $region24
      $region23: #{stransformers_forward.1} parent=11 // pred_region
        _
      $region24: #{stransformers_forward.1} parent=11 // pred_fallthru
        _
      // Predicated region
      $region25: #{stransformers_forward.1} parent=11 // pred_check
        %p623 = pneg %p129
      $region26: #{stransformers_forward.1} parent=11 // pred_check_branch
        %625 = sbr.rel (%p623) target = $region28
      $region27: #{stransformers_forward.1} parent=11 // pred_region
        _
      $region28: #{stransformers_forward.1} parent=11 // pred_fallthru
        _
      // Predicated region
      $region29: #{stransformers_forward.1} parent=11 // pred_check
        %p626 = pneg %p150
      $region30: #{stransformers_forward.1} parent=11 // pred_check_branch
        %628 = sbr.rel (%p626) target = $region32
      $region31: #{stransformers_forward.1} parent=11 // pred_region
        _
      $region32: #{stransformers_forward.1} parent=11 // pred_fallthru
        _
      // Predicated region
      $region33: #{stransformers_forward.1} parent=11 // pred_check
        %p629 = pneg %p171
      $region34: #{stransformers_forward.1} parent=11 // pred_check_branch
        %631 = sbr.rel (%p629) target = $region36
      $region35: #{stransformers_forward.1} parent=11 // pred_region
        _
      $region36: #{stransformers_forward.1} parent=11 // pred_fallthru
        _
      // Predicated region
      $region37: #{stransformers_forward.1} parent=11 // pred_check
        %p632 = pneg %p192
      $region38: #{stransformers_forward.1} parent=11 // pred_check_branch
        %634 = sbr.rel (%p632) target = $region40
      $region39: #{stransformers_forward.1} parent=11 // pred_region
        _
      $region40: #{stransformers_forward.1} parent=11 // pred_fallthru
        _
      // Predicated region
      $region41: #{stransformers_forward.1} parent=11 // pred_check
        %p635 = pneg %p213
      $region42: #{stransformers_forward.1} parent=11 // pred_check_branch
        %637 = sbr.rel (%p635) target = $region44
      $region43: #{stransformers_forward.1} parent=11 // pred_region
        _
      $region44: #{stransformers_forward.1} parent=11 // pred_fallthru
        _
      // Predicated region
      $region45: #{stransformers_forward.1} parent=11 // pred_check
        %p638 = pneg %p546
      $region46: #{stransformers_forward.1} parent=11 // pred_check_branch
        %640 = sbr.rel (%p638) target = $region48
      $region47: #{stransformers_forward.1} parent=11 // pred_region
        _
      $region48: #{stransformers_forward.1} parent=11 // pred_fallthru
        _
      // Predicated region
      $region49: #{stransformers_forward.1} parent=11 // pred_check
        %p641 = pneg %p567
      $region50: #{stransformers_forward.1} parent=11 // pred_check_branch
        %643 = sbr.rel (%p641) target = $region52
      $region51: #{stransformers_forward.1} parent=11 // pred_region
        _
      $region52: #{stransformers_forward.1} parent=11 // pred_fallthru
        _
    $region12: #{stransformers_forward.1} parent=5 // pred_fallthru
      _
    %p644 = scmp.lt.s32.totalorder %s28, 2
    // Predicated region
    $region53: #{stransformers_forward.1} parent=5 // pred_check
      %p645 = pneg %p644
    $region54: #{stransformers_forward.1} parent=5 // pred_check_branch
      %647 = sbr.rel (%p645) target = $region56
    $region55: #{stransformers_forward.1} parent=5 // pred_region
      // Predicated region
      $region57: #{stransformers_forward.1} parent=55 // pred_check
        %p648 = pneg %p233
      $region58: #{stransformers_forward.1} parent=55 // pred_check_branch
        %650 = sbr.rel (%p648) target = $region60
      $region59: #{stransformers_forward.1} parent=55 // pred_region
        %p651 = scmp.lt.s32.totalorder %s36, 1
        %s652 = scalar_select %p651, %s36, 1
        %s653 = smul.addr %s652, 64
        %s654 = smul.addr %s653, 4
        %s655 = scalar_lea.vmem %s8, %s654
      $region60: #{stransformers_forward.1} parent=55 // pred_fallthru
        _
      // Predicated region
      $region61: #{stransformers_forward.1} parent=55 // pred_check
        %p656 = pneg %p259
      $region62: #{stransformers_forward.1} parent=55 // pred_check_branch
        %658 = sbr.rel (%p656) target = $region64
      $region63: #{stransformers_forward.1} parent=55 // pred_region
        %p659 = scmp.lt.s32.totalorder %s36, 1
        %s660 = scalar_select %p659, %s36, 1
        %s661 = smul.addr %s660, 4
        %s662 = scalar_lea.vmem %s9, %s661
      $region64: #{stransformers_forward.1} parent=55 // pred_fallthru
        _
      // Predicated region
      $region65: #{stransformers_forward.1} parent=55 // pred_check
        %p663 = pneg %p285
      $region66: #{stransformers_forward.1} parent=55 // pred_check_branch
        %665 = sbr.rel (%p663) target = $region68
      $region67: #{stransformers_forward.1} parent=55 // pred_region
        %p666 = scmp.lt.s32.totalorder %s36, 1
        %s667 = scalar_select %p666, %s36, 1
        %s668 = smul.addr %s667, 64
        %s669 = smul.addr %s668, 4
        %s670 = scalar_lea.vmem %s10, %s669
      $region68: #{stransformers_forward.1} parent=55 // pred_fallthru
        _
      // Predicated region
      $region69: #{stransformers_forward.1} parent=55 // pred_check
        %p671 = pneg %p311
      $region70: #{stransformers_forward.1} parent=55 // pred_check_branch
        %673 = sbr.rel (%p671) target = $region72
      $region71: #{stransformers_forward.1} parent=55 // pred_region
        %p674 = scmp.lt.s32.totalorder %s36, 1
        %s675 = scalar_select %p674, %s36, 1
        %s676 = smul.addr %s675, 4
        %s677 = scalar_lea.vmem %s11, %s676
      $region72: #{stransformers_forward.1} parent=55 // pred_fallthru
        _
      // Predicated region
      $region73: #{stransformers_forward.1} parent=55 // pred_check
        %p678 = pneg %p337
      $region74: #{stransformers_forward.1} parent=55 // pred_check_branch
        %680 = sbr.rel (%p678) target = $region76
      $region75: #{stransformers_forward.1} parent=55 // pred_region
        %p681 = scmp.lt.s32.totalorder %s36, 1
        %s682 = scalar_select %p681, %s36, 1
        %s683 = smul.addr %s682, 64
        %s684 = smul.addr %s683, 4
        %s685 = scalar_lea.vmem %s12, %s684
      $region76: #{stransformers_forward.1} parent=55 // pred_fallthru
        _
      // Predicated region
      $region77: #{stransformers_forward.1} parent=55 // pred_check
        %p686 = pneg %p363
      $region78: #{stransformers_forward.1} parent=55 // pred_check_branch
        %688 = sbr.rel (%p686) target = $region80
      $region79: #{stransformers_forward.1} parent=55 // pred_region
        %p689 = scmp.lt.s32.totalorder %s36, 1
        %s690 = scalar_select %p689, %s36, 1
        %s691 = smul.addr %s690, 4
        %s692 = scalar_lea.vmem %s13, %s691
      $region80: #{stransformers_forward.1} parent=55 // pred_fallthru
        _
      // Predicated region
      $region81: #{stransformers_forward.1} parent=55 // pred_check
        %p693 = pneg %p389
      $region82: #{stransformers_forward.1} parent=55 // pred_check_branch
        %695 = sbr.rel (%p693) target = $region84
      $region83: #{stransformers_forward.1} parent=55 // pred_region
        %p696 = scmp.lt.s32.totalorder %s36, 1
        %s697 = scalar_select %p696, %s36, 1
        %s698 = smul.addr %s697, 16
        %s699 = smul.addr %s698, 4
        %s700 = scalar_lea.vmem %s14, %s699
      $region84: #{stransformers_forward.1} parent=55 // pred_fallthru
        _
      // Predicated region
      $region85: #{stransformers_forward.1} parent=55 // pred_check
        %p701 = pneg %p415
      $region86: #{stransformers_forward.1} parent=55 // pred_check_branch
        %703 = sbr.rel (%p701) target = $region88
      $region87: #{stransformers_forward.1} parent=55 // pred_region
        %p704 = scmp.lt.s32.totalorder %s36, 1
        %s705 = scalar_select %p704, %s36, 1
        %s706 = scalar_lea.vmem %s15, %s705
      $region88: #{stransformers_forward.1} parent=55 // pred_fallthru
        _
      // Predicated region
      $region89: #{stransformers_forward.1} parent=55 // pred_check
        %p707 = pneg %p441
      $region90: #{stransformers_forward.1} parent=55 // pred_check_branch
        %709 = sbr.rel (%p707) target = $region92
      $region91: #{stransformers_forward.1} parent=55 // pred_region
        %p710 = scmp.lt.s32.totalorder %s36, 1
        %s711 = scalar_select %p710, %s36, 1
        %s712 = smul.addr %s711, 32
        %s713 = smul.addr %s712, 4
        %s714 = scalar_lea.vmem %s16, %s713
      $region92: #{stransformers_forward.1} parent=55 // pred_fallthru
        _
      // Predicated region
      $region93: #{stransformers_forward.1} parent=55 // pred_check
        %p715 = pneg %p467
      $region94: #{stransformers_forward.1} parent=55 // pred_check_branch
        %717 = sbr.rel (%p715) target = $region96
      $region95: #{stransformers_forward.1} parent=55 // pred_region
        %p718 = scmp.lt.s32.totalorder %s36, 1
        %s719 = scalar_select %p718, %s36, 1
        %s720 = smul.addr %s719, 2
        %s721 = scalar_lea.vmem %s17, %s720
      $region96: #{stransformers_forward.1} parent=55 // pred_fallthru
        _
      // Predicated region
      $region97: #{stransformers_forward.1} parent=55 // pred_check
        %p722 = pneg %p493
      $region98: #{stransformers_forward.1} parent=55 // pred_check_branch
        %724 = sbr.rel (%p722) target = $region100
      $region99: #{stransformers_forward.1} parent=55 // pred_region
        %p725 = scmp.lt.s32.totalorder %s36, 1
        %s726 = scalar_select %p725, %s36, 1
        %s727 = smul.addr %s726, 32
        %s728 = smul.addr %s727, 4
        %s729 = scalar_lea.vmem %s18, %s728
      $region100: #{stransformers_forward.1} parent=55 // pred_fallthru
        _
      // Predicated region
      $region101: #{stransformers_forward.1} parent=55 // pred_check
        %p730 = pneg %p519
      $region102: #{stransformers_forward.1} parent=55 // pred_check_branch
        %732 = sbr.rel (%p730) target = $region104
      $region103: #{stransformers_forward.1} parent=55 // pred_region
        %p733 = scmp.lt.s32.totalorder %s36, 1
        %s734 = scalar_select %p733, %s36, 1
        %s735 = scalar_lea.vmem %s19, %s734
      $region104: #{stransformers_forward.1} parent=55 // pred_fallthru
        _
    $region56: #{stransformers_forward.1} parent=5 // pred_fallthru
      _
    %p736 = scmp.le.s32.totalorder 1, %s28
    %p737 = scmp.lt.s32.totalorder %s28, 3
    %p738 = pnand %p736, %p737
    %p739 = pneg %p738
    // Predicated region
    $region105: #{stransformers_forward.1} parent=5 // pred_check
      _
    $region106: #{stransformers_forward.1} parent=5 // pred_check_branch
      %741 = sbr.rel (%p738) target = $region108
    $region107: #{stransformers_forward.1} parent=5 // pred_region
      %s742 = ssub.s32 %s28, 1
      %s743 = smul.u32 2, %s37
      %p744 = scmp.lt.s32.totalorder %s743, 1
      %s745 = scalar_select %p744, %s743, 1
      %s746 = smul.addr %s745, 8
      %s747 = scalar_lea.vmem %s0, %s746
      %p748 = pneg %p66
      %p749 = pneg %p63
      %p750 = pneg %p87
      %p751 = pneg %p84
      %p752 = pneg %p108
      %p753 = pneg %p105
      %p754 = pneg %p129
      %p755 = pneg %p126
      %p756 = pneg %p150
      %p757 = pneg %p147
      %p758 = pneg %p171
      %p759 = pneg %p168
      %p760 = pneg %p192
      %p761 = pneg %p189
      %p762 = pneg %p213
      %p763 = pneg %p210
      %p764 = scmp.lt.s32.totalorder %s38, 1
      %s765 = scalar_select %p764, %s38, 1
      %s766 = smul.addr %s765, 64
      %s767 = smul.addr %s766, 4
      %s768 = scalar_lea.vmem %s8, %s767
      %p769 = pneg %p239
      %p770 = pneg %p236
      %p771 = scmp.lt.s32.totalorder %s38, 1
      %s772 = scalar_select %p771, %s38, 1
      %s773 = smul.addr %s772, 4
      %s774 = scalar_lea.vmem %s9, %s773
      %p775 = pneg %p265
      %p776 = pneg %p262
      %p777 = scmp.lt.s32.totalorder %s38, 1
      %s778 = scalar_select %p777, %s38, 1
      %s779 = smul.addr %s778, 64
      %s780 = smul.addr %s779, 4
      %s781 = scalar_lea.vmem %s10, %s780
      %p782 = pneg %p291
      %p783 = pneg %p288
      %p784 = scmp.lt.s32.totalorder %s38, 1
      %s785 = scalar_select %p784, %s38, 1
      %s786 = smul.addr %s785, 4
      %s787 = scalar_lea.vmem %s11, %s786
      %p788 = pneg %p317
      %p789 = pneg %p314
      %p790 = scmp.lt.s32.totalorder %s38, 1
      %s791 = scalar_select %p790, %s38, 1
      %s792 = smul.addr %s791, 64
      %s793 = smul.addr %s792, 4
      %s794 = scalar_lea.vmem %s12, %s793
      %p795 = pneg %p343
      %p796 = pneg %p340
      %p797 = scmp.lt.s32.totalorder %s38, 1
      %s798 = scalar_select %p797, %s38, 1
      %s799 = smul.addr %s798, 4
      %s800 = scalar_lea.vmem %s13, %s799
      %p801 = pneg %p369
      %p802 = pneg %p366
      %p803 = scmp.lt.s32.totalorder %s38, 1
      %s804 = scalar_select %p803, %s38, 1
      %s805 = smul.addr %s804, 16
      %s806 = smul.addr %s805, 4
      %s807 = scalar_lea.vmem %s14, %s806
      %p808 = pneg %p395
      %p809 = pneg %p392
      %p810 = scmp.lt.s32.totalorder %s38, 1
      %s811 = scalar_select %p810, %s38, 1
      %s812 = scalar_lea.vmem %s15, %s811
      %p813 = pneg %p421
      %p814 = pneg %p418
      %p815 = scmp.lt.s32.totalorder %s38, 1
      %s816 = scalar_select %p815, %s38, 1
      %s817 = smul.addr %s816, 32
      %s818 = smul.addr %s817, 4
      %s819 = scalar_lea.vmem %s16, %s818
      %p820 = pneg %p447
      %p821 = pneg %p444
      %p822 = scmp.lt.s32.totalorder %s38, 1
      %s823 = scalar_select %p822, %s38, 1
      %s824 = smul.addr %s823, 2
      %s825 = scalar_lea.vmem %s17, %s824
      %p826 = pneg %p473
      %p827 = pneg %p470
      %p828 = scmp.lt.s32.totalorder %s38, 1
      %s829 = scalar_select %p828, %s38, 1
      %s830 = smul.addr %s829, 32
      %s831 = smul.addr %s830, 4
      %s832 = scalar_lea.vmem %s18, %s831
      %p833 = pneg %p499
      %p834 = pneg %p496
      %p835 = scmp.lt.s32.totalorder %s38, 1
      %s836 = scalar_select %p835, %s38, 1
      %s837 = scalar_lea.vmem %s19, %s836
      %p838 = pneg %p525
      %p839 = pneg %p522
      %p840 = pneg %p546
      %p841 = pneg %p543
      %p842 = pneg %p567
      %p843 = pneg %p564
      %p844 = pneg %p593
      %p845 = pneg %p590
      %p846 = scmp.lt.s32.totalorder %s37, 0
      %s847 = scalar_select %p846, %s37, 0
      %s848 = smul.addr %s847, 2
      %s849 = smul.addr %s848, 8
      %s850 = scalar_lea.vmem %s22, %s849
      %s851 = smul.u32 2, %s37
      %p852 = scmp.lt.s32.totalorder %s851, 1
      %s853 = scalar_select %p852, %s851, 1
      %s854 = smul.addr %s853, 8
      %s855 = scalar_lea.vmem %s0, %s854
      %s856 = smul.u32 2, %s37
      %p857 = scmp.lt.s32.totalorder %s38, 1
      %s858 = scalar_select %p857, %s38, 1
      %s859 = smul.addr %s858, 64
      %s860 = smul.addr %s859, 4
      %s861 = scalar_lea.vmem %s8, %s860
      %p862 = scmp.lt.s32.totalorder %s38, 1
      %s863 = scalar_select %p862, %s38, 1
      %s864 = smul.addr %s863, 4
      %s865 = scalar_lea.vmem %s9, %s864
      %p866 = scmp.lt.s32.totalorder %s38, 1
      %s867 = scalar_select %p866, %s38, 1
      %s868 = smul.addr %s867, 64
      %s869 = smul.addr %s868, 4
      %s870 = scalar_lea.vmem %s10, %s869
      %p871 = scmp.lt.s32.totalorder %s38, 1
      %s872 = scalar_select %p871, %s38, 1
      %s873 = smul.addr %s872, 4
      %s874 = scalar_lea.vmem %s11, %s873
      %p875 = scmp.lt.s32.totalorder %s38, 1
      %s876 = scalar_select %p875, %s38, 1
      %s877 = smul.addr %s876, 64
      %s878 = smul.addr %s877, 4
      %s879 = scalar_lea.vmem %s12, %s878
      %p880 = scmp.lt.s32.totalorder %s38, 1
      %s881 = scalar_select %p880, %s38, 1
      %s882 = smul.addr %s881, 4
      %s883 = scalar_lea.vmem %s13, %s882
      %p884 = scmp.lt.s32.totalorder %s38, 1
      %s885 = scalar_select %p884, %s38, 1
      %s886 = smul.addr %s885, 16
      %s887 = smul.addr %s886, 4
      %s888 = scalar_lea.vmem %s14, %s887
      %p889 = scmp.lt.s32.totalorder %s38, 1
      %s890 = scalar_select %p889, %s38, 1
      %s891 = scalar_lea.vmem %s15, %s890
      %p892 = scmp.lt.s32.totalorder %s38, 1
      %s893 = scalar_select %p892, %s38, 1
      %s894 = smul.addr %s893, 32
      %s895 = smul.addr %s894, 4
      %s896 = scalar_lea.vmem %s16, %s895
      %p897 = scmp.lt.s32.totalorder %s38, 1
      %s898 = scalar_select %p897, %s38, 1
      %s899 = smul.addr %s898, 2
      %s900 = scalar_lea.vmem %s17, %s899
      %p901 = scmp.lt.s32.totalorder %s38, 1
      %s902 = scalar_select %p901, %s38, 1
      %s903 = smul.addr %s902, 32
      %s904 = smul.addr %s903, 4
      %s905 = scalar_lea.vmem %s18, %s904
      %p906 = scmp.lt.s32.totalorder %s38, 1
      %s907 = scalar_select %p906, %s38, 1
      %s908 = scalar_lea.vmem %s19, %s907
      %p909 = scmp.lt.s32.totalorder %s37, 0
      %s910 = scalar_select %p909, %s37, 0
      %s911 = smul.addr %s910, 2
      %s912 = smul.addr %s911, 8
      %s913 = scalar_lea.vmem %s22, %s912
      %p915 = scmp.eq.s32.totalorder %s38, 0
      // Predicated region
      $region109: #{stransformers_forward.1} parent=107 // pred_check
        %p916 = pneg %p915
      $region110: #{stransformers_forward.1} parent=107 // pred_check_branch
        %918 = sbr.rel (%p916) target = $region112
      $region111: #{stransformers_forward.1} parent=107 // pred_region
        %v919 = vld [vmem:[%s855] sm:$0xff]
        %v920 = vld [vmem:[%s855 + $0x8] sm:$0xff]
        %v921 = vpack.c.bf16 %v920, %v919
        %v922 = vld [vmem:[%s1] sm:$0xf]
        %v923 = vld [vmem:[%s1 + $0x4] sm:$0xf]
        %v924 = vld [vmem:[%s2] sm:$0x1]
        %v926 = vlaneseq
        %v927 = vshrl.u32 %v926, 7
        %v928 = vsub.s32 0, %v927
        %v929 = vrot.slane %v924, %v928
        %v933 = vunpack.c.l.b16 %v922
        %v934 = vunpack.c.l.b16 %v923
        %v935 = vpack.c.b16 %v934, %v933
        %vm937 = vcmask 130048
        %v939 = vsel %vm937, %v921, 0
        %941 = vmatprep.subr.bf16.mxu0 0
        %942 = vmatpush1.bf16.msra.mxu0 %v935
        %943 = vmatprep.subr.bf16.mxu0 0
        %944 = vmatpush1.bf16.msra.mxu0 0
        %945 = vmatprep.subr.bf16.mxu0 0
        %946 = vmatpush1.bf16.msra.mxu0 0
        %947 = vmatprep.subr.bf16.mxu0 0
        %948 = vmatpush1.bf16.msra.mxu0 0
        %949 = vmatprep.subr.bf16.mxu0 0
        %950 = vmatpush1.bf16.msra.mxu0 0
        %951 = vmatprep.subr.bf16.mxu0 0
        %952 = vmatpush1.bf16.msra.mxu0 0
        %953 = vmatprep.subr.bf16.mxu0 0
        %954 = vmatpush1.bf16.msra.mxu0 0
        %955 = vmatprep.subr.bf16.mxu0 0
        %956 = vmatpush1.bf16.msra.mxu0 0
        %957 = vmatprep.subr.bf16.mxu0 0
        %958 = vmatpush1.bf16.msra.mxu0 0
        %959 = vmatprep.subr.bf16.mxu0 0
        %960 = vmatpush1.bf16.msra.mxu0 0
        %961 = vmatprep.subr.bf16.mxu0 0
        %962 = vmatpush1.bf16.msra.mxu0 0
        %963 = vmatprep.subr.bf16.mxu0 0
        %964 = vmatpush1.bf16.msra.mxu0 0
        %965 = vmatprep.subr.bf16.mxu0 0
        %966 = vmatpush1.bf16.msra.mxu0 0
        %967 = vmatprep.subr.bf16.mxu0 0
        %968 = vmatpush1.bf16.msra.mxu0 0
        %969 = vmatprep.subr.bf16.mxu0 0
        %970 = vmatpush1.bf16.msra.mxu0 0
        %971 = vmatprep.subr.bf16.mxu0 0
        %972 = vmatpush1.bf16.msra.mxu0 0
        %973 = vmatprep.mubr.bf16.mxu0 0
        %974 = vmatmul.mubr.bf16.gmra.mrb[0].mxu0 %v939
        %v975 = vpop.f32.mrb[0].mxu0
        %v976 = vadd.f32 %v929, %v975
        %v977 = vpop.f32.mrb[0].mxu0
        %v978 = vpop.f32.mrb[0].mxu0
        %v979 = vadd.f32 %v929, %v978
        %v980 = vpop.f32.mrb[0].mxu0
        %981 = vdwg.mxu0
        %v982 = vmax.f32 %v976, 0.0
        %v983 = vmax.f32 %v979, 0.0
        %v984 = vpack.c.bf16 %v983, %v982
        %v985 = vld [vmem:[%s3] sm:$0xff]
        %v986 = vld [vmem:[%s3 + $0x8] sm:$0xff]
        %v987 = vld [vmem:[%s3 + $0x10] sm:$0xff]
        %v988 = vld [vmem:[%s3 + $0x18] sm:$0xff]
        %v989 = vld [vmem:[%s3 + $0x20] sm:$0xff]
        %v990 = vld [vmem:[%s3 + $0x28] sm:$0xff]
        %v991 = vld [vmem:[%s3 + $0x30] sm:$0xff]
        %v992 = vld [vmem:[%s3 + $0x38] sm:$0xff]
        %v993 = vld [vmem:[%s3 + $0x40] sm:$0xff]
        %v994 = vld [vmem:[%s3 + $0x48] sm:$0xff]
        %v995 = vld [vmem:[%s3 + $0x50] sm:$0xff]
        %v996 = vld [vmem:[%s3 + $0x58] sm:$0xff]
        %v997 = vld [vmem:[%s3 + $0x60] sm:$0xff]
        %v998 = vld [vmem:[%s3 + $0x68] sm:$0xff]
        %v999 = vld [vmem:[%s3 + $0x70] sm:$0xff]
        %v1000 = vld [vmem:[%s3 + $0x78] sm:$0xff]
        %v1001 = vld [vmem:[%s4] sm:$0x3]
        %v1003 = vlaneseq
        %v1004 = vshrl.u32 %v1003, 7
        %v1005 = vsub.s32 0, %v1004
        %v1006 = vrot.slane %v1001, %v1005
        %v1007 = vlaneseq
        %v1008 = vshrl.u32 %v1007, 7
        %v1009 = vsub.s32 1, %v1008
        %v1010 = vrot.slane %v1001, %v1009
        %v1029 = vunpack.c.l.b16 %v985
        %v1030 = vunpack.c.h.b16 %v985
        %v1031 = vunpack.c.l.b16 %v986
        %v1032 = vunpack.c.h.b16 %v986
        %v1033 = vunpack.c.l.b16 %v987
        %v1034 = vunpack.c.h.b16 %v987
        %v1035 = vunpack.c.l.b16 %v988
        %v1036 = vunpack.c.h.b16 %v988
        %v1037 = vunpack.c.l.b16 %v989
        %v1038 = vunpack.c.h.b16 %v989
        %v1039 = vunpack.c.l.b16 %v990
        %v1040 = vunpack.c.h.b16 %v990
        %v1041 = vunpack.c.l.b16 %v991
        %v1042 = vunpack.c.h.b16 %v991
        %v1043 = vunpack.c.l.b16 %v992
        %v1044 = vunpack.c.h.b16 %v992
        %v1045 = vunpack.c.l.b16 %v993
        %v1046 = vunpack.c.h.b16 %v993
        %v1047 = vunpack.c.l.b16 %v994
        %v1048 = vunpack.c.h.b16 %v994
        %v1049 = vunpack.c.l.b16 %v995
        %v1050 = vunpack.c.h.b16 %v995
        %v1051 = vunpack.c.l.b16 %v996
        %v1052 = vunpack.c.h.b16 %v996
        %v1053 = vunpack.c.l.b16 %v997
        %v1054 = vunpack.c.h.b16 %v997
        %v1055 = vunpack.c.l.b16 %v998
        %v1056 = vunpack.c.h.b16 %v998
        %v1057 = vunpack.c.l.b16 %v999
        %v1058 = vunpack.c.h.b16 %v999
        %v1059 = vunpack.c.l.b16 %v1000
        %v1060 = vunpack.c.h.b16 %v1000
        %v1061 = vpack.c.b16 %v1031, %v1029
        %v1062 = vpack.c.b16 %v1032, %v1030
        %v1063 = vpack.c.b16 %v1035, %v1033
        %v1064 = vpack.c.b16 %v1036, %v1034
        %v1065 = vpack.c.b16 %v1039, %v1037
        %v1066 = vpack.c.b16 %v1040, %v1038
        %v1067 = vpack.c.b16 %v1043, %v1041
        %v1068 = vpack.c.b16 %v1044, %v1042
        %v1069 = vpack.c.b16 %v1047, %v1045
        %v1070 = vpack.c.b16 %v1048, %v1046
        %v1071 = vpack.c.b16 %v1051, %v1049
        %v1072 = vpack.c.b16 %v1052, %v1050
        %v1073 = vpack.c.b16 %v1055, %v1053
        %v1074 = vpack.c.b16 %v1056, %v1054
        %v1075 = vpack.c.b16 %v1059, %v1057
        %v1076 = vpack.c.b16 %v1060, %v1058
        %1093 = vmatprep.subr.bf16.mxu0 %v1062
        %1094 = vmatpush1.bf16.msra.mxu0 %v1061
        %1095 = vmatprep.subr.bf16.mxu0 %v1064
        %1096 = vmatpush1.bf16.msra.mxu0 %v1063
        %1097 = vmatprep.subr.bf16.mxu0 %v1066
        %1098 = vmatpush1.bf16.msra.mxu0 %v1065
        %1099 = vmatprep.subr.bf16.mxu0 %v1068
        %1100 = vmatpush1.bf16.msra.mxu0 %v1067
        %1101 = vmatprep.subr.bf16.mxu0 %v1070
        %1102 = vmatpush1.bf16.msra.mxu0 %v1069
        %1103 = vmatprep.subr.bf16.mxu0 %v1072
        %1104 = vmatpush1.bf16.msra.mxu0 %v1071
        %1105 = vmatprep.subr.bf16.mxu0 %v1074
        %1106 = vmatpush1.bf16.msra.mxu0 %v1073
        %1107 = vmatprep.subr.bf16.mxu0 %v1076
        %1108 = vmatpush1.bf16.msra.mxu0 %v1075
        %1109 = vmatprep.subr.bf16.mxu0 0
        %1110 = vmatpush1.bf16.msra.mxu0 0
        %1111 = vmatprep.subr.bf16.mxu0 0
        %1112 = vmatpush1.bf16.msra.mxu0 0
        %1113 = vmatprep.subr.bf16.mxu0 0
        %1114 = vmatpush1.bf16.msra.mxu0 0
        %1115 = vmatprep.subr.bf16.mxu0 0
        %1116 = vmatpush1.bf16.msra.mxu0 0
        %1117 = vmatprep.subr.bf16.mxu0 0
        %1118 = vmatpush1.bf16.msra.mxu0 0
        %1119 = vmatprep.subr.bf16.mxu0 0
        %1120 = vmatpush1.bf16.msra.mxu0 0
        %1121 = vmatprep.subr.bf16.mxu0 0
        %1122 = vmatpush1.bf16.msra.mxu0 0
        %1123 = vmatprep.subr.bf16.mxu0 0
        %1124 = vmatpush1.bf16.msra.mxu0 0
        %1125 = vmatprep.mubr.bf16.mxu0 0
        %1126 = vmatmul.mubr.bf16.gmra.mrb[0].mxu0 %v984
        %v1127 = vpop.f32.mrb[0].mxu0
        %v1128 = vadd.f32 %v1006, %v1127
        %v1129 = vpop.f32.mrb[0].mxu0
        %v1130 = vadd.f32 %v1010, %v1129
        %v1131 = vpop.f32.mrb[0].mxu0
        %v1132 = vadd.f32 %v1006, %v1131
        %v1133 = vpop.f32.mrb[0].mxu0
        %v1134 = vadd.f32 %v1010, %v1133
        %1135 = vdwg.mxu0
        %v1136 = vmax.f32 %v1128, 0.0
        %v1137 = vmax.f32 %v1130, 0.0
        %v1138 = vmax.f32 %v1132, 0.0
        %v1139 = vmax.f32 %v1134, 0.0
        %v1140 = vpack.c.bf16 %v1138, %v1136
        %v1141 = vpack.c.bf16 %v1139, %v1137
        %v1142 = vld [vmem:[%s5] sm:$0xf]
        %v1143 = vld [vmem:[%s5 + $0x4] sm:$0xf]
        %v1144 = vld [vmem:[%s5 + $0x8] sm:$0xf]
        %v1145 = vld [vmem:[%s5 + $0xc] sm:$0xf]
        %v1146 = vld [vmem:[%s5 + $0x10] sm:$0xf]
        %v1147 = vld [vmem:[%s5 + $0x14] sm:$0xf]
        %v1148 = vld [vmem:[%s5 + $0x18] sm:$0xf]
        %v1149 = vld [vmem:[%s5 + $0x1c] sm:$0xf]
        %v1150 = vld [vmem:[%s5 + $0x20] sm:$0xf]
        %v1151 = vld [vmem:[%s5 + $0x24] sm:$0xf]
        %v1152 = vld [vmem:[%s5 + $0x28] sm:$0xf]
        %v1153 = vld [vmem:[%s5 + $0x2c] sm:$0xf]
        %v1154 = vld [vmem:[%s5 + $0x30] sm:$0xf]
        %v1155 = vld [vmem:[%s5 + $0x34] sm:$0xf]
        %v1156 = vld [vmem:[%s5 + $0x38] sm:$0xf]
        %v1157 = vld [vmem:[%s5 + $0x3c] sm:$0xf]
        %v1158 = vld [vmem:[%s5 + $0x40] sm:$0xf]
        %v1159 = vld [vmem:[%s5 + $0x44] sm:$0xf]
        %v1160 = vld [vmem:[%s5 + $0x48] sm:$0xf]
        %v1161 = vld [vmem:[%s5 + $0x4c] sm:$0xf]
        %v1162 = vld [vmem:[%s5 + $0x50] sm:$0xf]
        %v1163 = vld [vmem:[%s5 + $0x54] sm:$0xf]
        %v1164 = vld [vmem:[%s5 + $0x58] sm:$0xf]
        %v1165 = vld [vmem:[%s5 + $0x5c] sm:$0xf]
        %v1166 = vld [vmem:[%s5 + $0x60] sm:$0xf]
        %v1167 = vld [vmem:[%s5 + $0x64] sm:$0xf]
        %v1168 = vld [vmem:[%s5 + $0x68] sm:$0xf]
        %v1169 = vld [vmem:[%s5 + $0x6c] sm:$0xf]
        %v1170 = vld [vmem:[%s5 + $0x70] sm:$0xf]
        %v1171 = vld [vmem:[%s5 + $0x74] sm:$0xf]
        %v1172 = vld [vmem:[%s5 + $0x78] sm:$0xf]
        %v1173 = vld [vmem:[%s5 + $0x7c] sm:$0xf]
        %v1174 = vld [vmem:[%s6] sm:$0x1]
        %v1176 = vlaneseq
        %v1177 = vshrl.u32 %v1176, 7
        %v1178 = vsub.s32 0, %v1177
        %v1179 = vrot.slane %v1174, %v1178
        %v1213 = vunpack.c.l.b16 %v1142
        %v1214 = vunpack.c.l.b16 %v1143
        %v1215 = vunpack.c.l.b16 %v1144
        %v1216 = vunpack.c.l.b16 %v1145
        %v1217 = vunpack.c.l.b16 %v1146
        %v1218 = vunpack.c.l.b16 %v1147
        %v1219 = vunpack.c.l.b16 %v1148
        %v1220 = vunpack.c.l.b16 %v1149
        %v1221 = vunpack.c.l.b16 %v1150
        %v1222 = vunpack.c.l.b16 %v1151
        %v1223 = vunpack.c.l.b16 %v1152
        %v1224 = vunpack.c.l.b16 %v1153
        %v1225 = vunpack.c.l.b16 %v1154
        %v1226 = vunpack.c.l.b16 %v1155
        %v1227 = vunpack.c.l.b16 %v1156
        %v1228 = vunpack.c.l.b16 %v1157
        %v1229 = vunpack.c.l.b16 %v1158
        %v1230 = vunpack.c.l.b16 %v1159
        %v1231 = vunpack.c.l.b16 %v1160
        %v1232 = vunpack.c.l.b16 %v1161
        %v1233 = vunpack.c.l.b16 %v1162
        %v1234 = vunpack.c.l.b16 %v1163
        %v1235 = vunpack.c.l.b16 %v1164
        %v1236 = vunpack.c.l.b16 %v1165
        %v1237 = vunpack.c.l.b16 %v1166
        %v1238 = vunpack.c.l.b16 %v1167
        %v1239 = vunpack.c.l.b16 %v1168
        %v1240 = vunpack.c.l.b16 %v1169
        %v1241 = vunpack.c.l.b16 %v1170
        %v1242 = vunpack.c.l.b16 %v1171
        %v1243 = vunpack.c.l.b16 %v1172
        %v1244 = vunpack.c.l.b16 %v1173
        %v1245 = vpack.c.b16 %v1214, %v1213
        %v1246 = vpack.c.b16 %v1216, %v1215
        %v1247 = vpack.c.b16 %v1218, %v1217
        %v1248 = vpack.c.b16 %v1220, %v1219
        %v1249 = vpack.c.b16 %v1222, %v1221
        %v1250 = vpack.c.b16 %v1224, %v1223
        %v1251 = vpack.c.b16 %v1226, %v1225
        %v1252 = vpack.c.b16 %v1228, %v1227
        %v1253 = vpack.c.b16 %v1230, %v1229
        %v1254 = vpack.c.b16 %v1232, %v1231
        %v1255 = vpack.c.b16 %v1234, %v1233
        %v1256 = vpack.c.b16 %v1236, %v1235
        %v1257 = vpack.c.b16 %v1238, %v1237
        %v1258 = vpack.c.b16 %v1240, %v1239
        %v1259 = vpack.c.b16 %v1242, %v1241
        %v1260 = vpack.c.b16 %v1244, %v1243
        %1277 = vmatprep.subr.bf16.mxu0 0
        %1278 = vmatpush1.bf16.msra.mxu0 %v1245
        %1279 = vmatprep.subr.bf16.mxu0 0
        %1280 = vmatpush1.bf16.msra.mxu0 %v1246
        %1281 = vmatprep.subr.bf16.mxu0 0
        %1282 = vmatpush1.bf16.msra.mxu0 %v1247
        %1283 = vmatprep.subr.bf16.mxu0 0
        %1284 = vmatpush1.bf16.msra.mxu0 %v1248
        %1285 = vmatprep.subr.bf16.mxu0 0
        %1286 = vmatpush1.bf16.msra.mxu0 %v1249
        %1287 = vmatprep.subr.bf16.mxu0 0
        %1288 = vmatpush1.bf16.msra.mxu0 %v1250
        %1289 = vmatprep.subr.bf16.mxu0 0
        %1290 = vmatpush1.bf16.msra.mxu0 %v1251
        %1291 = vmatprep.subr.bf16.mxu0 0
        %1292 = vmatpush1.bf16.msra.mxu0 %v1252
        %1293 = vmatprep.subr.bf16.mxu0 0
        %1294 = vmatpush1.bf16.msra.mxu0 %v1253
        %1295 = vmatprep.subr.bf16.mxu0 0
        %1296 = vmatpush1.bf16.msra.mxu0 %v1254
        %1297 = vmatprep.subr.bf16.mxu0 0
        %1298 = vmatpush1.bf16.msra.mxu0 %v1255
        %1299 = vmatprep.subr.bf16.mxu0 0
        %1300 = vmatpush1.bf16.msra.mxu0 %v1256
        %1301 = vmatprep.subr.bf16.mxu0 0
        %1302 = vmatpush1.bf16.msra.mxu0 %v1257
        %1303 = vmatprep.subr.bf16.mxu0 0
        %1304 = vmatpush1.bf16.msra.mxu0 %v1258
        %1305 = vmatprep.subr.bf16.mxu0 0
        %1306 = vmatpush1.bf16.msra.mxu0 %v1259
        %1307 = vmatprep.subr.bf16.mxu0 0
        %1308 = vmatpush1.bf16.msra.mxu0 %v1260
        %1309 = vmatprep.mubr.bf16.mxu0 %v1141
        %1310 = vmatmul.mubr.bf16.gmra.mrb[0].mxu0 %v1140
        %v1311 = vpop.f32.mrb[0].mxu0
        %v1312 = vadd.f32 %v1179, %v1311
        %v1313 = vpop.f32.mrb[0].mxu0
        %v1314 = vpop.f32.mrb[0].mxu0
        %v1315 = vadd.f32 %v1179, %v1314
        %v1316 = vpop.f32.mrb[0].mxu0
        %1317 = vdwg.mxu0
        %v1318 = vmax.f32 %v1312, 0.0
        %v1319 = vmax.f32 %v1315, 0.0
        %v1320 = vld [vmem:[%s7] sm:$0xff]
        %v1321 = vld [vmem:[%s7 + $0x8] sm:$0xff]
        %v1322 = vadd.f32 %v1318, %v1320
        %v1323 = vadd.f32 %v1319, %v1321
        %1324 = vst [vmem:[#allocation2] sm:$0xff] %v1322
        %1325 = vst [vmem:[#allocation2 + $0x8] sm:$0xff] %v1323
      $region112: #{stransformers_forward.1} parent=107 // pred_fallthru
        _
      %v1326 = vld [vmem:[#allocation2] sm:$0xff]
      %v1327 = vld [vmem:[#allocation2 + $0x8] sm:$0xff]
      %v1328 = vpack.c.bf16 %v1327, %v1326
      %v1329 = vld [vmem:[%s861] sm:$0xf]
      %v1330 = vld [vmem:[%s861 + $0x4] sm:$0xf]
      %v1331 = vld [vmem:[%s861 + $0x8] sm:$0xf]
      %v1332 = vld [vmem:[%s861 + $0xc] sm:$0xf]
      %v1333 = vld [vmem:[%s861 + $0x10] sm:$0xf]
      %v1334 = vld [vmem:[%s861 + $0x14] sm:$0xf]
      %v1335 = vld [vmem:[%s861 + $0x18] sm:$0xf]
      %v1336 = vld [vmem:[%s861 + $0x1c] sm:$0xf]
      %v1337 = vld [vmem:[%s861 + $0x20] sm:$0xf]
      %v1338 = vld [vmem:[%s861 + $0x24] sm:$0xf]
      %v1339 = vld [vmem:[%s861 + $0x28] sm:$0xf]
      %v1340 = vld [vmem:[%s861 + $0x2c] sm:$0xf]
      %v1341 = vld [vmem:[%s861 + $0x30] sm:$0xf]
      %v1342 = vld [vmem:[%s861 + $0x34] sm:$0xf]
      %v1343 = vld [vmem:[%s861 + $0x38] sm:$0xf]
      %v1344 = vld [vmem:[%s861 + $0x3c] sm:$0xf]
      %v1345 = vld [vmem:[%s865] sm:$0x1]
      %v1347 = vlaneseq
      %v1348 = vshrl.u32 %v1347, 7
      %v1349 = vsub.s32 0, %v1348
      %v1350 = vrot.slane %v1345, %v1349
      %v1368 = vunpack.c.l.b16 %v1329
      %v1369 = vunpack.c.l.b16 %v1330
      %v1370 = vunpack.c.l.b16 %v1331
      %v1371 = vunpack.c.l.b16 %v1332
      %v1372 = vunpack.c.l.b16 %v1333
      %v1373 = vunpack.c.l.b16 %v1334
      %v1374 = vunpack.c.l.b16 %v1335
      %v1375 = vunpack.c.l.b16 %v1336
      %v1376 = vunpack.c.l.b16 %v1337
      %v1377 = vunpack.c.l.b16 %v1338
      %v1378 = vunpack.c.l.b16 %v1339
      %v1379 = vunpack.c.l.b16 %v1340
      %v1380 = vunpack.c.l.b16 %v1341
      %v1381 = vunpack.c.l.b16 %v1342
      %v1382 = vunpack.c.l.b16 %v1343
      %v1383 = vunpack.c.l.b16 %v1344
      %v1384 = vpack.c.b16 %v1369, %v1368
      %v1385 = vpack.c.b16 %v1371, %v1370
      %v1386 = vpack.c.b16 %v1373, %v1372
      %v1387 = vpack.c.b16 %v1375, %v1374
      %v1388 = vpack.c.b16 %v1377, %v1376
      %v1389 = vpack.c.b16 %v1379, %v1378
      %v1390 = vpack.c.b16 %v1381, %v1380
      %v1391 = vpack.c.b16 %v1383, %v1382
      %1400 = vmatprep.subr.bf16.mxu0 0
      %1401 = vmatpush1.bf16.msra.mxu0 %v1384
      %1402 = vmatprep.subr.bf16.mxu0 0
      %1403 = vmatpush1.bf16.msra.mxu0 %v1385
      %1404 = vmatprep.subr.bf16.mxu0 0
      %1405 = vmatpush1.bf16.msra.mxu0 %v1386
      %1406 = vmatprep.subr.bf16.mxu0 0
      %1407 = vmatpush1.bf16.msra.mxu0 %v1387
      %1408 = vmatprep.subr.bf16.mxu0 0
      %1409 = vmatpush1.bf16.msra.mxu0 %v1388
      %1410 = vmatprep.subr.bf16.mxu0 0
      %1411 = vmatpush1.bf16.msra.mxu0 %v1389
      %1412 = vmatprep.subr.bf16.mxu0 0
      %1413 = vmatpush1.bf16.msra.mxu0 %v1390
      %1414 = vmatprep.subr.bf16.mxu0 0
      %1415 = vmatpush1.bf16.msra.mxu0 %v1391
      %1416 = vmatprep.subr.bf16.mxu0 0
      %1417 = vmatpush1.bf16.msra.mxu0 0
      %1418 = vmatprep.subr.bf16.mxu0 0
      %1419 = vmatpush1.bf16.msra.mxu0 0
      %1420 = vmatprep.subr.bf16.mxu0 0
      %1421 = vmatpush1.bf16.msra.mxu0 0
      %1422 = vmatprep.subr.bf16.mxu0 0
      %1423 = vmatpush1.bf16.msra.mxu0 0
      %1424 = vmatprep.subr.bf16.mxu0 0
      %1425 = vmatpush1.bf16.msra.mxu0 0
      %1426 = vmatprep.subr.bf16.mxu0 0
      %1427 = vmatpush1.bf16.msra.mxu0 0
      %1428 = vmatprep.subr.bf16.mxu0 0
      %1429 = vmatpush1.bf16.msra.mxu0 0
      %1430 = vmatprep.subr.bf16.mxu0 0
      %1431 = vmatpush1.bf16.msra.mxu0 0
      %1432 = vmatprep.mubr.bf16.mxu0 0
      %1433 = vmatmul.mubr.bf16.gmra.mrb[0].mxu0 %v1328
      %v1434 = vpop.f32.mrb[0].mxu0
      %v1435 = vadd.f32 %v1350, %v1434
      %v1436 = vpop.f32.mrb[0].mxu0
      %v1437 = vpop.f32.mrb[0].mxu0
      %v1438 = vadd.f32 %v1350, %v1437
      %v1439 = vpop.f32.mrb[0].mxu0
      %1440 = vdwg.mxu0
      %v1441 = vld [vmem:[%s870] sm:$0xf]
      %v1442 = vld [vmem:[%s870 + $0x4] sm:$0xf]
      %v1443 = vld [vmem:[%s870 + $0x8] sm:$0xf]
      %v1444 = vld [vmem:[%s870 + $0xc] sm:$0xf]
      %v1445 = vld [vmem:[%s870 + $0x10] sm:$0xf]
      %v1446 = vld [vmem:[%s870 + $0x14] sm:$0xf]
      %v1447 = vld [vmem:[%s870 + $0x18] sm:$0xf]
      %v1448 = vld [vmem:[%s870 + $0x1c] sm:$0xf]
      %v1449 = vld [vmem:[%s870 + $0x20] sm:$0xf]
      %v1450 = vld [vmem:[%s870 + $0x24] sm:$0xf]
      %v1451 = vld [vmem:[%s870 + $0x28] sm:$0xf]
      %v1452 = vld [vmem:[%s870 + $0x2c] sm:$0xf]
      %v1453 = vld [vmem:[%s870 + $0x30] sm:$0xf]
      %v1454 = vld [vmem:[%s870 + $0x34] sm:$0xf]
      %v1455 = vld [vmem:[%s870 + $0x38] sm:$0xf]
      %v1456 = vld [vmem:[%s870 + $0x3c] sm:$0xf]
      %v1457 = vld [vmem:[%s874] sm:$0x1]
      %v1459 = vlaneseq
      %v1460 = vshrl.u32 %v1459, 7
      %v1461 = vsub.s32 0, %v1460
      %v1462 = vrot.slane %v1457, %v1461
      %v1480 = vunpack.c.l.b16 %v1441
      %v1481 = vunpack.c.l.b16 %v1442
      %v1482 = vunpack.c.l.b16 %v1443
      %v1483 = vunpack.c.l.b16 %v1444
      %v1484 = vunpack.c.l.b16 %v1445
      %v1485 = vunpack.c.l.b16 %v1446
      %v1486 = vunpack.c.l.b16 %v1447
      %v1487 = vunpack.c.l.b16 %v1448
      %v1488 = vunpack.c.l.b16 %v1449
      %v1489 = vunpack.c.l.b16 %v1450
      %v1490 = vunpack.c.l.b16 %v1451
      %v1491 = vunpack.c.l.b16 %v1452
      %v1492 = vunpack.c.l.b16 %v1453
      %v1493 = vunpack.c.l.b16 %v1454
      %v1494 = vunpack.c.l.b16 %v1455
      %v1495 = vunpack.c.l.b16 %v1456
      %v1496 = vpack.c.b16 %v1481, %v1480
      %v1497 = vpack.c.b16 %v1483, %v1482
      %v1498 = vpack.c.b16 %v1485, %v1484
      %v1499 = vpack.c.b16 %v1487, %v1486
      %v1500 = vpack.c.b16 %v1489, %v1488
      %v1501 = vpack.c.b16 %v1491, %v1490
      %v1502 = vpack.c.b16 %v1493, %v1492
      %v1503 = vpack.c.b16 %v1495, %v1494
      %1512 = vmatprep.subr.bf16.mxu0 0
      %1513 = vmatpush1.bf16.msra.mxu0 %v1496
      %1514 = vmatprep.subr.bf16.mxu0 0
      %1515 = vmatpush1.bf16.msra.mxu0 %v1497
      %1516 = vmatprep.subr.bf16.mxu0 0
      %1517 = vmatpush1.bf16.msra.mxu0 %v1498
      %1518 = vmatprep.subr.bf16.mxu0 0
      %1519 = vmatpush1.bf16.msra.mxu0 %v1499
      %1520 = vmatprep.subr.bf16.mxu0 0
      %1521 = vmatpush1.bf16.msra.mxu0 %v1500
      %1522 = vmatprep.subr.bf16.mxu0 0
      %1523 = vmatpush1.bf16.msra.mxu0 %v1501
      %1524 = vmatprep.subr.bf16.mxu0 0
      %1525 = vmatpush1.bf16.msra.mxu0 %v1502
      %1526 = vmatprep.subr.bf16.mxu0 0
      %1527 = vmatpush1.bf16.msra.mxu0 %v1503
      %1528 = vmatprep.subr.bf16.mxu0 0
      %1529 = vmatpush1.bf16.msra.mxu0 0
      %1530 = vmatprep.subr.bf16.mxu0 0
      %1531 = vmatpush1.bf16.msra.mxu0 0
      %1532 = vmatprep.subr.bf16.mxu0 0
      %1533 = vmatpush1.bf16.msra.mxu0 0
      %1534 = vmatprep.subr.bf16.mxu0 0
      %1535 = vmatpush1.bf16.msra.mxu0 0
      %1536 = vmatprep.subr.bf16.mxu0 0
      %1537 = vmatpush1.bf16.msra.mxu0 0
      %1538 = vmatprep.subr.bf16.mxu0 0
      %1539 = vmatpush1.bf16.msra.mxu0 0
      %1540 = vmatprep.subr.bf16.mxu0 0
      %1541 = vmatpush1.bf16.msra.mxu0 0
      %1542 = vmatprep.subr.bf16.mxu0 0
      %1543 = vmatpush1.bf16.msra.mxu0 0
      %1544 = vmatprep.mubr.bf16.mxu0 0
      %1545 = vmatmul.mubr.bf16.gmra.mrb[0].mxu0 %v1328
      %v1546 = vpop.f32.mrb[0].mxu0
      %v1547 = vadd.f32 %v1462, %v1546
      %v1548 = vpop.f32.mrb[0].mxu0
      %v1549 = vpop.f32.mrb[0].mxu0
      %v1550 = vadd.f32 %v1462, %v1549
      %v1551 = vpop.f32.mrb[0].mxu0
      %1552 = vdwg.mxu0
      %v1553 = vld [vmem:[%s879] sm:$0xf]
      %v1554 = vld [vmem:[%s879 + $0x4] sm:$0xf]
      %v1555 = vld [vmem:[%s879 + $0x8] sm:$0xf]
      %v1556 = vld [vmem:[%s879 + $0xc] sm:$0xf]
      %v1557 = vld [vmem:[%s879 + $0x10] sm:$0xf]
      %v1558 = vld [vmem:[%s879 + $0x14] sm:$0xf]
      %v1559 = vld [vmem:[%s879 + $0x18] sm:$0xf]
      %v1560 = vld [vmem:[%s879 + $0x1c] sm:$0xf]
      %v1561 = vld [vmem:[%s879 + $0x20] sm:$0xf]
      %v1562 = vld [vmem:[%s879 + $0x24] sm:$0xf]
      %v1563 = vld [vmem:[%s879 + $0x28] sm:$0xf]
      %v1564 = vld [vmem:[%s879 + $0x2c] sm:$0xf]
      %v1565 = vld [vmem:[%s879 + $0x30] sm:$0xf]
      %v1566 = vld [vmem:[%s879 + $0x34] sm:$0xf]
      %v1567 = vld [vmem:[%s879 + $0x38] sm:$0xf]
      %v1568 = vld [vmem:[%s879 + $0x3c] sm:$0xf]
      %v1569 = vld [vmem:[%s883] sm:$0x1]
      %v1571 = vlaneseq
      %v1572 = vshrl.u32 %v1571, 7
      %v1573 = vsub.s32 0, %v1572
      %v1574 = vrot.slane %v1569, %v1573
      %v1592 = vunpack.c.l.b16 %v1553
      %v1593 = vunpack.c.l.b16 %v1554
      %v1594 = vunpack.c.l.b16 %v1555
      %v1595 = vunpack.c.l.b16 %v1556
      %v1596 = vunpack.c.l.b16 %v1557
      %v1597 = vunpack.c.l.b16 %v1558
      %v1598 = vunpack.c.l.b16 %v1559
      %v1599 = vunpack.c.l.b16 %v1560
      %v1600 = vunpack.c.l.b16 %v1561
      %v1601 = vunpack.c.l.b16 %v1562
      %v1602 = vunpack.c.l.b16 %v1563
      %v1603 = vunpack.c.l.b16 %v1564
      %v1604 = vunpack.c.l.b16 %v1565
      %v1605 = vunpack.c.l.b16 %v1566
      %v1606 = vunpack.c.l.b16 %v1567
      %v1607 = vunpack.c.l.b16 %v1568
      %v1608 = vpack.c.b16 %v1593, %v1592
      %v1609 = vpack.c.b16 %v1595, %v1594
      %v1610 = vpack.c.b16 %v1597, %v1596
      %v1611 = vpack.c.b16 %v1599, %v1598
      %v1612 = vpack.c.b16 %v1601, %v1600
      %v1613 = vpack.c.b16 %v1603, %v1602
      %v1614 = vpack.c.b16 %v1605, %v1604
      %v1615 = vpack.c.b16 %v1607, %v1606
      %1624 = vmatprep.subr.bf16.mxu0 0
      %1625 = vmatpush1.bf16.msra.mxu0 %v1608
      %1626 = vmatprep.subr.bf16.mxu0 0
      %1627 = vmatpush1.bf16.msra.mxu0 %v1609
      %1628 = vmatprep.subr.bf16.mxu0 0
      %1629 = vmatpush1.bf16.msra.mxu0 %v1610
      %1630 = vmatprep.subr.bf16.mxu0 0
      %1631 = vmatpush1.bf16.msra.mxu0 %v1611
      %1632 = vmatprep.subr.bf16.mxu0 0
      %1633 = vmatpush1.bf16.msra.mxu0 %v1612
      %1634 = vmatprep.subr.bf16.mxu0 0
      %1635 = vmatpush1.bf16.msra.mxu0 %v1613
      %1636 = vmatprep.subr.bf16.mxu0 0
      %1637 = vmatpush1.bf16.msra.mxu0 %v1614
      %1638 = vmatprep.subr.bf16.mxu0 0
      %1639 = vmatpush1.bf16.msra.mxu0 %v1615
      %1640 = vmatprep.subr.bf16.mxu0 0
      %1641 = vmatpush1.bf16.msra.mxu0 0
      %1642 = vmatprep.subr.bf16.mxu0 0
      %1643 = vmatpush1.bf16.msra.mxu0 0
      %1644 = vmatprep.subr.bf16.mxu0 0
      %1645 = vmatpush1.bf16.msra.mxu0 0
      %1646 = vmatprep.subr.bf16.mxu0 0
      %1647 = vmatpush1.bf16.msra.mxu0 0
      %1648 = vmatprep.subr.bf16.mxu0 0
      %1649 = vmatpush1.bf16.msra.mxu0 0
      %1650 = vmatprep.subr.bf16.mxu0 0
      %1651 = vmatpush1.bf16.msra.mxu0 0
      %1652 = vmatprep.subr.bf16.mxu0 0
      %1653 = vmatpush1.bf16.msra.mxu0 0
      %1654 = vmatprep.subr.bf16.mxu0 0
      %1655 = vmatpush1.bf16.msra.mxu0 0
      %1656 = vmatprep.mubr.bf16.mxu0 0
      %1657 = vmatmul.mubr.bf16.gmra.mrb[0].mxu0 %v1328
      %v1658 = vpop.f32.mrb[0].mxu0
      %v1659 = vadd.f32 %v1574, %v1658
      %v1660 = vpop.f32.mrb[0].mxu0
      %v1661 = vpop.f32.mrb[0].mxu0
      %v1662 = vadd.f32 %v1574, %v1661
      %v1663 = vpop.f32.mrb[0].mxu0
      %1664 = vdwg.mxu0
      %v1665 = vpack.c.bf16 %v1438, %v1435
      %v1666 = vpack.c.bf16 %v1550, %v1547
      %v1667 = vpack.c.bf16 %v1662, %v1659
      %vm1668 = vcmask 261120
      %v1670 = vsel %vm1668, %v1665, 0
      %v1673 = vsel %vm1668, %v1666, 0
      %1675 = vmatprep.subr.bf16.mxu0 0
      %1676 = vmatpush1.bf16.xpose.msra.mxu0 %v1673
      %1677 = vmatprep.subr.bf16.mxu0 0
      %1678 = vmatpush1.bf16.xpose.msra.mxu0 0
      %1679 = vmatprep.subr.bf16.mxu0 0
      %1680 = vmatpush1.bf16.xpose.msra.mxu0 0
      %1681 = vmatprep.subr.bf16.mxu0 0
      %1682 = vmatpush1.bf16.xpose.msra.mxu0 0
      %1683 = vmatprep.subr.bf16.mxu0 0
      %1684 = vmatpush1.bf16.xpose.msra.mxu0 0
      %1685 = vmatprep.subr.bf16.mxu0 0
      %1686 = vmatpush1.bf16.xpose.msra.mxu0 0
      %1687 = vmatprep.subr.bf16.mxu0 0
      %1688 = vmatpush1.bf16.xpose.msra.mxu0 0
      %1689 = vmatprep.subr.bf16.mxu0 0
      %1690 = vmatpush1.bf16.xpose.msra.mxu0 0
      %1691 = vmatprep.subr.bf16.mxu0 0
      %1692 = vmatpush1.bf16.xpose.msra.mxu0 0
      %1693 = vmatprep.subr.bf16.mxu0 0
      %1694 = vmatpush1.bf16.xpose.msra.mxu0 0
      %1695 = vmatprep.subr.bf16.mxu0 0
      %1696 = vmatpush1.bf16.xpose.msra.mxu0 0
      %1697 = vmatprep.subr.bf16.mxu0 0
      %1698 = vmatpush1.bf16.xpose.msra.mxu0 0
      %1699 = vmatprep.subr.bf16.mxu0 0
      %1700 = vmatpush1.bf16.xpose.msra.mxu0 0
      %1701 = vmatprep.subr.bf16.mxu0 0
      %1702 = vmatpush1.bf16.xpose.msra.mxu0 0
      %1703 = vmatprep.subr.bf16.mxu0 0
      %1704 = vmatpush1.bf16.xpose.msra.mxu0 0
      %1705 = vmatprep.subr.bf16.mxu0 0
      %1706 = vmatpush1.bf16.xpose.msra.mxu0 0
      %1707 = vmatprep.mubr.bf16.mxu0 0
      %1708 = vmatmul.mubr.bf16.gmra.mrb[0].mxu0 %v1670
      %v1709 = vpop.f32.mrb[0].mxu0
      %v1710 = vadd.f32 0.0, %v1709
      %v1711 = vpop.f32.mrb[0].mxu0
      %v1712 = vpop.f32.mrb[0].mxu0
      %v1713 = vpop.f32.mrb[0].mxu0
      %1714 = vdwg.mxu0
      %vm1715 = vcmask 64512
      %v1716 = vsel %vm1715, %v1710, -inf
      %1717 = vmax.xlane.f32.xlu0 %v1716
      %v1718 = vpop.xlane.xlu0 %1717
      %v1719 = vsub.f32 %v1710, %v1718
      %v1720 = vmul.f32 %v1719, 1.442695
      %v1721 = vpow.pop %v1720
      %v1722 = vsel %vm1715, %v1721, 0.0
      %1723 = vadd.xlane.f32.xlu0 %v1722
      %v1724 = vpop.xlane.xlu0 %1723
      %v1725 = vrcp.pop %v1724
      %v1726 = vmul.f32 %v1721, %v1725
      %v1727 = vpack.c.bf16 %v1726, %v1726
      %v1729 = vsel %vm1715, %v1727, 0
      %vm1731 = vcmask 1043456
      %v1733 = vsel %vm1731, %v1667, 0
      %1735 = vmatprep.subr.bf16.mxu0 0
      %1736 = vmatpush1.bf16.msra.mxu0 %v1733
      %1737 = vmatprep.subr.bf16.mxu0 0
      %1738 = vmatpush1.bf16.msra.mxu0 0
      %1739 = vmatprep.subr.bf16.mxu0 0
      %1740 = vmatpush1.bf16.msra.mxu0 0
      %1741 = vmatprep.subr.bf16.mxu0 0
      %1742 = vmatpush1.bf16.msra.mxu0 0
      %1743 = vmatprep.subr.bf16.mxu0 0
      %1744 = vmatpush1.bf16.msra.mxu0 0
      %1745 = vmatprep.subr.bf16.mxu0 0
      %1746 = vmatpush1.bf16.msra.mxu0 0
      %1747 = vmatprep.subr.bf16.mxu0 0
      %1748 = vmatpush1.bf16.msra.mxu0 0
      %1749 = vmatprep.subr.bf16.mxu0 0
      %1750 = vmatpush1.bf16.msra.mxu0 0
      %1751 = vmatprep.subr.bf16.mxu0 0
      %1752 = vmatpush1.bf16.msra.mxu0 0
      %1753 = vmatprep.subr.bf16.mxu0 0
      %1754 = vmatpush1.bf16.msra.mxu0 0
      %1755 = vmatprep.subr.bf16.mxu0 0
      %1756 = vmatpush1.bf16.msra.mxu0 0
      %1757 = vmatprep.subr.bf16.mxu0 0
      %1758 = vmatpush1.bf16.msra.mxu0 0
      %1759 = vmatprep.subr.bf16.mxu0 0
      %1760 = vmatpush1.bf16.msra.mxu0 0
      %1761 = vmatprep.subr.bf16.mxu0 0
      %1762 = vmatpush1.bf16.msra.mxu0 0
      %1763 = vmatprep.subr.bf16.mxu0 0
      %1764 = vmatpush1.bf16.msra.mxu0 0
      %1765 = vmatprep.subr.bf16.mxu0 0
      %1766 = vmatpush1.bf16.msra.mxu0 0
      %1767 = vmatprep.mubr.bf16.mxu0 0
      %1768 = vmatmul.mubr.bf16.gmra.mrb[0].mxu0 %v1729
      %v1769 = vpop.f32.mrb[0].mxu0
      %v1770 = vadd.f32 0.0, %v1769
      %v1771 = vpop.f32.mrb[0].mxu0
      %v1772 = vpop.f32.mrb[0].mxu0
      %v1773 = vpop.f32.mrb[0].mxu0
      %1774 = vdwg.mxu0
      %v1776 = vrot.slane %v1665, 4
      %v1778 = vrot.slane %v1666, 4
      %v1780 = vsel %vm1668, %v1776, 0
      %v1783 = vsel %vm1668, %v1778, 0
      %1785 = vmatprep.subr.bf16.mxu0 0
      %1786 = vmatpush1.bf16.xpose.msra.mxu0 %v1783
      %1787 = vmatprep.subr.bf16.mxu0 0
      %1788 = vmatpush1.bf16.xpose.msra.mxu0 0
      %1789 = vmatprep.subr.bf16.mxu0 0
      %1790 = vmatpush1.bf16.xpose.msra.mxu0 0
      %1791 = vmatprep.subr.bf16.mxu0 0
      %1792 = vmatpush1.bf16.xpose.msra.mxu0 0
      %1793 = vmatprep.subr.bf16.mxu0 0
      %1794 = vmatpush1.bf16.xpose.msra.mxu0 0
      %1795 = vmatprep.subr.bf16.mxu0 0
      %1796 = vmatpush1.bf16.xpose.msra.mxu0 0
      %1797 = vmatprep.subr.bf16.mxu0 0
      %1798 = vmatpush1.bf16.xpose.msra.mxu0 0
      %1799 = vmatprep.subr.bf16.mxu0 0
      %1800 = vmatpush1.bf16.xpose.msra.mxu0 0
      %1801 = vmatprep.subr.bf16.mxu0 0
      %1802 = vmatpush1.bf16.xpose.msra.mxu0 0
      %1803 = vmatprep.subr.bf16.mxu0 0
      %1804 = vmatpush1.bf16.xpose.msra.mxu0 0
      %1805 = vmatprep.subr.bf16.mxu0 0
      %1806 = vmatpush1.bf16.xpose.msra.mxu0 0
      %1807 = vmatprep.subr.bf16.mxu0 0
      %1808 = vmatpush1.bf16.xpose.msra.mxu0 0
      %1809 = vmatprep.subr.bf16.mxu0 0
      %1810 = vmatpush1.bf16.xpose.msra.mxu0 0
      %1811 = vmatprep.subr.bf16.mxu0 0
      %1812 = vmatpush1.bf16.xpose.msra.mxu0 0
      %1813 = vmatprep.subr.bf16.mxu0 0
      %1814 = vmatpush1.bf16.xpose.msra.mxu0 0
      %1815 = vmatprep.subr.bf16.mxu0 0
      %1816 = vmatpush1.bf16.xpose.msra.mxu0 0
      %1817 = vmatprep.mubr.bf16.mxu0 0
      %1818 = vmatmul.mubr.bf16.gmra.mrb[0].mxu0 %v1780
      %v1819 = vpop.f32.mrb[0].mxu0
      %v1820 = vadd.f32 0.0, %v1819
      %v1821 = vpop.f32.mrb[0].mxu0
      %v1822 = vpop.f32.mrb[0].mxu0
      %v1823 = vpop.f32.mrb[0].mxu0
      %1824 = vdwg.mxu0
      %v1825 = vsel %vm1715, %v1820, -inf
      %1826 = vmax.xlane.f32.xlu0 %v1825
      %v1827 = vpop.xlane.xlu0 %1826
      %v1828 = vsub.f32 %v1820, %v1827
      %v1829 = vmul.f32 %v1828, 1.442695
      %v1830 = vpow.pop %v1829
      %v1831 = vsel %vm1715, %v1830, 0.0
      %1832 = vadd.xlane.f32.xlu0 %v1831
      %v1833 = vpop.xlane.xlu0 %1832
      %v1834 = vrcp.pop %v1833
      %v1835 = vmul.f32 %v1830, %v1834
      %v1836 = vpack.c.bf16 %v1835, %v1835
      %v1838 = vrot.slane %v1667, 4
      %v1840 = vsel %vm1715, %v1836, 0
      %v1843 = vsel %vm1731, %v1838, 0
      %1845 = vmatprep.subr.bf16.mxu0 0
      %1846 = vmatpush1.bf16.msra.mxu0 %v1843
      %1847 = vmatprep.subr.bf16.mxu0 0
      %1848 = vmatpush1.bf16.msra.mxu0 0
      %1849 = vmatprep.subr.bf16.mxu0 0
      %1850 = vmatpush1.bf16.msra.mxu0 0
      %1851 = vmatprep.subr.bf16.mxu0 0
      %1852 = vmatpush1.bf16.msra.mxu0 0
      %1853 = vmatprep.subr.bf16.mxu0 0
      %1854 = vmatpush1.bf16.msra.mxu0 0
      %1855 = vmatprep.subr.bf16.mxu0 0
      %1856 = vmatpush1.bf16.msra.mxu0 0
      %1857 = vmatprep.subr.bf16.mxu0 0
      %1858 = vmatpush1.bf16.msra.mxu0 0
      %1859 = vmatprep.subr.bf16.mxu0 0
      %1860 = vmatpush1.bf16.msra.mxu0 0
      %1861 = vmatprep.subr.bf16.mxu0 0
      %1862 = vmatpush1.bf16.msra.mxu0 0
      %1863 = vmatprep.subr.bf16.mxu0 0
      %1864 = vmatpush1.bf16.msra.mxu0 0
      %1865 = vmatprep.subr.bf16.mxu0 0
      %1866 = vmatpush1.bf16.msra.mxu0 0
      %1867 = vmatprep.subr.bf16.mxu0 0
      %1868 = vmatpush1.bf16.msra.mxu0 0
      %1869 = vmatprep.subr.bf16.mxu0 0
      %1870 = vmatpush1.bf16.msra.mxu0 0
      %1871 = vmatprep.subr.bf16.mxu0 0
      %1872 = vmatpush1.bf16.msra.mxu0 0
      %1873 = vmatprep.subr.bf16.mxu0 0
      %1874 = vmatpush1.bf16.msra.mxu0 0
      %1875 = vmatprep.subr.bf16.mxu0 0
      %1876 = vmatpush1.bf16.msra.mxu0 0
      %1877 = vmatprep.mubr.bf16.mxu0 0
      %1878 = vmatmul.mubr.bf16.gmra.mrb[0].mxu0 %v1840
      %v1879 = vpop.f32.mrb[0].mxu0
      %v1880 = vadd.f32 0.0, %v1879
      %v1881 = vpop.f32.mrb[0].mxu0
      %v1882 = vpop.f32.mrb[0].mxu0
      %v1883 = vpop.f32.mrb[0].mxu0
      %1884 = vdwg.mxu0
      %v1885 = vpack.c.bf16 %v1880, %v1770
      %v1886 = vld [vmem:[%s888] sm:$0xf]
      %v1887 = vld [vmem:[%s888 + $0x4] sm:$0xf]
      %v1888 = vld [vmem:[%s888 + $0x8] sm:$0xf]
      %v1889 = vld [vmem:[%s888 + $0xc] sm:$0xf]
      %s1890 = scalar_lea.vmem %s861, 64
      %v1891 = vld [vmem:[%s1890] sm:$0xf]
      %v1892 = vld [vmem:[%s1890 + $0x4] sm:$0xf]
      %v1893 = vld [vmem:[%s1890 + $0x8] sm:$0xf]
      %v1894 = vld [vmem:[%s1890 + $0xc] sm:$0xf]
      %v1895 = vld [vmem:[%s1890 + $0x10] sm:$0xf]
      %v1896 = vld [vmem:[%s1890 + $0x14] sm:$0xf]
      %v1897 = vld [vmem:[%s1890 + $0x18] sm:$0xf]
      %v1898 = vld [vmem:[%s1890 + $0x1c] sm:$0xf]
      %v1899 = vld [vmem:[%s1890 + $0x20] sm:$0xf]
      %v1900 = vld [vmem:[%s1890 + $0x24] sm:$0xf]
      %v1901 = vld [vmem:[%s1890 + $0x28] sm:$0xf]
      %v1902 = vld [vmem:[%s1890 + $0x2c] sm:$0xf]
      %v1903 = vld [vmem:[%s1890 + $0x30] sm:$0xf]
      %v1904 = vld [vmem:[%s1890 + $0x34] sm:$0xf]
      %v1905 = vld [vmem:[%s1890 + $0x38] sm:$0xf]
      %v1906 = vld [vmem:[%s1890 + $0x3c] sm:$0xf]
      %s1907 = scalar_lea.vmem %s865, 1
      %v1908 = vld [vmem:[%s1907] sm:$0x1]
      %v1910 = vlaneseq
      %v1911 = vshrl.u32 %v1910, 7
      %v1912 = vsub.s32 0, %v1911
      %v1913 = vrot.slane %v1908, %v1912
      %v1931 = vunpack.c.l.b16 %v1891
      %v1932 = vunpack.c.l.b16 %v1892
      %v1933 = vunpack.c.l.b16 %v1893
      %v1934 = vunpack.c.l.b16 %v1894
      %v1935 = vunpack.c.l.b16 %v1895
      %v1936 = vunpack.c.l.b16 %v1896
      %v1937 = vunpack.c.l.b16 %v1897
      %v1938 = vunpack.c.l.b16 %v1898
      %v1939 = vunpack.c.l.b16 %v1899
      %v1940 = vunpack.c.l.b16 %v1900
      %v1941 = vunpack.c.l.b16 %v1901
      %v1942 = vunpack.c.l.b16 %v1902
      %v1943 = vunpack.c.l.b16 %v1903
      %v1944 = vunpack.c.l.b16 %v1904
      %v1945 = vunpack.c.l.b16 %v1905
      %v1946 = vunpack.c.l.b16 %v1906
      %v1947 = vpack.c.b16 %v1932, %v1931
      %v1948 = vpack.c.b16 %v1934, %v1933
      %v1949 = vpack.c.b16 %v1936, %v1935
      %v1950 = vpack.c.b16 %v1938, %v1937
      %v1951 = vpack.c.b16 %v1940, %v1939
      %v1952 = vpack.c.b16 %v1942, %v1941
      %v1953 = vpack.c.b16 %v1944, %v1943
      %v1954 = vpack.c.b16 %v1946, %v1945
      %1963 = vmatprep.subr.bf16.mxu0 0
      %1964 = vmatpush1.bf16.msra.mxu0 %v1947
      %1965 = vmatprep.subr.bf16.mxu0 0
      %1966 = vmatpush1.bf16.msra.mxu0 %v1948
      %1967 = vmatprep.subr.bf16.mxu0 0
      %1968 = vmatpush1.bf16.msra.mxu0 %v1949
      %1969 = vmatprep.subr.bf16.mxu0 0
      %1970 = vmatpush1.bf16.msra.mxu0 %v1950
      %1971 = vmatprep.subr.bf16.mxu0 0
      %1972 = vmatpush1.bf16.msra.mxu0 %v1951
      %1973 = vmatprep.subr.bf16.mxu0 0
      %1974 = vmatpush1.bf16.msra.mxu0 %v1952
      %1975 = vmatprep.subr.bf16.mxu0 0
      %1976 = vmatpush1.bf16.msra.mxu0 %v1953
      %1977 = vmatprep.subr.bf16.mxu0 0
      %1978 = vmatpush1.bf16.msra.mxu0 %v1954
      %1979 = vmatprep.subr.bf16.mxu0 0
      %1980 = vmatpush1.bf16.msra.mxu0 0
      %1981 = vmatprep.subr.bf16.mxu0 0
      %1982 = vmatpush1.bf16.msra.mxu0 0
      %1983 = vmatprep.subr.bf16.mxu0 0
      %1984 = vmatpush1.bf16.msra.mxu0 0
      %1985 = vmatprep.subr.bf16.mxu0 0
      %1986 = vmatpush1.bf16.msra.mxu0 0
      %1987 = vmatprep.subr.bf16.mxu0 0
      %1988 = vmatpush1.bf16.msra.mxu0 0
      %1989 = vmatprep.subr.bf16.mxu0 0
      %1990 = vmatpush1.bf16.msra.mxu0 0
      %1991 = vmatprep.subr.bf16.mxu0 0
      %1992 = vmatpush1.bf16.msra.mxu0 0
      %1993 = vmatprep.subr.bf16.mxu0 0
      %1994 = vmatpush1.bf16.msra.mxu0 0
      %1995 = vmatprep.mubr.bf16.mxu0 0
      %1996 = vmatmul.mubr.bf16.gmra.mrb[0].mxu0 %v1328
      %v1997 = vpop.f32.mrb[0].mxu0
      %v1998 = vadd.f32 %v1913, %v1997
      %v1999 = vpop.f32.mrb[0].mxu0
      %v2000 = vpop.f32.mrb[0].mxu0
      %v2001 = vadd.f32 %v1913, %v2000
      %v2002 = vpop.f32.mrb[0].mxu0
      %2003 = vdwg.mxu0
      %s2004 = scalar_lea.vmem %s870, 64
      %v2005 = vld [vmem:[%s2004] sm:$0xf]
      %v2006 = vld [vmem:[%s2004 + $0x4] sm:$0xf]
      %v2007 = vld [vmem:[%s2004 + $0x8] sm:$0xf]
      %v2008 = vld [vmem:[%s2004 + $0xc] sm:$0xf]
      %v2009 = vld [vmem:[%s2004 + $0x10] sm:$0xf]
      %v2010 = vld [vmem:[%s2004 + $0x14] sm:$0xf]
      %v2011 = vld [vmem:[%s2004 + $0x18] sm:$0xf]
      %v2012 = vld [vmem:[%s2004 + $0x1c] sm:$0xf]
      %v2013 = vld [vmem:[%s2004 + $0x20] sm:$0xf]
      %v2014 = vld [vmem:[%s2004 + $0x24] sm:$0xf]
      %v2015 = vld [vmem:[%s2004 + $0x28] sm:$0xf]
      %v2016 = vld [vmem:[%s2004 + $0x2c] sm:$0xf]
      %v2017 = vld [vmem:[%s2004 + $0x30] sm:$0xf]
      %v2018 = vld [vmem:[%s2004 + $0x34] sm:$0xf]
      %v2019 = vld [vmem:[%s2004 + $0x38] sm:$0xf]
      %v2020 = vld [vmem:[%s2004 + $0x3c] sm:$0xf]
      %s2021 = scalar_lea.vmem %s874, 1
      %v2022 = vld [vmem:[%s2021] sm:$0x1]
      %v2024 = vlaneseq
      %v2025 = vshrl.u32 %v2024, 7
      %v2026 = vsub.s32 0, %v2025
      %v2027 = vrot.slane %v2022, %v2026
      %v2045 = vunpack.c.l.b16 %v2005
      %v2046 = vunpack.c.l.b16 %v2006
      %v2047 = vunpack.c.l.b16 %v2007
      %v2048 = vunpack.c.l.b16 %v2008
      %v2049 = vunpack.c.l.b16 %v2009
      %v2050 = vunpack.c.l.b16 %v2010
      %v2051 = vunpack.c.l.b16 %v2011
      %v2052 = vunpack.c.l.b16 %v2012
      %v2053 = vunpack.c.l.b16 %v2013
      %v2054 = vunpack.c.l.b16 %v2014
      %v2055 = vunpack.c.l.b16 %v2015
      %v2056 = vunpack.c.l.b16 %v2016
      %v2057 = vunpack.c.l.b16 %v2017
      %v2058 = vunpack.c.l.b16 %v2018
      %v2059 = vunpack.c.l.b16 %v2019
      %v2060 = vunpack.c.l.b16 %v2020
      %v2061 = vpack.c.b16 %v2046, %v2045
      %v2062 = vpack.c.b16 %v2048, %v2047
      %v2063 = vpack.c.b16 %v2050, %v2049
      %v2064 = vpack.c.b16 %v2052, %v2051
      %v2065 = vpack.c.b16 %v2054, %v2053
      %v2066 = vpack.c.b16 %v2056, %v2055
      %v2067 = vpack.c.b16 %v2058, %v2057
      %v2068 = vpack.c.b16 %v2060, %v2059
      %2077 = vmatprep.subr.bf16.mxu0 0
      %2078 = vmatpush1.bf16.msra.mxu0 %v2061
      %2079 = vmatprep.subr.bf16.mxu0 0
      %2080 = vmatpush1.bf16.msra.mxu0 %v2062
      %2081 = vmatprep.subr.bf16.mxu0 0
      %2082 = vmatpush1.bf16.msra.mxu0 %v2063
      %2083 = vmatprep.subr.bf16.mxu0 0
      %2084 = vmatpush1.bf16.msra.mxu0 %v2064
      %2085 = vmatprep.subr.bf16.mxu0 0
      %2086 = vmatpush1.bf16.msra.mxu0 %v2065
      %2087 = vmatprep.subr.bf16.mxu0 0
      %2088 = vmatpush1.bf16.msra.mxu0 %v2066
      %2089 = vmatprep.subr.bf16.mxu0 0
      %2090 = vmatpush1.bf16.msra.mxu0 %v2067
      %2091 = vmatprep.subr.bf16.mxu0 0
      %2092 = vmatpush1.bf16.msra.mxu0 %v2068
      %2093 = vmatprep.subr.bf16.mxu0 0
      %2094 = vmatpush1.bf16.msra.mxu0 0
      %2095 = vmatprep.subr.bf16.mxu0 0
      %2096 = vmatpush1.bf16.msra.mxu0 0
      %2097 = vmatprep.subr.bf16.mxu0 0
      %2098 = vmatpush1.bf16.msra.mxu0 0
      %2099 = vmatprep.subr.bf16.mxu0 0
      %2100 = vmatpush1.bf16.msra.mxu0 0
      %2101 = vmatprep.subr.bf16.mxu0 0
      %2102 = vmatpush1.bf16.msra.mxu0 0
      %2103 = vmatprep.subr.bf16.mxu0 0
      %2104 = vmatpush1.bf16.msra.mxu0 0
      %2105 = vmatprep.subr.bf16.mxu0 0
      %2106 = vmatpush1.bf16.msra.mxu0 0
      %2107 = vmatprep.subr.bf16.mxu0 0
      %2108 = vmatpush1.bf16.msra.mxu0 0
      %2109 = vmatprep.mubr.bf16.mxu0 0
      %2110 = vmatmul.mubr.bf16.gmra.mrb[0].mxu0 %v1328
      %v2111 = vpop.f32.mrb[0].mxu0
      %v2112 = vadd.f32 %v2027, %v2111
      %v2113 = vpop.f32.mrb[0].mxu0
      %v2114 = vpop.f32.mrb[0].mxu0
      %v2115 = vadd.f32 %v2027, %v2114
      %v2116 = vpop.f32.mrb[0].mxu0
      %2117 = vdwg.mxu0
      %s2118 = scalar_lea.vmem %s879, 64
      %v2119 = vld [vmem:[%s2118] sm:$0xf]
      %v2120 = vld [vmem:[%s2118 + $0x4] sm:$0xf]
      %v2121 = vld [vmem:[%s2118 + $0x8] sm:$0xf]
      %v2122 = vld [vmem:[%s2118 + $0xc] sm:$0xf]
      %v2123 = vld [vmem:[%s2118 + $0x10] sm:$0xf]
      %v2124 = vld [vmem:[%s2118 + $0x14] sm:$0xf]
      %v2125 = vld [vmem:[%s2118 + $0x18] sm:$0xf]
      %v2126 = vld [vmem:[%s2118 + $0x1c] sm:$0xf]
      %v2127 = vld [vmem:[%s2118 + $0x20] sm:$0xf]
      %v2128 = vld [vmem:[%s2118 + $0x24] sm:$0xf]
      %v2129 = vld [vmem:[%s2118 + $0x28] sm:$0xf]
      %v2130 = vld [vmem:[%s2118 + $0x2c] sm:$0xf]
      %v2131 = vld [vmem:[%s2118 + $0x30] sm:$0xf]
      %v2132 = vld [vmem:[%s2118 + $0x34] sm:$0xf]
      %v2133 = vld [vmem:[%s2118 + $0x38] sm:$0xf]
      %v2134 = vld [vmem:[%s2118 + $0x3c] sm:$0xf]
      %s2135 = scalar_lea.vmem %s883, 1
      %v2136 = vld [vmem:[%s2135] sm:$0x1]
      %v2138 = vlaneseq
      %v2139 = vshrl.u32 %v2138, 7
      %v2140 = vsub.s32 0, %v2139
      %v2141 = vrot.slane %v2136, %v2140
      %v2159 = vunpack.c.l.b16 %v2119
      %v2160 = vunpack.c.l.b16 %v2120
      %v2161 = vunpack.c.l.b16 %v2121
      %v2162 = vunpack.c.l.b16 %v2122
      %v2163 = vunpack.c.l.b16 %v2123
      %v2164 = vunpack.c.l.b16 %v2124
      %v2165 = vunpack.c.l.b16 %v2125
      %v2166 = vunpack.c.l.b16 %v2126
      %v2167 = vunpack.c.l.b16 %v2127
      %v2168 = vunpack.c.l.b16 %v2128
      %v2169 = vunpack.c.l.b16 %v2129
      %v2170 = vunpack.c.l.b16 %v2130
      %v2171 = vunpack.c.l.b16 %v2131
      %v2172 = vunpack.c.l.b16 %v2132
      %v2173 = vunpack.c.l.b16 %v2133
      %v2174 = vunpack.c.l.b16 %v2134
      %v2175 = vpack.c.b16 %v2160, %v2159
      %v2176 = vpack.c.b16 %v2162, %v2161
      %v2177 = vpack.c.b16 %v2164, %v2163
      %v2178 = vpack.c.b16 %v2166, %v2165
      %v2179 = vpack.c.b16 %v2168, %v2167
      %v2180 = vpack.c.b16 %v2170, %v2169
      %v2181 = vpack.c.b16 %v2172, %v2171
      %v2182 = vpack.c.b16 %v2174, %v2173
      %2191 = vmatprep.subr.bf16.mxu0 0
      %2192 = vmatpush1.bf16.msra.mxu0 %v2175
      %2193 = vmatprep.subr.bf16.mxu0 0
      %2194 = vmatpush1.bf16.msra.mxu0 %v2176
      %2195 = vmatprep.subr.bf16.mxu0 0
      %2196 = vmatpush1.bf16.msra.mxu0 %v2177
      %2197 = vmatprep.subr.bf16.mxu0 0
      %2198 = vmatpush1.bf16.msra.mxu0 %v2178
      %2199 = vmatprep.subr.bf16.mxu0 0
      %2200 = vmatpush1.bf16.msra.mxu0 %v2179
      %2201 = vmatprep.subr.bf16.mxu0 0
      %2202 = vmatpush1.bf16.msra.mxu0 %v2180
      %2203 = vmatprep.subr.bf16.mxu0 0
      %2204 = vmatpush1.bf16.msra.mxu0 %v2181
      %2205 = vmatprep.subr.bf16.mxu0 0
      %2206 = vmatpush1.bf16.msra.mxu0 %v2182
      %2207 = vmatprep.subr.bf16.mxu0 0
      %2208 = vmatpush1.bf16.msra.mxu0 0
      %2209 = vmatprep.subr.bf16.mxu0 0
      %2210 = vmatpush1.bf16.msra.mxu0 0
      %2211 = vmatprep.subr.bf16.mxu0 0
      %2212 = vmatpush1.bf16.msra.mxu0 0
      %2213 = vmatprep.subr.bf16.mxu0 0
      %2214 = vmatpush1.bf16.msra.mxu0 0
      %2215 = vmatprep.subr.bf16.mxu0 0
      %2216 = vmatpush1.bf16.msra.mxu0 0
      %2217 = vmatprep.subr.bf16.mxu0 0
      %2218 = vmatpush1.bf16.msra.mxu0 0
      %2219 = vmatprep.subr.bf16.mxu0 0
      %2220 = vmatpush1.bf16.msra.mxu0 0
      %2221 = vmatprep.subr.bf16.mxu0 0
      %2222 = vmatpush1.bf16.msra.mxu0 0
      %2223 = vmatprep.mubr.bf16.mxu0 0
      %2224 = vmatmul.mubr.bf16.gmra.mrb[0].mxu0 %v1328
      %v2225 = vpop.f32.mrb[0].mxu0
      %v2226 = vadd.f32 %v2141, %v2225
      %v2227 = vpop.f32.mrb[0].mxu0
      %v2228 = vpop.f32.mrb[0].mxu0
      %v2229 = vadd.f32 %v2141, %v2228
      %v2230 = vpop.f32.mrb[0].mxu0
      %2231 = vdwg.mxu0
      %v2232 = vpack.c.bf16 %v2001, %v1998
      %v2233 = vpack.c.bf16 %v2115, %v2112
      %v2234 = vpack.c.bf16 %v2229, %v2226
      %v2236 = vsel %vm1668, %v2232, 0
      %v2239 = vsel %vm1668, %v2233, 0
      %2241 = vmatprep.subr.bf16.mxu0 0
      %2242 = vmatpush1.bf16.xpose.msra.mxu0 %v2239
      %2243 = vmatprep.subr.bf16.mxu0 0
      %2244 = vmatpush1.bf16.xpose.msra.mxu0 0
      %2245 = vmatprep.subr.bf16.mxu0 0
      %2246 = vmatpush1.bf16.xpose.msra.mxu0 0
      %2247 = vmatprep.subr.bf16.mxu0 0
      %2248 = vmatpush1.bf16.xpose.msra.mxu0 0
      %2249 = vmatprep.subr.bf16.mxu0 0
      %2250 = vmatpush1.bf16.xpose.msra.mxu0 0
      %2251 = vmatprep.subr.bf16.mxu0 0
      %2252 = vmatpush1.bf16.xpose.msra.mxu0 0
      %2253 = vmatprep.subr.bf16.mxu0 0
      %2254 = vmatpush1.bf16.xpose.msra.mxu0 0
      %2255 = vmatprep.subr.bf16.mxu0 0
      %2256 = vmatpush1.bf16.xpose.msra.mxu0 0
      %2257 = vmatprep.subr.bf16.mxu0 0
      %2258 = vmatpush1.bf16.xpose.msra.mxu0 0
      %2259 = vmatprep.subr.bf16.mxu0 0
      %2260 = vmatpush1.bf16.xpose.msra.mxu0 0
      %2261 = vmatprep.subr.bf16.mxu0 0
      %2262 = vmatpush1.bf16.xpose.msra.mxu0 0
      %2263 = vmatprep.subr.bf16.mxu0 0
      %2264 = vmatpush1.bf16.xpose.msra.mxu0 0
      %2265 = vmatprep.subr.bf16.mxu0 0
      %2266 = vmatpush1.bf16.xpose.msra.mxu0 0
      %2267 = vmatprep.subr.bf16.mxu0 0
      %2268 = vmatpush1.bf16.xpose.msra.mxu0 0
      %2269 = vmatprep.subr.bf16.mxu0 0
      %2270 = vmatpush1.bf16.xpose.msra.mxu0 0
      %2271 = vmatprep.subr.bf16.mxu0 0
      %2272 = vmatpush1.bf16.xpose.msra.mxu0 0
      %2273 = vmatprep.mubr.bf16.mxu0 0
      %2274 = vmatmul.mubr.bf16.gmra.mrb[0].mxu0 %v2236
      %v2275 = vpop.f32.mrb[0].mxu0
      %v2276 = vadd.f32 0.0, %v2275
      %v2277 = vpop.f32.mrb[0].mxu0
      %v2278 = vpop.f32.mrb[0].mxu0
      %v2279 = vpop.f32.mrb[0].mxu0
      %2280 = vdwg.mxu0
      %v2281 = vsel %vm1715, %v2276, -inf
      %2282 = vmax.xlane.f32.xlu0 %v2281
      %v2283 = vpop.xlane.xlu0 %2282
      %v2284 = vsub.f32 %v2276, %v2283
      %v2285 = vmul.f32 %v2284, 1.442695
      %v2286 = vpow.pop %v2285
      %v2287 = vsel %vm1715, %v2286, 0.0
      %2288 = vadd.xlane.f32.xlu0 %v2287
      %v2289 = vpop.xlane.xlu0 %2288
      %v2290 = vrcp.pop %v2289
      %v2291 = vmul.f32 %v2286, %v2290
      %v2292 = vpack.c.bf16 %v2291, %v2291
      %v2294 = vsel %vm1715, %v2292, 0
      %v2297 = vsel %vm1731, %v2234, 0
      %2299 = vmatprep.subr.bf16.mxu0 0
      %2300 = vmatpush1.bf16.msra.mxu0 %v2297
      %2301 = vmatprep.subr.bf16.mxu0 0
      %2302 = vmatpush1.bf16.msra.mxu0 0
      %2303 = vmatprep.subr.bf16.mxu0 0
      %2304 = vmatpush1.bf16.msra.mxu0 0
      %2305 = vmatprep.subr.bf16.mxu0 0
      %2306 = vmatpush1.bf16.msra.mxu0 0
      %2307 = vmatprep.subr.bf16.mxu0 0
      %2308 = vmatpush1.bf16.msra.mxu0 0
      %2309 = vmatprep.subr.bf16.mxu0 0
      %2310 = vmatpush1.bf16.msra.mxu0 0
      %2311 = vmatprep.subr.bf16.mxu0 0
      %2312 = vmatpush1.bf16.msra.mxu0 0
      %2313 = vmatprep.subr.bf16.mxu0 0
      %2314 = vmatpush1.bf16.msra.mxu0 0
      %2315 = vmatprep.subr.bf16.mxu0 0
      %2316 = vmatpush1.bf16.msra.mxu0 0
      %2317 = vmatprep.subr.bf16.mxu0 0
      %2318 = vmatpush1.bf16.msra.mxu0 0
      %2319 = vmatprep.subr.bf16.mxu0 0
      %2320 = vmatpush1.bf16.msra.mxu0 0
      %2321 = vmatprep.subr.bf16.mxu0 0
      %2322 = vmatpush1.bf16.msra.mxu0 0
      %2323 = vmatprep.subr.bf16.mxu0 0
      %2324 = vmatpush1.bf16.msra.mxu0 0
      %2325 = vmatprep.subr.bf16.mxu0 0
      %2326 = vmatpush1.bf16.msra.mxu0 0
      %2327 = vmatprep.subr.bf16.mxu0 0
      %2328 = vmatpush1.bf16.msra.mxu0 0
      %2329 = vmatprep.subr.bf16.mxu0 0
      %2330 = vmatpush1.bf16.msra.mxu0 0
      %2331 = vmatprep.mubr.bf16.mxu0 0
      %2332 = vmatmul.mubr.bf16.gmra.mrb[0].mxu0 %v2294
      %v2333 = vpop.f32.mrb[0].mxu0
      %v2334 = vadd.f32 0.0, %v2333
      %v2335 = vpop.f32.mrb[0].mxu0
      %v2336 = vpop.f32.mrb[0].mxu0
      %v2337 = vpop.f32.mrb[0].mxu0
      %2338 = vdwg.mxu0
      %v2340 = vrot.slane %v2232, 4
      %v2342 = vrot.slane %v2233, 4
      %v2344 = vsel %vm1668, %v2340, 0
      %v2347 = vsel %vm1668, %v2342, 0
      %2349 = vmatprep.subr.bf16.mxu0 0
      %2350 = vmatpush1.bf16.xpose.msra.mxu0 %v2347
      %2351 = vmatprep.subr.bf16.mxu0 0
      %2352 = vmatpush1.bf16.xpose.msra.mxu0 0
      %2353 = vmatprep.subr.bf16.mxu0 0
      %2354 = vmatpush1.bf16.xpose.msra.mxu0 0
      %2355 = vmatprep.subr.bf16.mxu0 0
      %2356 = vmatpush1.bf16.xpose.msra.mxu0 0
      %2357 = vmatprep.subr.bf16.mxu0 0
      %2358 = vmatpush1.bf16.xpose.msra.mxu0 0
      %2359 = vmatprep.subr.bf16.mxu0 0
      %2360 = vmatpush1.bf16.xpose.msra.mxu0 0
      %2361 = vmatprep.subr.bf16.mxu0 0
      %2362 = vmatpush1.bf16.xpose.msra.mxu0 0
      %2363 = vmatprep.subr.bf16.mxu0 0
      %2364 = vmatpush1.bf16.xpose.msra.mxu0 0
      %2365 = vmatprep.subr.bf16.mxu0 0
      %2366 = vmatpush1.bf16.xpose.msra.mxu0 0
      %2367 = vmatprep.subr.bf16.mxu0 0
      %2368 = vmatpush1.bf16.xpose.msra.mxu0 0
      %2369 = vmatprep.subr.bf16.mxu0 0
      %2370 = vmatpush1.bf16.xpose.msra.mxu0 0
      %2371 = vmatprep.subr.bf16.mxu0 0
      %2372 = vmatpush1.bf16.xpose.msra.mxu0 0
      %2373 = vmatprep.subr.bf16.mxu0 0
      %2374 = vmatpush1.bf16.xpose.msra.mxu0 0
      %2375 = vmatprep.subr.bf16.mxu0 0
      %2376 = vmatpush1.bf16.xpose.msra.mxu0 0
      %2377 = vmatprep.subr.bf16.mxu0 0
      %2378 = vmatpush1.bf16.xpose.msra.mxu0 0
      %2379 = vmatprep.subr.bf16.mxu0 0
      %2380 = vmatpush1.bf16.xpose.msra.mxu0 0
      %2381 = vmatprep.mubr.bf16.mxu0 0
      %2382 = vmatmul.mubr.bf16.gmra.mrb[0].mxu0 %v2344
      %v2383 = vpop.f32.mrb[0].mxu0
      %v2384 = vadd.f32 0.0, %v2383
      %v2385 = vpop.f32.mrb[0].mxu0
      %v2386 = vpop.f32.mrb[0].mxu0
      %v2387 = vpop.f32.mrb[0].mxu0
      %2388 = vdwg.mxu0
      %v2389 = vsel %vm1715, %v2384, -inf
      %2390 = vmax.xlane.f32.xlu0 %v2389
      %v2391 = vpop.xlane.xlu0 %2390
      %v2392 = vsub.f32 %v2384, %v2391
      %v2393 = vmul.f32 %v2392, 1.442695
      %v2394 = vpow.pop %v2393
      %v2395 = vsel %vm1715, %v2394, 0.0
      %2396 = vadd.xlane.f32.xlu0 %v2395
      %v2397 = vpop.xlane.xlu0 %2396
      %v2398 = vrcp.pop %v2397
      %v2399 = vmul.f32 %v2394, %v2398
      %v2400 = vpack.c.bf16 %v2399, %v2399
      %v2402 = vrot.slane %v2234, 4
      %v2404 = vsel %vm1715, %v2400, 0
      %v2407 = vsel %vm1731, %v2402, 0
      %2409 = vmatprep.subr.bf16.mxu0 0
      %2410 = vmatpush1.bf16.msra.mxu0 %v2407
      %2411 = vmatprep.subr.bf16.mxu0 0
      %2412 = vmatpush1.bf16.msra.mxu0 0
      %2413 = vmatprep.subr.bf16.mxu0 0
      %2414 = vmatpush1.bf16.msra.mxu0 0
      %2415 = vmatprep.subr.bf16.mxu0 0
      %2416 = vmatpush1.bf16.msra.mxu0 0
      %2417 = vmatprep.subr.bf16.mxu0 0
      %2418 = vmatpush1.bf16.msra.mxu0 0
      %2419 = vmatprep.subr.bf16.mxu0 0
      %2420 = vmatpush1.bf16.msra.mxu0 0
      %2421 = vmatprep.subr.bf16.mxu0 0
      %2422 = vmatpush1.bf16.msra.mxu0 0
      %2423 = vmatprep.subr.bf16.mxu0 0
      %2424 = vmatpush1.bf16.msra.mxu0 0
      %2425 = vmatprep.subr.bf16.mxu0 0
      %2426 = vmatpush1.bf16.msra.mxu0 0
      %2427 = vmatprep.subr.bf16.mxu0 0
      %2428 = vmatpush1.bf16.msra.mxu0 0
      %2429 = vmatprep.subr.bf16.mxu0 0
      %2430 = vmatpush1.bf16.msra.mxu0 0
      %2431 = vmatprep.subr.bf16.mxu0 0
      %2432 = vmatpush1.bf16.msra.mxu0 0
      %2433 = vmatprep.subr.bf16.mxu0 0
      %2434 = vmatpush1.bf16.msra.mxu0 0
      %2435 = vmatprep.subr.bf16.mxu0 0
      %2436 = vmatpush1.bf16.msra.mxu0 0
      %2437 = vmatprep.subr.bf16.mxu0 0
      %2438 = vmatpush1.bf16.msra.mxu0 0
      %2439 = vmatprep.subr.bf16.mxu0 0
      %2440 = vmatpush1.bf16.msra.mxu0 0
      %2441 = vmatprep.mubr.bf16.mxu0 0
      %2442 = vmatmul.mubr.bf16.gmra.mrb[0].mxu0 %v2404
      %v2443 = vpop.f32.mrb[0].mxu0
      %v2444 = vadd.f32 0.0, %v2443
      %v2445 = vpop.f32.mrb[0].mxu0
      %v2446 = vpop.f32.mrb[0].mxu0
      %v2447 = vpop.f32.mrb[0].mxu0
      %2448 = vdwg.mxu0
      %v2449 = vpack.c.bf16 %v2444, %v2334
      %s2450 = scalar_lea.vmem %s888, 16
      %v2451 = vld [vmem:[%s2450] sm:$0xf]
      %v2452 = vld [vmem:[%s2450 + $0x4] sm:$0xf]
      %v2453 = vld [vmem:[%s2450 + $0x8] sm:$0xf]
      %v2454 = vld [vmem:[%s2450 + $0xc] sm:$0xf]
      %v2459 = vunpack.c.l.b16 %v2451
      %v2460 = vunpack.c.l.b16 %v2452
      %v2461 = vunpack.c.l.b16 %v2453
      %v2462 = vunpack.c.l.b16 %v2454
      %v2463 = vpack.c.b16 %v2460, %v2459
      %v2464 = vpack.c.b16 %v2462, %v2461
      %v2468 = vsel %vm1668, %v2449, 0
      %2470 = vmatprep.subr.bf16.mxu0 0
      %2471 = vmatpush1.bf16.msra.mxu0 %v2463
      %2472 = vmatprep.subr.bf16.mxu0 0
      %2473 = vmatpush1.bf16.msra.mxu0 %v2464
      %2474 = vmatprep.subr.bf16.mxu0 0
      %2475 = vmatpush1.bf16.msra.mxu0 0
      %2476 = vmatprep.subr.bf16.mxu0 0
      %2477 = vmatpush1.bf16.msra.mxu0 0
      %2478 = vmatprep.subr.bf16.mxu0 0
      %2479 = vmatpush1.bf16.msra.mxu0 0
      %2480 = vmatprep.subr.bf16.mxu0 0
      %2481 = vmatpush1.bf16.msra.mxu0 0
      %2482 = vmatprep.subr.bf16.mxu0 0
      %2483 = vmatpush1.bf16.msra.mxu0 0
      %2484 = vmatprep.subr.bf16.mxu0 0
      %2485 = vmatpush1.bf16.msra.mxu0 0
      %2486 = vmatprep.subr.bf16.mxu0 0
      %2487 = vmatpush1.bf16.msra.mxu0 0
      %2488 = vmatprep.subr.bf16.mxu0 0
      %2489 = vmatpush1.bf16.msra.mxu0 0
      %2490 = vmatprep.subr.bf16.mxu0 0
      %2491 = vmatpush1.bf16.msra.mxu0 0
      %2492 = vmatprep.subr.bf16.mxu0 0
      %2493 = vmatpush1.bf16.msra.mxu0 0
      %2494 = vmatprep.subr.bf16.mxu0 0
      %2495 = vmatpush1.bf16.msra.mxu0 0
      %2496 = vmatprep.subr.bf16.mxu0 0
      %2497 = vmatpush1.bf16.msra.mxu0 0
      %2498 = vmatprep.subr.bf16.mxu0 0
      %2499 = vmatpush1.bf16.msra.mxu0 0
      %2500 = vmatprep.subr.bf16.mxu0 0
      %2501 = vmatpush1.bf16.msra.mxu0 0
      %2502 = vmatprep.mubr.bf16.mxu0 0
      %2503 = vmatmul.mubr.bf16.gmra.mrb[0].mxu0 %v2468
      %v2504 = vpop.f32.mrb[0].mxu0
      %v2505 = vadd.f32 0.0, %v2504
      %v2506 = vpop.f32.mrb[0].mxu0
      %v2507 = vpop.f32.mrb[0].mxu0
      %v2508 = vadd.f32 0.0, %v2507
      %v2509 = vpop.f32.mrb[0].mxu0
      %2510 = vdwg.mxu0
      %v2515 = vunpack.c.l.b16 %v1886
      %v2516 = vunpack.c.l.b16 %v1887
      %v2517 = vunpack.c.l.b16 %v1888
      %v2518 = vunpack.c.l.b16 %v1889
      %v2519 = vpack.c.b16 %v2516, %v2515
      %v2520 = vpack.c.b16 %v2518, %v2517
      %v2524 = vsel %vm1668, %v1885, 0
      %2526 = vmatprep.subr.bf16.mxu0 0
      %2527 = vmatpush1.bf16.msra.mxu0 %v2519
      %2528 = vmatprep.subr.bf16.mxu0 0
      %2529 = vmatpush1.bf16.msra.mxu0 %v2520
      %2530 = vmatprep.subr.bf16.mxu0 0
      %2531 = vmatpush1.bf16.msra.mxu0 0
      %2532 = vmatprep.subr.bf16.mxu0 0
      %2533 = vmatpush1.bf16.msra.mxu0 0
      %2534 = vmatprep.subr.bf16.mxu0 0
      %2535 = vmatpush1.bf16.msra.mxu0 0
      %2536 = vmatprep.subr.bf16.mxu0 0
      %2537 = vmatpush1.bf16.msra.mxu0 0
      %2538 = vmatprep.subr.bf16.mxu0 0
      %2539 = vmatpush1.bf16.msra.mxu0 0
      %2540 = vmatprep.subr.bf16.mxu0 0
      %2541 = vmatpush1.bf16.msra.mxu0 0
      %2542 = vmatprep.subr.bf16.mxu0 0
      %2543 = vmatpush1.bf16.msra.mxu0 0
      %2544 = vmatprep.subr.bf16.mxu0 0
      %2545 = vmatpush1.bf16.msra.mxu0 0
      %2546 = vmatprep.subr.bf16.mxu0 0
      %2547 = vmatpush1.bf16.msra.mxu0 0
      %2548 = vmatprep.subr.bf16.mxu0 0
      %2549 = vmatpush1.bf16.msra.mxu0 0
      %2550 = vmatprep.subr.bf16.mxu0 0
      %2551 = vmatpush1.bf16.msra.mxu0 0
      %2552 = vmatprep.subr.bf16.mxu0 0
      %2553 = vmatpush1.bf16.msra.mxu0 0
      %2554 = vmatprep.subr.bf16.mxu0 0
      %2555 = vmatpush1.bf16.msra.mxu0 0
      %2556 = vmatprep.subr.bf16.mxu0 0
      %2557 = vmatpush1.bf16.msra.mxu0 0
      %2558 = vmatprep.mubr.bf16.mxu0 0
      %2559 = vmatmul.mubr.bf16.gmra.mrb[0].mxu0 %v2524
      %v2560 = vpop.f32.mrb[0].mxu0
      %v2561 = vadd.f32 %v2505, %v2560
      %v2562 = vpop.f32.mrb[0].mxu0
      %v2563 = vpop.f32.mrb[0].mxu0
      %v2564 = vadd.f32 %v2508, %v2563
      %v2565 = vpop.f32.mrb[0].mxu0
      %2566 = vdwg.mxu0
      %s2567 = scalar_lea.vmem %s861, 128
      %v2568 = vld [vmem:[%s2567] sm:$0xf]
      %v2569 = vld [vmem:[%s2567 + $0x4] sm:$0xf]
      %v2570 = vld [vmem:[%s2567 + $0x8] sm:$0xf]
      %v2571 = vld [vmem:[%s2567 + $0xc] sm:$0xf]
      %v2572 = vld [vmem:[%s2567 + $0x10] sm:$0xf]
      %v2573 = vld [vmem:[%s2567 + $0x14] sm:$0xf]
      %v2574 = vld [vmem:[%s2567 + $0x18] sm:$0xf]
      %v2575 = vld [vmem:[%s2567 + $0x1c] sm:$0xf]
      %v2576 = vld [vmem:[%s2567 + $0x20] sm:$0xf]
      %v2577 = vld [vmem:[%s2567 + $0x24] sm:$0xf]
      %v2578 = vld [vmem:[%s2567 + $0x28] sm:$0xf]
      %v2579 = vld [vmem:[%s2567 + $0x2c] sm:$0xf]
      %v2580 = vld [vmem:[%s2567 + $0x30] sm:$0xf]
      %v2581 = vld [vmem:[%s2567 + $0x34] sm:$0xf]
      %v2582 = vld [vmem:[%s2567 + $0x38] sm:$0xf]
      %v2583 = vld [vmem:[%s2567 + $0x3c] sm:$0xf]
      %s2584 = scalar_lea.vmem %s865, 2
      %v2585 = vld [vmem:[%s2584] sm:$0x1]
      %v2587 = vlaneseq
      %v2588 = vshrl.u32 %v2587, 7
      %v2589 = vsub.s32 0, %v2588
      %v2590 = vrot.slane %v2585, %v2589
      %v2608 = vunpack.c.l.b16 %v2568
      %v2609 = vunpack.c.l.b16 %v2569
      %v2610 = vunpack.c.l.b16 %v2570
      %v2611 = vunpack.c.l.b16 %v2571
      %v2612 = vunpack.c.l.b16 %v2572
      %v2613 = vunpack.c.l.b16 %v2573
      %v2614 = vunpack.c.l.b16 %v2574
      %v2615 = vunpack.c.l.b16 %v2575
      %v2616 = vunpack.c.l.b16 %v2576
      %v2617 = vunpack.c.l.b16 %v2577
      %v2618 = vunpack.c.l.b16 %v2578
      %v2619 = vunpack.c.l.b16 %v2579
      %v2620 = vunpack.c.l.b16 %v2580
      %v2621 = vunpack.c.l.b16 %v2581
      %v2622 = vunpack.c.l.b16 %v2582
      %v2623 = vunpack.c.l.b16 %v2583
      %v2624 = vpack.c.b16 %v2609, %v2608
      %v2625 = vpack.c.b16 %v2611, %v2610
      %v2626 = vpack.c.b16 %v2613, %v2612
      %v2627 = vpack.c.b16 %v2615, %v2614
      %v2628 = vpack.c.b16 %v2617, %v2616
      %v2629 = vpack.c.b16 %v2619, %v2618
      %v2630 = vpack.c.b16 %v2621, %v2620
      %v2631 = vpack.c.b16 %v2623, %v2622
      %2640 = vmatprep.subr.bf16.mxu0 0
      %2641 = vmatpush1.bf16.msra.mxu0 %v2624
      %2642 = vmatprep.subr.bf16.mxu0 0
      %2643 = vmatpush1.bf16.msra.mxu0 %v2625
      %2644 = vmatprep.subr.bf16.mxu0 0
      %2645 = vmatpush1.bf16.msra.mxu0 %v2626
      %2646 = vmatprep.subr.bf16.mxu0 0
      %2647 = vmatpush1.bf16.msra.mxu0 %v2627
      %2648 = vmatprep.subr.bf16.mxu0 0
      %2649 = vmatpush1.bf16.msra.mxu0 %v2628
      %2650 = vmatprep.subr.bf16.mxu0 0
      %2651 = vmatpush1.bf16.msra.mxu0 %v2629
      %2652 = vmatprep.subr.bf16.mxu0 0
      %2653 = vmatpush1.bf16.msra.mxu0 %v2630
      %2654 = vmatprep.subr.bf16.mxu0 0
      %2655 = vmatpush1.bf16.msra.mxu0 %v2631
      %2656 = vmatprep.subr.bf16.mxu0 0
      %2657 = vmatpush1.bf16.msra.mxu0 0
      %2658 = vmatprep.subr.bf16.mxu0 0
      %2659 = vmatpush1.bf16.msra.mxu0 0
      %2660 = vmatprep.subr.bf16.mxu0 0
      %2661 = vmatpush1.bf16.msra.mxu0 0
      %2662 = vmatprep.subr.bf16.mxu0 0
      %2663 = vmatpush1.bf16.msra.mxu0 0
      %2664 = vmatprep.subr.bf16.mxu0 0
      %2665 = vmatpush1.bf16.msra.mxu0 0
      %2666 = vmatprep.subr.bf16.mxu0 0
      %2667 = vmatpush1.bf16.msra.mxu0 0
      %2668 = vmatprep.subr.bf16.mxu0 0
      %2669 = vmatpush1.bf16.msra.mxu0 0
      %2670 = vmatprep.subr.bf16.mxu0 0
      %2671 = vmatpush1.bf16.msra.mxu0 0
      %2672 = vmatprep.mubr.bf16.mxu0 0
      %2673 = vmatmul.mubr.bf16.gmra.mrb[0].mxu0 %v1328
      %v2674 = vpop.f32.mrb[0].mxu0
      %v2675 = vadd.f32 %v2590, %v2674
      %v2676 = vpop.f32.mrb[0].mxu0
      %v2677 = vpop.f32.mrb[0].mxu0
      %v2678 = vadd.f32 %v2590, %v2677
      %v2679 = vpop.f32.mrb[0].mxu0
      %2680 = vdwg.mxu0
      %s2681 = scalar_lea.vmem %s870, 128
      %v2682 = vld [vmem:[%s2681] sm:$0xf]
      %v2683 = vld [vmem:[%s2681 + $0x4] sm:$0xf]
      %v2684 = vld [vmem:[%s2681 + $0x8] sm:$0xf]
      %v2685 = vld [vmem:[%s2681 + $0xc] sm:$0xf]
      %v2686 = vld [vmem:[%s2681 + $0x10] sm:$0xf]
      %v2687 = vld [vmem:[%s2681 + $0x14] sm:$0xf]
      %v2688 = vld [vmem:[%s2681 + $0x18] sm:$0xf]
      %v2689 = vld [vmem:[%s2681 + $0x1c] sm:$0xf]
      %v2690 = vld [vmem:[%s2681 + $0x20] sm:$0xf]
      %v2691 = vld [vmem:[%s2681 + $0x24] sm:$0xf]
      %v2692 = vld [vmem:[%s2681 + $0x28] sm:$0xf]
      %v2693 = vld [vmem:[%s2681 + $0x2c] sm:$0xf]
      %v2694 = vld [vmem:[%s2681 + $0x30] sm:$0xf]
      %v2695 = vld [vmem:[%s2681 + $0x34] sm:$0xf]
      %v2696 = vld [vmem:[%s2681 + $0x38] sm:$0xf]
      %v2697 = vld [vmem:[%s2681 + $0x3c] sm:$0xf]
      %s2698 = scalar_lea.vmem %s874, 2
      %v2699 = vld [vmem:[%s2698] sm:$0x1]
      %v2701 = vlaneseq
      %v2702 = vshrl.u32 %v2701, 7
      %v2703 = vsub.s32 0, %v2702
      %v2704 = vrot.slane %v2699, %v2703
      %v2722 = vunpack.c.l.b16 %v2682
      %v2723 = vunpack.c.l.b16 %v2683
      %v2724 = vunpack.c.l.b16 %v2684
      %v2725 = vunpack.c.l.b16 %v2685
      %v2726 = vunpack.c.l.b16 %v2686
      %v2727 = vunpack.c.l.b16 %v2687
      %v2728 = vunpack.c.l.b16 %v2688
      %v2729 = vunpack.c.l.b16 %v2689
      %v2730 = vunpack.c.l.b16 %v2690
      %v2731 = vunpack.c.l.b16 %v2691
      %v2732 = vunpack.c.l.b16 %v2692
      %v2733 = vunpack.c.l.b16 %v2693
      %v2734 = vunpack.c.l.b16 %v2694
      %v2735 = vunpack.c.l.b16 %v2695
      %v2736 = vunpack.c.l.b16 %v2696
      %v2737 = vunpack.c.l.b16 %v2697
      %v2738 = vpack.c.b16 %v2723, %v2722
      %v2739 = vpack.c.b16 %v2725, %v2724
      %v2740 = vpack.c.b16 %v2727, %v2726
      %v2741 = vpack.c.b16 %v2729, %v2728
      %v2742 = vpack.c.b16 %v2731, %v2730
      %v2743 = vpack.c.b16 %v2733, %v2732
      %v2744 = vpack.c.b16 %v2735, %v2734
      %v2745 = vpack.c.b16 %v2737, %v2736
      %2754 = vmatprep.subr.bf16.mxu0 0
      %2755 = vmatpush1.bf16.msra.mxu0 %v2738
      %2756 = vmatprep.subr.bf16.mxu0 0
      %2757 = vmatpush1.bf16.msra.mxu0 %v2739
      %2758 = vmatprep.subr.bf16.mxu0 0
      %2759 = vmatpush1.bf16.msra.mxu0 %v2740
      %2760 = vmatprep.subr.bf16.mxu0 0
      %2761 = vmatpush1.bf16.msra.mxu0 %v2741
      %2762 = vmatprep.subr.bf16.mxu0 0
      %2763 = vmatpush1.bf16.msra.mxu0 %v2742
      %2764 = vmatprep.subr.bf16.mxu0 0
      %2765 = vmatpush1.bf16.msra.mxu0 %v2743
      %2766 = vmatprep.subr.bf16.mxu0 0
      %2767 = vmatpush1.bf16.msra.mxu0 %v2744
      %2768 = vmatprep.subr.bf16.mxu0 0
      %2769 = vmatpush1.bf16.msra.mxu0 %v2745
      %2770 = vmatprep.subr.bf16.mxu0 0
      %2771 = vmatpush1.bf16.msra.mxu0 0
      %2772 = vmatprep.subr.bf16.mxu0 0
      %2773 = vmatpush1.bf16.msra.mxu0 0
      %2774 = vmatprep.subr.bf16.mxu0 0
      %2775 = vmatpush1.bf16.msra.mxu0 0
      %2776 = vmatprep.subr.bf16.mxu0 0
      %2777 = vmatpush1.bf16.msra.mxu0 0
      %2778 = vmatprep.subr.bf16.mxu0 0
      %2779 = vmatpush1.bf16.msra.mxu0 0
      %2780 = vmatprep.subr.bf16.mxu0 0
      %2781 = vmatpush1.bf16.msra.mxu0 0
      %2782 = vmatprep.subr.bf16.mxu0 0
      %2783 = vmatpush1.bf16.msra.mxu0 0
      %2784 = vmatprep.subr.bf16.mxu0 0
      %2785 = vmatpush1.bf16.msra.mxu0 0
      %2786 = vmatprep.mubr.bf16.mxu0 0
      %2787 = vmatmul.mubr.bf16.gmra.mrb[0].mxu0 %v1328
      %v2788 = vpop.f32.mrb[0].mxu0
      %v2789 = vadd.f32 %v2704, %v2788
      %v2790 = vpop.f32.mrb[0].mxu0
      %v2791 = vpop.f32.mrb[0].mxu0
      %v2792 = vadd.f32 %v2704, %v2791
      %v2793 = vpop.f32.mrb[0].mxu0
      %2794 = vdwg.mxu0
      %s2795 = scalar_lea.vmem %s879, 128
      %v2796 = vld [vmem:[%s2795] sm:$0xf]
      %v2797 = vld [vmem:[%s2795 + $0x4] sm:$0xf]
      %v2798 = vld [vmem:[%s2795 + $0x8] sm:$0xf]
      %v2799 = vld [vmem:[%s2795 + $0xc] sm:$0xf]
      %v2800 = vld [vmem:[%s2795 + $0x10] sm:$0xf]
      %v2801 = vld [vmem:[%s2795 + $0x14] sm:$0xf]
      %v2802 = vld [vmem:[%s2795 + $0x18] sm:$0xf]
      %v2803 = vld [vmem:[%s2795 + $0x1c] sm:$0xf]
      %v2804 = vld [vmem:[%s2795 + $0x20] sm:$0xf]
      %v2805 = vld [vmem:[%s2795 + $0x24] sm:$0xf]
      %v2806 = vld [vmem:[%s2795 + $0x28] sm:$0xf]
      %v2807 = vld [vmem:[%s2795 + $0x2c] sm:$0xf]
      %v2808 = vld [vmem:[%s2795 + $0x30] sm:$0xf]
      %v2809 = vld [vmem:[%s2795 + $0x34] sm:$0xf]
      %v2810 = vld [vmem:[%s2795 + $0x38] sm:$0xf]
      %v2811 = vld [vmem:[%s2795 + $0x3c] sm:$0xf]
      %s2812 = scalar_lea.vmem %s883, 2
      %v2813 = vld [vmem:[%s2812] sm:$0x1]
      %v2815 = vlaneseq
      %v2816 = vshrl.u32 %v2815, 7
      %v2817 = vsub.s32 0, %v2816
      %v2818 = vrot.slane %v2813, %v2817
      %v2836 = vunpack.c.l.b16 %v2796
      %v2837 = vunpack.c.l.b16 %v2797
      %v2838 = vunpack.c.l.b16 %v2798
      %v2839 = vunpack.c.l.b16 %v2799
      %v2840 = vunpack.c.l.b16 %v2800
      %v2841 = vunpack.c.l.b16 %v2801
      %v2842 = vunpack.c.l.b16 %v2802
      %v2843 = vunpack.c.l.b16 %v2803
      %v2844 = vunpack.c.l.b16 %v2804
      %v2845 = vunpack.c.l.b16 %v2805
      %v2846 = vunpack.c.l.b16 %v2806
      %v2847 = vunpack.c.l.b16 %v2807
      %v2848 = vunpack.c.l.b16 %v2808
      %v2849 = vunpack.c.l.b16 %v2809
      %v2850 = vunpack.c.l.b16 %v2810
      %v2851 = vunpack.c.l.b16 %v2811
      %v2852 = vpack.c.b16 %v2837, %v2836
      %v2853 = vpack.c.b16 %v2839, %v2838
      %v2854 = vpack.c.b16 %v2841, %v2840
      %v2855 = vpack.c.b16 %v2843, %v2842
      %v2856 = vpack.c.b16 %v2845, %v2844
      %v2857 = vpack.c.b16 %v2847, %v2846
      %v2858 = vpack.c.b16 %v2849, %v2848
      %v2859 = vpack.c.b16 %v2851, %v2850
      %2868 = vmatprep.subr.bf16.mxu0 0
      %2869 = vmatpush1.bf16.msra.mxu0 %v2852
      %2870 = vmatprep.subr.bf16.mxu0 0
      %2871 = vmatpush1.bf16.msra.mxu0 %v2853
      %2872 = vmatprep.subr.bf16.mxu0 0
      %2873 = vmatpush1.bf16.msra.mxu0 %v2854
      %2874 = vmatprep.subr.bf16.mxu0 0
      %2875 = vmatpush1.bf16.msra.mxu0 %v2855
      %2876 = vmatprep.subr.bf16.mxu0 0
      %2877 = vmatpush1.bf16.msra.mxu0 %v2856
      %2878 = vmatprep.subr.bf16.mxu0 0
      %2879 = vmatpush1.bf16.msra.mxu0 %v2857
      %2880 = vmatprep.subr.bf16.mxu0 0
      %2881 = vmatpush1.bf16.msra.mxu0 %v2858
      %2882 = vmatprep.subr.bf16.mxu0 0
      %2883 = vmatpush1.bf16.msra.mxu0 %v2859
      %2884 = vmatprep.subr.bf16.mxu0 0
      %2885 = vmatpush1.bf16.msra.mxu0 0
      %2886 = vmatprep.subr.bf16.mxu0 0
      %2887 = vmatpush1.bf16.msra.mxu0 0
      %2888 = vmatprep.subr.bf16.mxu0 0
      %2889 = vmatpush1.bf16.msra.mxu0 0
      %2890 = vmatprep.subr.bf16.mxu0 0
      %2891 = vmatpush1.bf16.msra.mxu0 0
      %2892 = vmatprep.subr.bf16.mxu0 0
      %2893 = vmatpush1.bf16.msra.mxu0 0
      %2894 = vmatprep.subr.bf16.mxu0 0
      %2895 = vmatpush1.bf16.msra.mxu0 0
      %2896 = vmatprep.subr.bf16.mxu0 0
      %2897 = vmatpush1.bf16.msra.mxu0 0
      %2898 = vmatprep.subr.bf16.mxu0 0
      %2899 = vmatpush1.bf16.msra.mxu0 0
      %2900 = vmatprep.mubr.bf16.mxu0 0
      %2901 = vmatmul.mubr.bf16.gmra.mrb[0].mxu0 %v1328
      %v2902 = vpop.f32.mrb[0].mxu0
      %v2903 = vadd.f32 %v2818, %v2902
      %v2904 = vpop.f32.mrb[0].mxu0
      %v2905 = vpop.f32.mrb[0].mxu0
      %v2906 = vadd.f32 %v2818, %v2905
      %v2907 = vpop.f32.mrb[0].mxu0
      %2908 = vdwg.mxu0
      %v2909 = vpack.c.bf16 %v2678, %v2675
      %v2910 = vpack.c.bf16 %v2792, %v2789
      %v2911 = vpack.c.bf16 %v2906, %v2903
      %v2913 = vsel %vm1668, %v2909, 0
      %v2916 = vsel %vm1668, %v2910, 0
      %2918 = vmatprep.subr.bf16.mxu0 0
      %2919 = vmatpush1.bf16.xpose.msra.mxu0 %v2916
      %2920 = vmatprep.subr.bf16.mxu0 0
      %2921 = vmatpush1.bf16.xpose.msra.mxu0 0
      %2922 = vmatprep.subr.bf16.mxu0 0
      %2923 = vmatpush1.bf16.xpose.msra.mxu0 0
      %2924 = vmatprep.subr.bf16.mxu0 0
      %2925 = vmatpush1.bf16.xpose.msra.mxu0 0
      %2926 = vmatprep.subr.bf16.mxu0 0
      %2927 = vmatpush1.bf16.xpose.msra.mxu0 0
      %2928 = vmatprep.subr.bf16.mxu0 0
      %2929 = vmatpush1.bf16.xpose.msra.mxu0 0
      %2930 = vmatprep.subr.bf16.mxu0 0
      %2931 = vmatpush1.bf16.xpose.msra.mxu0 0
      %2932 = vmatprep.subr.bf16.mxu0 0
      %2933 = vmatpush1.bf16.xpose.msra.mxu0 0
      %2934 = vmatprep.subr.bf16.mxu0 0
      %2935 = vmatpush1.bf16.xpose.msra.mxu0 0
      %2936 = vmatprep.subr.bf16.mxu0 0
      %2937 = vmatpush1.bf16.xpose.msra.mxu0 0
      %2938 = vmatprep.subr.bf16.mxu0 0
      %2939 = vmatpush1.bf16.xpose.msra.mxu0 0
      %2940 = vmatprep.subr.bf16.mxu0 0
      %2941 = vmatpush1.bf16.xpose.msra.mxu0 0
      %2942 = vmatprep.subr.bf16.mxu0 0
      %2943 = vmatpush1.bf16.xpose.msra.mxu0 0
      %2944 = vmatprep.subr.bf16.mxu0 0
      %2945 = vmatpush1.bf16.xpose.msra.mxu0 0
      %2946 = vmatprep.subr.bf16.mxu0 0
      %2947 = vmatpush1.bf16.xpose.msra.mxu0 0
      %2948 = vmatprep.subr.bf16.mxu0 0
      %2949 = vmatpush1.bf16.xpose.msra.mxu0 0
      %2950 = vmatprep.mubr.bf16.mxu0 0
      %2951 = vmatmul.mubr.bf16.gmra.mrb[0].mxu0 %v2913
      %v2952 = vpop.f32.mrb[0].mxu0
      %v2953 = vadd.f32 0.0, %v2952
      %v2954 = vpop.f32.mrb[0].mxu0
      %v2955 = vpop.f32.mrb[0].mxu0
      %v2956 = vpop.f32.mrb[0].mxu0
      %2957 = vdwg.mxu0
      %v2958 = vsel %vm1715, %v2953, -inf
      %2959 = vmax.xlane.f32.xlu0 %v2958
      %v2960 = vpop.xlane.xlu0 %2959
      %v2961 = vsub.f32 %v2953, %v2960
      %v2962 = vmul.f32 %v2961, 1.442695
      %v2963 = vpow.pop %v2962
      %v2964 = vsel %vm1715, %v2963, 0.0
      %2965 = vadd.xlane.f32.xlu0 %v2964
      %v2966 = vpop.xlane.xlu0 %2965
      %v2967 = vrcp.pop %v2966
      %v2968 = vmul.f32 %v2963, %v2967
      %v2969 = vpack.c.bf16 %v2968, %v2968
      %v2971 = vsel %vm1715, %v2969, 0
      %v2974 = vsel %vm1731, %v2911, 0
      %2976 = vmatprep.subr.bf16.mxu0 0
      %2977 = vmatpush1.bf16.msra.mxu0 %v2974
      %2978 = vmatprep.subr.bf16.mxu0 0
      %2979 = vmatpush1.bf16.msra.mxu0 0
      %2980 = vmatprep.subr.bf16.mxu0 0
      %2981 = vmatpush1.bf16.msra.mxu0 0
      %2982 = vmatprep.subr.bf16.mxu0 0
      %2983 = vmatpush1.bf16.msra.mxu0 0
      %2984 = vmatprep.subr.bf16.mxu0 0
      %2985 = vmatpush1.bf16.msra.mxu0 0
      %2986 = vmatprep.subr.bf16.mxu0 0
      %2987 = vmatpush1.bf16.msra.mxu0 0
      %2988 = vmatprep.subr.bf16.mxu0 0
      %2989 = vmatpush1.bf16.msra.mxu0 0
      %2990 = vmatprep.subr.bf16.mxu0 0
      %2991 = vmatpush1.bf16.msra.mxu0 0
      %2992 = vmatprep.subr.bf16.mxu0 0
      %2993 = vmatpush1.bf16.msra.mxu0 0
      %2994 = vmatprep.subr.bf16.mxu0 0
      %2995 = vmatpush1.bf16.msra.mxu0 0
      %2996 = vmatprep.subr.bf16.mxu0 0
      %2997 = vmatpush1.bf16.msra.mxu0 0
      %2998 = vmatprep.subr.bf16.mxu0 0
      %2999 = vmatpush1.bf16.msra.mxu0 0
      %3000 = vmatprep.subr.bf16.mxu0 0
      %3001 = vmatpush1.bf16.msra.mxu0 0
      %3002 = vmatprep.subr.bf16.mxu0 0
      %3003 = vmatpush1.bf16.msra.mxu0 0
      %3004 = vmatprep.subr.bf16.mxu0 0
      %3005 = vmatpush1.bf16.msra.mxu0 0
      %3006 = vmatprep.subr.bf16.mxu0 0
      %3007 = vmatpush1.bf16.msra.mxu0 0
      %3008 = vmatprep.mubr.bf16.mxu0 0
      %3009 = vmatmul.mubr.bf16.gmra.mrb[0].mxu0 %v2971
      %v3010 = vpop.f32.mrb[0].mxu0
      %v3011 = vadd.f32 0.0, %v3010
      %v3012 = vpop.f32.mrb[0].mxu0
      %v3013 = vpop.f32.mrb[0].mxu0
      %v3014 = vpop.f32.mrb[0].mxu0
      %3015 = vdwg.mxu0
      %v3017 = vrot.slane %v2909, 4
      %v3019 = vrot.slane %v2910, 4
      %v3021 = vsel %vm1668, %v3017, 0
      %v3024 = vsel %vm1668, %v3019, 0
      %3026 = vmatprep.subr.bf16.mxu0 0
      %3027 = vmatpush1.bf16.xpose.msra.mxu0 %v3024
      %3028 = vmatprep.subr.bf16.mxu0 0
      %3029 = vmatpush1.bf16.xpose.msra.mxu0 0
      %3030 = vmatprep.subr.bf16.mxu0 0
      %3031 = vmatpush1.bf16.xpose.msra.mxu0 0
      %3032 = vmatprep.subr.bf16.mxu0 0
      %3033 = vmatpush1.bf16.xpose.msra.mxu0 0
      %3034 = vmatprep.subr.bf16.mxu0 0
      %3035 = vmatpush1.bf16.xpose.msra.mxu0 0
      %3036 = vmatprep.subr.bf16.mxu0 0
      %3037 = vmatpush1.bf16.xpose.msra.mxu0 0
      %3038 = vmatprep.subr.bf16.mxu0 0
      %3039 = vmatpush1.bf16.xpose.msra.mxu0 0
      %3040 = vmatprep.subr.bf16.mxu0 0
      %3041 = vmatpush1.bf16.xpose.msra.mxu0 0
      %3042 = vmatprep.subr.bf16.mxu0 0
      %3043 = vmatpush1.bf16.xpose.msra.mxu0 0
      %3044 = vmatprep.subr.bf16.mxu0 0
      %3045 = vmatpush1.bf16.xpose.msra.mxu0 0
      %3046 = vmatprep.subr.bf16.mxu0 0
      %3047 = vmatpush1.bf16.xpose.msra.mxu0 0
      %3048 = vmatprep.subr.bf16.mxu0 0
      %3049 = vmatpush1.bf16.xpose.msra.mxu0 0
      %3050 = vmatprep.subr.bf16.mxu0 0
      %3051 = vmatpush1.bf16.xpose.msra.mxu0 0
      %3052 = vmatprep.subr.bf16.mxu0 0
      %3053 = vmatpush1.bf16.xpose.msra.mxu0 0
      %3054 = vmatprep.subr.bf16.mxu0 0
      %3055 = vmatpush1.bf16.xpose.msra.mxu0 0
      %3056 = vmatprep.subr.bf16.mxu0 0
      %3057 = vmatpush1.bf16.xpose.msra.mxu0 0
      %3058 = vmatprep.mubr.bf16.mxu0 0
      %3059 = vmatmul.mubr.bf16.gmra.mrb[0].mxu0 %v3021
      %v3060 = vpop.f32.mrb[0].mxu0
      %v3061 = vadd.f32 0.0, %v3060
      %v3062 = vpop.f32.mrb[0].mxu0
      %v3063 = vpop.f32.mrb[0].mxu0
      %v3064 = vpop.f32.mrb[0].mxu0
      %3065 = vdwg.mxu0
      %v3066 = vsel %vm1715, %v3061, -inf
      %3067 = vmax.xlane.f32.xlu0 %v3066
      %v3068 = vpop.xlane.xlu0 %3067
      %v3069 = vsub.f32 %v3061, %v3068
      %v3070 = vmul.f32 %v3069, 1.442695
      %v3071 = vpow.pop %v3070
      %v3072 = vsel %vm1715, %v3071, 0.0
      %3073 = vadd.xlane.f32.xlu0 %v3072
      %v3074 = vpop.xlane.xlu0 %3073
      %v3075 = vrcp.pop %v3074
      %v3076 = vmul.f32 %v3071, %v3075
      %v3077 = vpack.c.bf16 %v3076, %v3076
      %v3079 = vrot.slane %v2911, 4
      %v3081 = vsel %vm1715, %v3077, 0
      %v3084 = vsel %vm1731, %v3079, 0
      %3086 = vmatprep.subr.bf16.mxu0 0
      %3087 = vmatpush1.bf16.msra.mxu0 %v3084
      %3088 = vmatprep.subr.bf16.mxu0 0
      %3089 = vmatpush1.bf16.msra.mxu0 0
      %3090 = vmatprep.subr.bf16.mxu0 0
      %3091 = vmatpush1.bf16.msra.mxu0 0
      %3092 = vmatprep.subr.bf16.mxu0 0
      %3093 = vmatpush1.bf16.msra.mxu0 0
      %3094 = vmatprep.subr.bf16.mxu0 0
      %3095 = vmatpush1.bf16.msra.mxu0 0
      %3096 = vmatprep.subr.bf16.mxu0 0
      %3097 = vmatpush1.bf16.msra.mxu0 0
      %3098 = vmatprep.subr.bf16.mxu0 0
      %3099 = vmatpush1.bf16.msra.mxu0 0
      %3100 = vmatprep.subr.bf16.mxu0 0
      %3101 = vmatpush1.bf16.msra.mxu0 0
      %3102 = vmatprep.subr.bf16.mxu0 0
      %3103 = vmatpush1.bf16.msra.mxu0 0
      %3104 = vmatprep.subr.bf16.mxu0 0
      %3105 = vmatpush1.bf16.msra.mxu0 0
      %3106 = vmatprep.subr.bf16.mxu0 0
      %3107 = vmatpush1.bf16.msra.mxu0 0
      %3108 = vmatprep.subr.bf16.mxu0 0
      %3109 = vmatpush1.bf16.msra.mxu0 0
      %3110 = vmatprep.subr.bf16.mxu0 0
      %3111 = vmatpush1.bf16.msra.mxu0 0
      %3112 = vmatprep.subr.bf16.mxu0 0
      %3113 = vmatpush1.bf16.msra.mxu0 0
      %3114 = vmatprep.subr.bf16.mxu0 0
      %3115 = vmatpush1.bf16.msra.mxu0 0
      %3116 = vmatprep.subr.bf16.mxu0 0
      %3117 = vmatpush1.bf16.msra.mxu0 0
      %3118 = vmatprep.mubr.bf16.mxu0 0
      %3119 = vmatmul.mubr.bf16.gmra.mrb[0].mxu0 %v3081
      %v3120 = vpop.f32.mrb[0].mxu0
      %v3121 = vadd.f32 0.0, %v3120
      %v3122 = vpop.f32.mrb[0].mxu0
      %v3123 = vpop.f32.mrb[0].mxu0
      %v3124 = vpop.f32.mrb[0].mxu0
      %3125 = vdwg.mxu0
      %v3126 = vpack.c.bf16 %v3121, %v3011
      %s3127 = scalar_lea.vmem %s888, 32
      %v3128 = vld [vmem:[%s3127] sm:$0xf]
      %v3129 = vld [vmem:[%s3127 + $0x4] sm:$0xf]
      %v3130 = vld [vmem:[%s3127 + $0x8] sm:$0xf]
      %v3131 = vld [vmem:[%s3127 + $0xc] sm:$0xf]
      %v3136 = vunpack.c.l.b16 %v3128
      %v3137 = vunpack.c.l.b16 %v3129
      %v3138 = vunpack.c.l.b16 %v3130
      %v3139 = vunpack.c.l.b16 %v3131
      %v3140 = vpack.c.b16 %v3137, %v3136
      %v3141 = vpack.c.b16 %v3139, %v3138
      %v3145 = vsel %vm1668, %v3126, 0
      %3147 = vmatprep.subr.bf16.mxu0 0
      %3148 = vmatpush1.bf16.msra.mxu0 %v3140
      %3149 = vmatprep.subr.bf16.mxu0 0
      %3150 = vmatpush1.bf16.msra.mxu0 %v3141
      %3151 = vmatprep.subr.bf16.mxu0 0
      %3152 = vmatpush1.bf16.msra.mxu0 0
      %3153 = vmatprep.subr.bf16.mxu0 0
      %3154 = vmatpush1.bf16.msra.mxu0 0
      %3155 = vmatprep.subr.bf16.mxu0 0
      %3156 = vmatpush1.bf16.msra.mxu0 0
      %3157 = vmatprep.subr.bf16.mxu0 0
      %3158 = vmatpush1.bf16.msra.mxu0 0
      %3159 = vmatprep.subr.bf16.mxu0 0
      %3160 = vmatpush1.bf16.msra.mxu0 0
      %3161 = vmatprep.subr.bf16.mxu0 0
      %3162 = vmatpush1.bf16.msra.mxu0 0
      %3163 = vmatprep.subr.bf16.mxu0 0
      %3164 = vmatpush1.bf16.msra.mxu0 0
      %3165 = vmatprep.subr.bf16.mxu0 0
      %3166 = vmatpush1.bf16.msra.mxu0 0
      %3167 = vmatprep.subr.bf16.mxu0 0
      %3168 = vmatpush1.bf16.msra.mxu0 0
      %3169 = vmatprep.subr.bf16.mxu0 0
      %3170 = vmatpush1.bf16.msra.mxu0 0
      %3171 = vmatprep.subr.bf16.mxu0 0
      %3172 = vmatpush1.bf16.msra.mxu0 0
      %3173 = vmatprep.subr.bf16.mxu0 0
      %3174 = vmatpush1.bf16.msra.mxu0 0
      %3175 = vmatprep.subr.bf16.mxu0 0
      %3176 = vmatpush1.bf16.msra.mxu0 0
      %3177 = vmatprep.subr.bf16.mxu0 0
      %3178 = vmatpush1.bf16.msra.mxu0 0
      %3179 = vmatprep.mubr.bf16.mxu0 0
      %3180 = vmatmul.mubr.bf16.gmra.mrb[0].mxu0 %v3145
      %v3181 = vpop.f32.mrb[0].mxu0
      %v3182 = vadd.f32 0.0, %v3181
      %v3183 = vpop.f32.mrb[0].mxu0
      %v3184 = vpop.f32.mrb[0].mxu0
      %v3185 = vadd.f32 0.0, %v3184
      %v3186 = vpop.f32.mrb[0].mxu0
      %3187 = vdwg.mxu0
      %v3188 = vadd.f32 %v2561, %v3182
      %v3189 = vadd.f32 %v2564, %v3185
      %s3190 = scalar_lea.vmem %s861, 192
      %v3191 = vld [vmem:[%s3190] sm:$0xf]
      %v3192 = vld [vmem:[%s3190 + $0x4] sm:$0xf]
      %v3193 = vld [vmem:[%s3190 + $0x8] sm:$0xf]
      %v3194 = vld [vmem:[%s3190 + $0xc] sm:$0xf]
      %v3195 = vld [vmem:[%s3190 + $0x10] sm:$0xf]
      %v3196 = vld [vmem:[%s3190 + $0x14] sm:$0xf]
      %v3197 = vld [vmem:[%s3190 + $0x18] sm:$0xf]
      %v3198 = vld [vmem:[%s3190 + $0x1c] sm:$0xf]
      %v3199 = vld [vmem:[%s3190 + $0x20] sm:$0xf]
      %v3200 = vld [vmem:[%s3190 + $0x24] sm:$0xf]
      %v3201 = vld [vmem:[%s3190 + $0x28] sm:$0xf]
      %v3202 = vld [vmem:[%s3190 + $0x2c] sm:$0xf]
      %v3203 = vld [vmem:[%s3190 + $0x30] sm:$0xf]
      %v3204 = vld [vmem:[%s3190 + $0x34] sm:$0xf]
      %v3205 = vld [vmem:[%s3190 + $0x38] sm:$0xf]
      %v3206 = vld [vmem:[%s3190 + $0x3c] sm:$0xf]
      %s3207 = scalar_lea.vmem %s865, 3
      %v3208 = vld [vmem:[%s3207] sm:$0x1]
      %v3210 = vlaneseq
      %v3211 = vshrl.u32 %v3210, 7
      %v3212 = vsub.s32 0, %v3211
      %v3213 = vrot.slane %v3208, %v3212
      %v3231 = vunpack.c.l.b16 %v3191
      %v3232 = vunpack.c.l.b16 %v3192
      %v3233 = vunpack.c.l.b16 %v3193
      %v3234 = vunpack.c.l.b16 %v3194
      %v3235 = vunpack.c.l.b16 %v3195
      %v3236 = vunpack.c.l.b16 %v3196
      %v3237 = vunpack.c.l.b16 %v3197
      %v3238 = vunpack.c.l.b16 %v3198
      %v3239 = vunpack.c.l.b16 %v3199
      %v3240 = vunpack.c.l.b16 %v3200
      %v3241 = vunpack.c.l.b16 %v3201
      %v3242 = vunpack.c.l.b16 %v3202
      %v3243 = vunpack.c.l.b16 %v3203
      %v3244 = vunpack.c.l.b16 %v3204
      %v3245 = vunpack.c.l.b16 %v3205
      %v3246 = vunpack.c.l.b16 %v3206
      %v3247 = vpack.c.b16 %v3232, %v3231
      %v3248 = vpack.c.b16 %v3234, %v3233
      %v3249 = vpack.c.b16 %v3236, %v3235
      %v3250 = vpack.c.b16 %v3238, %v3237
      %v3251 = vpack.c.b16 %v3240, %v3239
      %v3252 = vpack.c.b16 %v3242, %v3241
      %v3253 = vpack.c.b16 %v3244, %v3243
      %v3254 = vpack.c.b16 %v3246, %v3245
      %3263 = vmatprep.subr.bf16.mxu0 0
      %3264 = vmatpush1.bf16.msra.mxu0 %v3247
      %3265 = vmatprep.subr.bf16.mxu0 0
      %3266 = vmatpush1.bf16.msra.mxu0 %v3248
      %3267 = vmatprep.subr.bf16.mxu0 0
      %3268 = vmatpush1.bf16.msra.mxu0 %v3249
      %3269 = vmatprep.subr.bf16.mxu0 0
      %3270 = vmatpush1.bf16.msra.mxu0 %v3250
      %3271 = vmatprep.subr.bf16.mxu0 0
      %3272 = vmatpush1.bf16.msra.mxu0 %v3251
      %3273 = vmatprep.subr.bf16.mxu0 0
      %3274 = vmatpush1.bf16.msra.mxu0 %v3252
      %3275 = vmatprep.subr.bf16.mxu0 0
      %3276 = vmatpush1.bf16.msra.mxu0 %v3253
      %3277 = vmatprep.subr.bf16.mxu0 0
      %3278 = vmatpush1.bf16.msra.mxu0 %v3254
      %3279 = vmatprep.subr.bf16.mxu0 0
      %3280 = vmatpush1.bf16.msra.mxu0 0
      %3281 = vmatprep.subr.bf16.mxu0 0
      %3282 = vmatpush1.bf16.msra.mxu0 0
      %3283 = vmatprep.subr.bf16.mxu0 0
      %3284 = vmatpush1.bf16.msra.mxu0 0
      %3285 = vmatprep.subr.bf16.mxu0 0
      %3286 = vmatpush1.bf16.msra.mxu0 0
      %3287 = vmatprep.subr.bf16.mxu0 0
      %3288 = vmatpush1.bf16.msra.mxu0 0
      %3289 = vmatprep.subr.bf16.mxu0 0
      %3290 = vmatpush1.bf16.msra.mxu0 0
      %3291 = vmatprep.subr.bf16.mxu0 0
      %3292 = vmatpush1.bf16.msra.mxu0 0
      %3293 = vmatprep.subr.bf16.mxu0 0
      %3294 = vmatpush1.bf16.msra.mxu0 0
      %3295 = vmatprep.mubr.bf16.mxu0 0
      %3296 = vmatmul.mubr.bf16.gmra.mrb[0].mxu0 %v1328
      %v3297 = vpop.f32.mrb[0].mxu0
      %v3298 = vadd.f32 %v3213, %v3297
      %v3299 = vpop.f32.mrb[0].mxu0
      %v3300 = vpop.f32.mrb[0].mxu0
      %v3301 = vadd.f32 %v3213, %v3300
      %v3302 = vpop.f32.mrb[0].mxu0
      %3303 = vdwg.mxu0
      %s3304 = scalar_lea.vmem %s870, 192
      %v3305 = vld [vmem:[%s3304] sm:$0xf]
      %v3306 = vld [vmem:[%s3304 + $0x4] sm:$0xf]
      %v3307 = vld [vmem:[%s3304 + $0x8] sm:$0xf]
      %v3308 = vld [vmem:[%s3304 + $0xc] sm:$0xf]
      %v3309 = vld [vmem:[%s3304 + $0x10] sm:$0xf]
      %v3310 = vld [vmem:[%s3304 + $0x14] sm:$0xf]
      %v3311 = vld [vmem:[%s3304 + $0x18] sm:$0xf]
      %v3312 = vld [vmem:[%s3304 + $0x1c] sm:$0xf]
      %v3313 = vld [vmem:[%s3304 + $0x20] sm:$0xf]
      %v3314 = vld [vmem:[%s3304 + $0x24] sm:$0xf]
      %v3315 = vld [vmem:[%s3304 + $0x28] sm:$0xf]
      %v3316 = vld [vmem:[%s3304 + $0x2c] sm:$0xf]
      %v3317 = vld [vmem:[%s3304 + $0x30] sm:$0xf]
      %v3318 = vld [vmem:[%s3304 + $0x34] sm:$0xf]
      %v3319 = vld [vmem:[%s3304 + $0x38] sm:$0xf]
      %v3320 = vld [vmem:[%s3304 + $0x3c] sm:$0xf]
      %s3321 = scalar_lea.vmem %s874, 3
      %v3322 = vld [vmem:[%s3321] sm:$0x1]
      %v3324 = vlaneseq
      %v3325 = vshrl.u32 %v3324, 7
      %v3326 = vsub.s32 0, %v3325
      %v3327 = vrot.slane %v3322, %v3326
      %v3345 = vunpack.c.l.b16 %v3305
      %v3346 = vunpack.c.l.b16 %v3306
      %v3347 = vunpack.c.l.b16 %v3307
      %v3348 = vunpack.c.l.b16 %v3308
      %v3349 = vunpack.c.l.b16 %v3309
      %v3350 = vunpack.c.l.b16 %v3310
      %v3351 = vunpack.c.l.b16 %v3311
      %v3352 = vunpack.c.l.b16 %v3312
      %v3353 = vunpack.c.l.b16 %v3313
      %v3354 = vunpack.c.l.b16 %v3314
      %v3355 = vunpack.c.l.b16 %v3315
      %v3356 = vunpack.c.l.b16 %v3316
      %v3357 = vunpack.c.l.b16 %v3317
      %v3358 = vunpack.c.l.b16 %v3318
      %v3359 = vunpack.c.l.b16 %v3319
      %v3360 = vunpack.c.l.b16 %v3320
      %v3361 = vpack.c.b16 %v3346, %v3345
      %v3362 = vpack.c.b16 %v3348, %v3347
      %v3363 = vpack.c.b16 %v3350, %v3349
      %v3364 = vpack.c.b16 %v3352, %v3351
      %v3365 = vpack.c.b16 %v3354, %v3353
      %v3366 = vpack.c.b16 %v3356, %v3355
      %v3367 = vpack.c.b16 %v3358, %v3357
      %v3368 = vpack.c.b16 %v3360, %v3359
      %3377 = vmatprep.subr.bf16.mxu0 0
      %3378 = vmatpush1.bf16.msra.mxu0 %v3361
      %3379 = vmatprep.subr.bf16.mxu0 0
      %3380 = vmatpush1.bf16.msra.mxu0 %v3362
      %3381 = vmatprep.subr.bf16.mxu0 0
      %3382 = vmatpush1.bf16.msra.mxu0 %v3363
      %3383 = vmatprep.subr.bf16.mxu0 0
      %3384 = vmatpush1.bf16.msra.mxu0 %v3364
      %3385 = vmatprep.subr.bf16.mxu0 0
      %3386 = vmatpush1.bf16.msra.mxu0 %v3365
      %3387 = vmatprep.subr.bf16.mxu0 0
      %3388 = vmatpush1.bf16.msra.mxu0 %v3366
      %3389 = vmatprep.subr.bf16.mxu0 0
      %3390 = vmatpush1.bf16.msra.mxu0 %v3367
      %3391 = vmatprep.subr.bf16.mxu0 0
      %3392 = vmatpush1.bf16.msra.mxu0 %v3368
      %3393 = vmatprep.subr.bf16.mxu0 0
      %3394 = vmatpush1.bf16.msra.mxu0 0
      %3395 = vmatprep.subr.bf16.mxu0 0
      %3396 = vmatpush1.bf16.msra.mxu0 0
      %3397 = vmatprep.subr.bf16.mxu0 0
      %3398 = vmatpush1.bf16.msra.mxu0 0
      %3399 = vmatprep.subr.bf16.mxu0 0
      %3400 = vmatpush1.bf16.msra.mxu0 0
      %3401 = vmatprep.subr.bf16.mxu0 0
      %3402 = vmatpush1.bf16.msra.mxu0 0
      %3403 = vmatprep.subr.bf16.mxu0 0
      %3404 = vmatpush1.bf16.msra.mxu0 0
      %3405 = vmatprep.subr.bf16.mxu0 0
      %3406 = vmatpush1.bf16.msra.mxu0 0
      %3407 = vmatprep.subr.bf16.mxu0 0
      %3408 = vmatpush1.bf16.msra.mxu0 0
      %3409 = vmatprep.mubr.bf16.mxu0 0
      %3410 = vmatmul.mubr.bf16.gmra.mrb[0].mxu0 %v1328
      %v3411 = vpop.f32.mrb[0].mxu0
      %v3412 = vadd.f32 %v3327, %v3411
      %v3413 = vpop.f32.mrb[0].mxu0
      %v3414 = vpop.f32.mrb[0].mxu0
      %v3415 = vadd.f32 %v3327, %v3414
      %v3416 = vpop.f32.mrb[0].mxu0
      %3417 = vdwg.mxu0
      %s3418 = scalar_lea.vmem %s879, 192
      %v3419 = vld [vmem:[%s3418] sm:$0xf]
      %v3420 = vld [vmem:[%s3418 + $0x4] sm:$0xf]
      %v3421 = vld [vmem:[%s3418 + $0x8] sm:$0xf]
      %v3422 = vld [vmem:[%s3418 + $0xc] sm:$0xf]
      %v3423 = vld [vmem:[%s3418 + $0x10] sm:$0xf]
      %v3424 = vld [vmem:[%s3418 + $0x14] sm:$0xf]
      %v3425 = vld [vmem:[%s3418 + $0x18] sm:$0xf]
      %v3426 = vld [vmem:[%s3418 + $0x1c] sm:$0xf]
      %v3427 = vld [vmem:[%s3418 + $0x20] sm:$0xf]
      %v3428 = vld [vmem:[%s3418 + $0x24] sm:$0xf]
      %v3429 = vld [vmem:[%s3418 + $0x28] sm:$0xf]
      %v3430 = vld [vmem:[%s3418 + $0x2c] sm:$0xf]
      %v3431 = vld [vmem:[%s3418 + $0x30] sm:$0xf]
      %v3432 = vld [vmem:[%s3418 + $0x34] sm:$0xf]
      %v3433 = vld [vmem:[%s3418 + $0x38] sm:$0xf]
      %v3434 = vld [vmem:[%s3418 + $0x3c] sm:$0xf]
      %s3435 = scalar_lea.vmem %s883, 3
      %v3436 = vld [vmem:[%s3435] sm:$0x1]
      %v3438 = vlaneseq
      %v3439 = vshrl.u32 %v3438, 7
      %v3440 = vsub.s32 0, %v3439
      %v3441 = vrot.slane %v3436, %v3440
      %v3459 = vunpack.c.l.b16 %v3419
      %v3460 = vunpack.c.l.b16 %v3420
      %v3461 = vunpack.c.l.b16 %v3421
      %v3462 = vunpack.c.l.b16 %v3422
      %v3463 = vunpack.c.l.b16 %v3423
      %v3464 = vunpack.c.l.b16 %v3424
      %v3465 = vunpack.c.l.b16 %v3425
      %v3466 = vunpack.c.l.b16 %v3426
      %v3467 = vunpack.c.l.b16 %v3427
      %v3468 = vunpack.c.l.b16 %v3428
      %v3469 = vunpack.c.l.b16 %v3429
      %v3470 = vunpack.c.l.b16 %v3430
      %v3471 = vunpack.c.l.b16 %v3431
      %v3472 = vunpack.c.l.b16 %v3432
      %v3473 = vunpack.c.l.b16 %v3433
      %v3474 = vunpack.c.l.b16 %v3434
      %v3475 = vpack.c.b16 %v3460, %v3459
      %v3476 = vpack.c.b16 %v3462, %v3461
      %v3477 = vpack.c.b16 %v3464, %v3463
      %v3478 = vpack.c.b16 %v3466, %v3465
      %v3479 = vpack.c.b16 %v3468, %v3467
      %v3480 = vpack.c.b16 %v3470, %v3469
      %v3481 = vpack.c.b16 %v3472, %v3471
      %v3482 = vpack.c.b16 %v3474, %v3473
      %3491 = vmatprep.subr.bf16.mxu0 0
      %3492 = vmatpush1.bf16.msra.mxu0 %v3475
      %3493 = vmatprep.subr.bf16.mxu0 0
      %3494 = vmatpush1.bf16.msra.mxu0 %v3476
      %3495 = vmatprep.subr.bf16.mxu0 0
      %3496 = vmatpush1.bf16.msra.mxu0 %v3477
      %3497 = vmatprep.subr.bf16.mxu0 0
      %3498 = vmatpush1.bf16.msra.mxu0 %v3478
      %3499 = vmatprep.subr.bf16.mxu0 0
      %3500 = vmatpush1.bf16.msra.mxu0 %v3479
      %3501 = vmatprep.subr.bf16.mxu0 0
      %3502 = vmatpush1.bf16.msra.mxu0 %v3480
      %3503 = vmatprep.subr.bf16.mxu0 0
      %3504 = vmatpush1.bf16.msra.mxu0 %v3481
      %3505 = vmatprep.subr.bf16.mxu0 0
      %3506 = vmatpush1.bf16.msra.mxu0 %v3482
      %3507 = vmatprep.subr.bf16.mxu0 0
      %3508 = vmatpush1.bf16.msra.mxu0 0
      %3509 = vmatprep.subr.bf16.mxu0 0
      %3510 = vmatpush1.bf16.msra.mxu0 0
      %3511 = vmatprep.subr.bf16.mxu0 0
      %3512 = vmatpush1.bf16.msra.mxu0 0
      %3513 = vmatprep.subr.bf16.mxu0 0
      %3514 = vmatpush1.bf16.msra.mxu0 0
      %3515 = vmatprep.subr.bf16.mxu0 0
      %3516 = vmatpush1.bf16.msra.mxu0 0
      %3517 = vmatprep.subr.bf16.mxu0 0
      %3518 = vmatpush1.bf16.msra.mxu0 0
      %3519 = vmatprep.subr.bf16.mxu0 0
      %3520 = vmatpush1.bf16.msra.mxu0 0
      %3521 = vmatprep.subr.bf16.mxu0 0
      %3522 = vmatpush1.bf16.msra.mxu0 0
      %3523 = vmatprep.mubr.bf16.mxu0 0
      %3524 = vmatmul.mubr.bf16.gmra.mrb[0].mxu0 %v1328
      %v3525 = vpop.f32.mrb[0].mxu0
      %v3526 = vadd.f32 %v3441, %v3525
      %v3527 = vpop.f32.mrb[0].mxu0
      %v3528 = vpop.f32.mrb[0].mxu0
      %v3529 = vadd.f32 %v3441, %v3528
      %v3530 = vpop.f32.mrb[0].mxu0
      %3531 = vdwg.mxu0
      %v3532 = vpack.c.bf16 %v3301, %v3298
      %v3533 = vpack.c.bf16 %v3415, %v3412
      %v3534 = vpack.c.bf16 %v3529, %v3526
      %v3536 = vsel %vm1668, %v3532, 0
      %v3539 = vsel %vm1668, %v3533, 0
      %3541 = vmatprep.subr.bf16.mxu0 0
      %3542 = vmatpush1.bf16.xpose.msra.mxu0 %v3539
      %3543 = vmatprep.subr.bf16.mxu0 0
      %3544 = vmatpush1.bf16.xpose.msra.mxu0 0
      %3545 = vmatprep.subr.bf16.mxu0 0
      %3546 = vmatpush1.bf16.xpose.msra.mxu0 0
      %3547 = vmatprep.subr.bf16.mxu0 0
      %3548 = vmatpush1.bf16.xpose.msra.mxu0 0
      %3549 = vmatprep.subr.bf16.mxu0 0
      %3550 = vmatpush1.bf16.xpose.msra.mxu0 0
      %3551 = vmatprep.subr.bf16.mxu0 0
      %3552 = vmatpush1.bf16.xpose.msra.mxu0 0
      %3553 = vmatprep.subr.bf16.mxu0 0
      %3554 = vmatpush1.bf16.xpose.msra.mxu0 0
      %3555 = vmatprep.subr.bf16.mxu0 0
      %3556 = vmatpush1.bf16.xpose.msra.mxu0 0
      %3557 = vmatprep.subr.bf16.mxu0 0
      %3558 = vmatpush1.bf16.xpose.msra.mxu0 0
      %3559 = vmatprep.subr.bf16.mxu0 0
      %3560 = vmatpush1.bf16.xpose.msra.mxu0 0
      %3561 = vmatprep.subr.bf16.mxu0 0
      %3562 = vmatpush1.bf16.xpose.msra.mxu0 0
      %3563 = vmatprep.subr.bf16.mxu0 0
      %3564 = vmatpush1.bf16.xpose.msra.mxu0 0
      %3565 = vmatprep.subr.bf16.mxu0 0
      %3566 = vmatpush1.bf16.xpose.msra.mxu0 0
      %3567 = vmatprep.subr.bf16.mxu0 0
      %3568 = vmatpush1.bf16.xpose.msra.mxu0 0
      %3569 = vmatprep.subr.bf16.mxu0 0
      %3570 = vmatpush1.bf16.xpose.msra.mxu0 0
      %3571 = vmatprep.subr.bf16.mxu0 0
      %3572 = vmatpush1.bf16.xpose.msra.mxu0 0
      %3573 = vmatprep.mubr.bf16.mxu0 0
      %3574 = vmatmul.mubr.bf16.gmra.mrb[0].mxu0 %v3536
      %v3575 = vpop.f32.mrb[0].mxu0
      %v3576 = vadd.f32 0.0, %v3575
      %v3577 = vpop.f32.mrb[0].mxu0
      %v3578 = vpop.f32.mrb[0].mxu0
      %v3579 = vpop.f32.mrb[0].mxu0
      %3580 = vdwg.mxu0
      %v3581 = vsel %vm1715, %v3576, -inf
      %3582 = vmax.xlane.f32.xlu0 %v3581
      %v3583 = vpop.xlane.xlu0 %3582
      %v3584 = vsub.f32 %v3576, %v3583
      %v3585 = vmul.f32 %v3584, 1.442695
      %v3586 = vpow.pop %v3585
      %v3587 = vsel %vm1715, %v3586, 0.0
      %3588 = vadd.xlane.f32.xlu0 %v3587
      %v3589 = vpop.xlane.xlu0 %3588
      %v3590 = vrcp.pop %v3589
      %v3591 = vmul.f32 %v3586, %v3590
      %v3592 = vpack.c.bf16 %v3591, %v3591
      %v3594 = vsel %vm1715, %v3592, 0
      %v3597 = vsel %vm1731, %v3534, 0
      %3599 = vmatprep.subr.bf16.mxu0 0
      %3600 = vmatpush1.bf16.msra.mxu0 %v3597
      %3601 = vmatprep.subr.bf16.mxu0 0
      %3602 = vmatpush1.bf16.msra.mxu0 0
      %3603 = vmatprep.subr.bf16.mxu0 0
      %3604 = vmatpush1.bf16.msra.mxu0 0
      %3605 = vmatprep.subr.bf16.mxu0 0
      %3606 = vmatpush1.bf16.msra.mxu0 0
      %3607 = vmatprep.subr.bf16.mxu0 0
      %3608 = vmatpush1.bf16.msra.mxu0 0
      %3609 = vmatprep.subr.bf16.mxu0 0
      %3610 = vmatpush1.bf16.msra.mxu0 0
      %3611 = vmatprep.subr.bf16.mxu0 0
      %3612 = vmatpush1.bf16.msra.mxu0 0
      %3613 = vmatprep.subr.bf16.mxu0 0
      %3614 = vmatpush1.bf16.msra.mxu0 0
      %3615 = vmatprep.subr.bf16.mxu0 0
      %3616 = vmatpush1.bf16.msra.mxu0 0
      %3617 = vmatprep.subr.bf16.mxu0 0
      %3618 = vmatpush1.bf16.msra.mxu0 0
      %3619 = vmatprep.subr.bf16.mxu0 0
      %3620 = vmatpush1.bf16.msra.mxu0 0
      %3621 = vmatprep.subr.bf16.mxu0 0
      %3622 = vmatpush1.bf16.msra.mxu0 0
      %3623 = vmatprep.subr.bf16.mxu0 0
      %3624 = vmatpush1.bf16.msra.mxu0 0
      %3625 = vmatprep.subr.bf16.mxu0 0
      %3626 = vmatpush1.bf16.msra.mxu0 0
      %3627 = vmatprep.subr.bf16.mxu0 0
      %3628 = vmatpush1.bf16.msra.mxu0 0
      %3629 = vmatprep.subr.bf16.mxu0 0
      %3630 = vmatpush1.bf16.msra.mxu0 0
      %3631 = vmatprep.mubr.bf16.mxu0 0
      %3632 = vmatmul.mubr.bf16.gmra.mrb[0].mxu0 %v3594
      %v3633 = vpop.f32.mrb[0].mxu0
      %v3634 = vadd.f32 0.0, %v3633
      %v3635 = vpop.f32.mrb[0].mxu0
      %v3636 = vpop.f32.mrb[0].mxu0
      %v3637 = vpop.f32.mrb[0].mxu0
      %3638 = vdwg.mxu0
      %v3640 = vrot.slane %v3532, 4
      %v3642 = vrot.slane %v3533, 4
      %v3644 = vsel %vm1668, %v3640, 0
      %v3647 = vsel %vm1668, %v3642, 0
      %3649 = vmatprep.subr.bf16.mxu0 0
      %3650 = vmatpush1.bf16.xpose.msra.mxu0 %v3647
      %3651 = vmatprep.subr.bf16.mxu0 0
      %3652 = vmatpush1.bf16.xpose.msra.mxu0 0
      %3653 = vmatprep.subr.bf16.mxu0 0
      %3654 = vmatpush1.bf16.xpose.msra.mxu0 0
      %3655 = vmatprep.subr.bf16.mxu0 0
      %3656 = vmatpush1.bf16.xpose.msra.mxu0 0
      %3657 = vmatprep.subr.bf16.mxu0 0
      %3658 = vmatpush1.bf16.xpose.msra.mxu0 0
      %3659 = vmatprep.subr.bf16.mxu0 0
      %3660 = vmatpush1.bf16.xpose.msra.mxu0 0
      %3661 = vmatprep.subr.bf16.mxu0 0
      %3662 = vmatpush1.bf16.xpose.msra.mxu0 0
      %3663 = vmatprep.subr.bf16.mxu0 0
      %3664 = vmatpush1.bf16.xpose.msra.mxu0 0
      %3665 = vmatprep.subr.bf16.mxu0 0
      %3666 = vmatpush1.bf16.xpose.msra.mxu0 0
      %3667 = vmatprep.subr.bf16.mxu0 0
      %3668 = vmatpush1.bf16.xpose.msra.mxu0 0
      %3669 = vmatprep.subr.bf16.mxu0 0
      %3670 = vmatpush1.bf16.xpose.msra.mxu0 0
      %3671 = vmatprep.subr.bf16.mxu0 0
      %3672 = vmatpush1.bf16.xpose.msra.mxu0 0
      %3673 = vmatprep.subr.bf16.mxu0 0
      %3674 = vmatpush1.bf16.xpose.msra.mxu0 0
      %3675 = vmatprep.subr.bf16.mxu0 0
      %3676 = vmatpush1.bf16.xpose.msra.mxu0 0
      %3677 = vmatprep.subr.bf16.mxu0 0
      %3678 = vmatpush1.bf16.xpose.msra.mxu0 0
      %3679 = vmatprep.subr.bf16.mxu0 0
      %3680 = vmatpush1.bf16.xpose.msra.mxu0 0
      %3681 = vmatprep.mubr.bf16.mxu0 0
      %3682 = vmatmul.mubr.bf16.gmra.mrb[0].mxu0 %v3644
      %v3683 = vpop.f32.mrb[0].mxu0
      %v3684 = vadd.f32 0.0, %v3683
      %v3685 = vpop.f32.mrb[0].mxu0
      %v3686 = vpop.f32.mrb[0].mxu0
      %v3687 = vpop.f32.mrb[0].mxu0
      %3688 = vdwg.mxu0
      %v3689 = vsel %vm1715, %v3684, -inf
      %3690 = vmax.xlane.f32.xlu0 %v3689
      %v3691 = vpop.xlane.xlu0 %3690
      %v3692 = vsub.f32 %v3684, %v3691
      %v3693 = vmul.f32 %v3692, 1.442695
      %v3694 = vpow.pop %v3693
      %v3695 = vsel %vm1715, %v3694, 0.0
      %3696 = vadd.xlane.f32.xlu0 %v3695
      %v3697 = vpop.xlane.xlu0 %3696
      %v3698 = vrcp.pop %v3697
      %v3699 = vmul.f32 %v3694, %v3698
      %v3700 = vpack.c.bf16 %v3699, %v3699
      %v3702 = vrot.slane %v3534, 4
      %v3704 = vsel %vm1715, %v3700, 0
      %v3707 = vsel %vm1731, %v3702, 0
      %3709 = vmatprep.subr.bf16.mxu0 0
      %3710 = vmatpush1.bf16.msra.mxu0 %v3707
      %3711 = vmatprep.subr.bf16.mxu0 0
      %3712 = vmatpush1.bf16.msra.mxu0 0
      %3713 = vmatprep.subr.bf16.mxu0 0
      %3714 = vmatpush1.bf16.msra.mxu0 0
      %3715 = vmatprep.subr.bf16.mxu0 0
      %3716 = vmatpush1.bf16.msra.mxu0 0
      %3717 = vmatprep.subr.bf16.mxu0 0
      %3718 = vmatpush1.bf16.msra.mxu0 0
      %3719 = vmatprep.subr.bf16.mxu0 0
      %3720 = vmatpush1.bf16.msra.mxu0 0
      %3721 = vmatprep.subr.bf16.mxu0 0
      %3722 = vmatpush1.bf16.msra.mxu0 0
      %3723 = vmatprep.subr.bf16.mxu0 0
      %3724 = vmatpush1.bf16.msra.mxu0 0
      %3725 = vmatprep.subr.bf16.mxu0 0
      %3726 = vmatpush1.bf16.msra.mxu0 0
      %3727 = vmatprep.subr.bf16.mxu0 0
      %3728 = vmatpush1.bf16.msra.mxu0 0
      %3729 = vmatprep.subr.bf16.mxu0 0
      %3730 = vmatpush1.bf16.msra.mxu0 0
      %3731 = vmatprep.subr.bf16.mxu0 0
      %3732 = vmatpush1.bf16.msra.mxu0 0
      %3733 = vmatprep.subr.bf16.mxu0 0
      %3734 = vmatpush1.bf16.msra.mxu0 0
      %3735 = vmatprep.subr.bf16.mxu0 0
      %3736 = vmatpush1.bf16.msra.mxu0 0
      %3737 = vmatprep.subr.bf16.mxu0 0
      %3738 = vmatpush1.bf16.msra.mxu0 0
      %3739 = vmatprep.subr.bf16.mxu0 0
      %3740 = vmatpush1.bf16.msra.mxu0 0
      %3741 = vmatprep.mubr.bf16.mxu0 0
      %3742 = vmatmul.mubr.bf16.gmra.mrb[0].mxu0 %v3704
      %v3743 = vpop.f32.mrb[0].mxu0
      %v3744 = vadd.f32 0.0, %v3743
      %v3745 = vpop.f32.mrb[0].mxu0
      %v3746 = vpop.f32.mrb[0].mxu0
      %v3747 = vpop.f32.mrb[0].mxu0
      %3748 = vdwg.mxu0
      %v3749 = vpack.c.bf16 %v3744, %v3634
      %s3750 = scalar_lea.vmem %s888, 48
      %v3751 = vld [vmem:[%s3750] sm:$0xf]
      %v3752 = vld [vmem:[%s3750 + $0x4] sm:$0xf]
      %v3753 = vld [vmem:[%s3750 + $0x8] sm:$0xf]
      %v3754 = vld [vmem:[%s3750 + $0xc] sm:$0xf]
      %v3759 = vunpack.c.l.b16 %v3751
      %v3760 = vunpack.c.l.b16 %v3752
      %v3761 = vunpack.c.l.b16 %v3753
      %v3762 = vunpack.c.l.b16 %v3754
      %v3763 = vpack.c.b16 %v3760, %v3759
      %v3764 = vpack.c.b16 %v3762, %v3761
      %v3768 = vsel %vm1668, %v3749, 0
      %3770 = vmatprep.subr.bf16.mxu0 0
      %3771 = vmatpush1.bf16.msra.mxu0 %v3763
      %3772 = vmatprep.subr.bf16.mxu0 0
      %3773 = vmatpush1.bf16.msra.mxu0 %v3764
      %3774 = vmatprep.subr.bf16.mxu0 0
      %3775 = vmatpush1.bf16.msra.mxu0 0
      %3776 = vmatprep.subr.bf16.mxu0 0
      %3777 = vmatpush1.bf16.msra.mxu0 0
      %3778 = vmatprep.subr.bf16.mxu0 0
      %3779 = vmatpush1.bf16.msra.mxu0 0
      %3780 = vmatprep.subr.bf16.mxu0 0
      %3781 = vmatpush1.bf16.msra.mxu0 0
      %3782 = vmatprep.subr.bf16.mxu0 0
      %3783 = vmatpush1.bf16.msra.mxu0 0
      %3784 = vmatprep.subr.bf16.mxu0 0
      %3785 = vmatpush1.bf16.msra.mxu0 0
      %3786 = vmatprep.subr.bf16.mxu0 0
      %3787 = vmatpush1.bf16.msra.mxu0 0
      %3788 = vmatprep.subr.bf16.mxu0 0
      %3789 = vmatpush1.bf16.msra.mxu0 0
      %3790 = vmatprep.subr.bf16.mxu0 0
      %3791 = vmatpush1.bf16.msra.mxu0 0
      %3792 = vmatprep.subr.bf16.mxu0 0
      %3793 = vmatpush1.bf16.msra.mxu0 0
      %3794 = vmatprep.subr.bf16.mxu0 0
      %3795 = vmatpush1.bf16.msra.mxu0 0
      %3796 = vmatprep.subr.bf16.mxu0 0
      %3797 = vmatpush1.bf16.msra.mxu0 0
      %3798 = vmatprep.subr.bf16.mxu0 0
      %3799 = vmatpush1.bf16.msra.mxu0 0
      %3800 = vmatprep.subr.bf16.mxu0 0
      %3801 = vmatpush1.bf16.msra.mxu0 0
      %3802 = vmatprep.mubr.bf16.mxu0 0
      %3803 = vmatmul.mubr.bf16.gmra.mrb[0].mxu0 %v3768
      %v3804 = vpop.f32.mrb[0].mxu0
      %v3805 = vadd.f32 0.0, %v3804
      %v3806 = vpop.f32.mrb[0].mxu0
      %v3807 = vpop.f32.mrb[0].mxu0
      %v3808 = vadd.f32 0.0, %v3807
      %v3809 = vpop.f32.mrb[0].mxu0
      %3810 = vdwg.mxu0
      %v3811 = vadd.f32 %v3188, %v3805
      %v3812 = vadd.f32 %v3189, %v3808
      %v3813 = vld [vmem:[%s891] sm:$0x1]
      %v3815 = vlaneseq
      %v3816 = vshrl.u32 %v3815, 7
      %v3817 = vsub.s32 0, %v3816
      %v3818 = vrot.slane %v3813, %v3817
      %v3820 = vadd.f32 %v3811, %v3818
      %v3821 = vadd.f32 %v3812, %v3818
      %v3822 = vmul.f32 %v3820, 0.1
      %v3823 = vmul.f32 %v3821, 0.1
      %v3824 = vadd.f32 %v1326, %v3822
      %v3825 = vadd.f32 %v1327, %v3823
      %v3826 = vpack.c.bf16 %v3825, %v3824
      %v3827 = vld [vmem:[%s896] sm:$0xff]
      %v3828 = vld [vmem:[%s896 + $0x8] sm:$0xff]
      %v3829 = vld [vmem:[%s896 + $0x10] sm:$0xff]
      %v3830 = vld [vmem:[%s896 + $0x18] sm:$0xff]
      %v3831 = vld [vmem:[%s896 + $0x20] sm:$0xff]
      %v3832 = vld [vmem:[%s896 + $0x28] sm:$0xff]
      %v3833 = vld [vmem:[%s896 + $0x30] sm:$0xff]
      %v3834 = vld [vmem:[%s896 + $0x38] sm:$0xff]
      %v3835 = vld [vmem:[%s896 + $0x40] sm:$0xff]
      %v3836 = vld [vmem:[%s896 + $0x48] sm:$0xff]
      %v3837 = vld [vmem:[%s896 + $0x50] sm:$0xff]
      %v3838 = vld [vmem:[%s896 + $0x58] sm:$0xff]
      %v3839 = vld [vmem:[%s896 + $0x60] sm:$0xff]
      %v3840 = vld [vmem:[%s896 + $0x68] sm:$0xff]
      %v3841 = vld [vmem:[%s896 + $0x70] sm:$0xff]
      %v3842 = vld [vmem:[%s896 + $0x78] sm:$0xff]
      %v3843 = vld [vmem:[%s900] sm:$0x3]
      %v3845 = vlaneseq
      %v3846 = vshrl.u32 %v3845, 7
      %v3847 = vsub.s32 0, %v3846
      %v3848 = vrot.slane %v3843, %v3847
      %v3849 = vlaneseq
      %v3850 = vshrl.u32 %v3849, 7
      %v3851 = vsub.s32 1, %v3850
      %v3852 = vrot.slane %v3843, %v3851
      %v3871 = vunpack.c.l.b16 %v3827
      %v3872 = vunpack.c.h.b16 %v3827
      %v3873 = vunpack.c.l.b16 %v3828
      %v3874 = vunpack.c.h.b16 %v3828
      %v3875 = vunpack.c.l.b16 %v3829
      %v3876 = vunpack.c.h.b16 %v3829
      %v3877 = vunpack.c.l.b16 %v3830
      %v3878 = vunpack.c.h.b16 %v3830
      %v3879 = vunpack.c.l.b16 %v3831
      %v3880 = vunpack.c.h.b16 %v3831
      %v3881 = vunpack.c.l.b16 %v3832
      %v3882 = vunpack.c.h.b16 %v3832
      %v3883 = vunpack.c.l.b16 %v3833
      %v3884 = vunpack.c.h.b16 %v3833
      %v3885 = vunpack.c.l.b16 %v3834
      %v3886 = vunpack.c.h.b16 %v3834
      %v3887 = vunpack.c.l.b16 %v3835
      %v3888 = vunpack.c.h.b16 %v3835
      %v3889 = vunpack.c.l.b16 %v3836
      %v3890 = vunpack.c.h.b16 %v3836
      %v3891 = vunpack.c.l.b16 %v3837
      %v3892 = vunpack.c.h.b16 %v3837
      %v3893 = vunpack.c.l.b16 %v3838
      %v3894 = vunpack.c.h.b16 %v3838
      %v3895 = vunpack.c.l.b16 %v3839
      %v3896 = vunpack.c.h.b16 %v3839
      %v3897 = vunpack.c.l.b16 %v3840
      %v3898 = vunpack.c.h.b16 %v3840
      %v3899 = vunpack.c.l.b16 %v3841
      %v3900 = vunpack.c.h.b16 %v3841
      %v3901 = vunpack.c.l.b16 %v3842
      %v3902 = vunpack.c.h.b16 %v3842
      %v3903 = vpack.c.b16 %v3873, %v3871
      %v3904 = vpack.c.b16 %v3874, %v3872
      %v3905 = vpack.c.b16 %v3877, %v3875
      %v3906 = vpack.c.b16 %v3878, %v3876
      %v3907 = vpack.c.b16 %v3881, %v3879
      %v3908 = vpack.c.b16 %v3882, %v3880
      %v3909 = vpack.c.b16 %v3885, %v3883
      %v3910 = vpack.c.b16 %v3886, %v3884
      %v3911 = vpack.c.b16 %v3889, %v3887
      %v3912 = vpack.c.b16 %v3890, %v3888
      %v3913 = vpack.c.b16 %v3893, %v3891
      %v3914 = vpack.c.b16 %v3894, %v3892
      %v3915 = vpack.c.b16 %v3897, %v3895
      %v3916 = vpack.c.b16 %v3898, %v3896
      %v3917 = vpack.c.b16 %v3901, %v3899
      %v3918 = vpack.c.b16 %v3902, %v3900
      %3935 = vmatprep.subr.bf16.mxu0 %v3904
      %3936 = vmatpush1.bf16.msra.mxu0 %v3903
      %3937 = vmatprep.subr.bf16.mxu0 %v3906
      %3938 = vmatpush1.bf16.msra.mxu0 %v3905
      %3939 = vmatprep.subr.bf16.mxu0 %v3908
      %3940 = vmatpush1.bf16.msra.mxu0 %v3907
      %3941 = vmatprep.subr.bf16.mxu0 %v3910
      %3942 = vmatpush1.bf16.msra.mxu0 %v3909
      %3943 = vmatprep.subr.bf16.mxu0 %v3912
      %3944 = vmatpush1.bf16.msra.mxu0 %v3911
      %3945 = vmatprep.subr.bf16.mxu0 %v3914
      %3946 = vmatpush1.bf16.msra.mxu0 %v3913
      %3947 = vmatprep.subr.bf16.mxu0 %v3916
      %3948 = vmatpush1.bf16.msra.mxu0 %v3915
      %3949 = vmatprep.subr.bf16.mxu0 %v3918
      %3950 = vmatpush1.bf16.msra.mxu0 %v3917
      %3951 = vmatprep.subr.bf16.mxu0 0
      %3952 = vmatpush1.bf16.msra.mxu0 0
      %3953 = vmatprep.subr.bf16.mxu0 0
      %3954 = vmatpush1.bf16.msra.mxu0 0
      %3955 = vmatprep.subr.bf16.mxu0 0
      %3956 = vmatpush1.bf16.msra.mxu0 0
      %3957 = vmatprep.subr.bf16.mxu0 0
      %3958 = vmatpush1.bf16.msra.mxu0 0
      %3959 = vmatprep.subr.bf16.mxu0 0
      %3960 = vmatpush1.bf16.msra.mxu0 0
      %3961 = vmatprep.subr.bf16.mxu0 0
      %3962 = vmatpush1.bf16.msra.mxu0 0
      %3963 = vmatprep.subr.bf16.mxu0 0
      %3964 = vmatpush1.bf16.msra.mxu0 0
      %3965 = vmatprep.subr.bf16.mxu0 0
      %3966 = vmatpush1.bf16.msra.mxu0 0
      %3967 = vmatprep.mubr.bf16.mxu0 0
      %3968 = vmatmul.mubr.bf16.gmra.mrb[0].mxu0 %v3826
      %v3969 = vpop.f32.mrb[0].mxu0
      %v3970 = vadd.f32 %v3848, %v3969
      %v3971 = vpop.f32.mrb[0].mxu0
      %v3972 = vadd.f32 %v3852, %v3971
      %v3973 = vpop.f32.mrb[0].mxu0
      %v3974 = vadd.f32 %v3848, %v3973
      %v3975 = vpop.f32.mrb[0].mxu0
      %v3976 = vadd.f32 %v3852, %v3975
      %3977 = vdwg.mxu0
      %v3978 = vmax.f32 %v3970, 0.0
      %v3979 = vmax.f32 %v3972, 0.0
      %v3980 = vmax.f32 %v3974, 0.0
      %v3981 = vmax.f32 %v3976, 0.0
      %v3982 = vpack.c.bf16 %v3980, %v3978
      %v3983 = vpack.c.bf16 %v3981, %v3979
      %v3984 = vld [vmem:[%s905] sm:$0xf]
      %v3985 = vld [vmem:[%s905 + $0x4] sm:$0xf]
      %v3986 = vld [vmem:[%s905 + $0x8] sm:$0xf]
      %v3987 = vld [vmem:[%s905 + $0xc] sm:$0xf]
      %v3988 = vld [vmem:[%s905 + $0x10] sm:$0xf]
      %v3989 = vld [vmem:[%s905 + $0x14] sm:$0xf]
      %v3990 = vld [vmem:[%s905 + $0x18] sm:$0xf]
      %v3991 = vld [vmem:[%s905 + $0x1c] sm:$0xf]
      %v3992 = vld [vmem:[%s905 + $0x20] sm:$0xf]
      %v3993 = vld [vmem:[%s905 + $0x24] sm:$0xf]
      %v3994 = vld [vmem:[%s905 + $0x28] sm:$0xf]
      %v3995 = vld [vmem:[%s905 + $0x2c] sm:$0xf]
      %v3996 = vld [vmem:[%s905 + $0x30] sm:$0xf]
      %v3997 = vld [vmem:[%s905 + $0x34] sm:$0xf]
      %v3998 = vld [vmem:[%s905 + $0x38] sm:$0xf]
      %v3999 = vld [vmem:[%s905 + $0x3c] sm:$0xf]
      %v4000 = vld [vmem:[%s905 + $0x40] sm:$0xf]
      %v4001 = vld [vmem:[%s905 + $0x44] sm:$0xf]
      %v4002 = vld [vmem:[%s905 + $0x48] sm:$0xf]
      %v4003 = vld [vmem:[%s905 + $0x4c] sm:$0xf]
      %v4004 = vld [vmem:[%s905 + $0x50] sm:$0xf]
      %v4005 = vld [vmem:[%s905 + $0x54] sm:$0xf]
      %v4006 = vld [vmem:[%s905 + $0x58] sm:$0xf]
      %v4007 = vld [vmem:[%s905 + $0x5c] sm:$0xf]
      %v4008 = vld [vmem:[%s905 + $0x60] sm:$0xf]
      %v4009 = vld [vmem:[%s905 + $0x64] sm:$0xf]
      %v4010 = vld [vmem:[%s905 + $0x68] sm:$0xf]
      %v4011 = vld [vmem:[%s905 + $0x6c] sm:$0xf]
      %v4012 = vld [vmem:[%s905 + $0x70] sm:$0xf]
      %v4013 = vld [vmem:[%s905 + $0x74] sm:$0xf]
      %v4014 = vld [vmem:[%s905 + $0x78] sm:$0xf]
      %v4015 = vld [vmem:[%s905 + $0x7c] sm:$0xf]
      %v4016 = vld [vmem:[%s908] sm:$0x1]
      %v4018 = vlaneseq
      %v4019 = vshrl.u32 %v4018, 7
      %v4020 = vsub.s32 0, %v4019
      %v4021 = vrot.slane %v4016, %v4020
      %v4055 = vunpack.c.l.b16 %v3984
      %v4056 = vunpack.c.l.b16 %v3985
      %v4057 = vunpack.c.l.b16 %v3986
      %v4058 = vunpack.c.l.b16 %v3987
      %v4059 = vunpack.c.l.b16 %v3988
      %v4060 = vunpack.c.l.b16 %v3989
      %v4061 = vunpack.c.l.b16 %v3990
      %v4062 = vunpack.c.l.b16 %v3991
      %v4063 = vunpack.c.l.b16 %v3992
      %v4064 = vunpack.c.l.b16 %v3993
      %v4065 = vunpack.c.l.b16 %v3994
      %v4066 = vunpack.c.l.b16 %v3995
      %v4067 = vunpack.c.l.b16 %v3996
      %v4068 = vunpack.c.l.b16 %v3997
      %v4069 = vunpack.c.l.b16 %v3998
      %v4070 = vunpack.c.l.b16 %v3999
      %v4071 = vunpack.c.l.b16 %v4000
      %v4072 = vunpack.c.l.b16 %v4001
      %v4073 = vunpack.c.l.b16 %v4002
      %v4074 = vunpack.c.l.b16 %v4003
      %v4075 = vunpack.c.l.b16 %v4004
      %v4076 = vunpack.c.l.b16 %v4005
      %v4077 = vunpack.c.l.b16 %v4006
      %v4078 = vunpack.c.l.b16 %v4007
      %v4079 = vunpack.c.l.b16 %v4008
      %v4080 = vunpack.c.l.b16 %v4009
      %v4081 = vunpack.c.l.b16 %v4010
      %v4082 = vunpack.c.l.b16 %v4011
      %v4083 = vunpack.c.l.b16 %v4012
      %v4084 = vunpack.c.l.b16 %v4013
      %v4085 = vunpack.c.l.b16 %v4014
      %v4086 = vunpack.c.l.b16 %v4015
      %v4087 = vpack.c.b16 %v4056, %v4055
      %v4088 = vpack.c.b16 %v4058, %v4057
      %v4089 = vpack.c.b16 %v4060, %v4059
      %v4090 = vpack.c.b16 %v4062, %v4061
      %v4091 = vpack.c.b16 %v4064, %v4063
      %v4092 = vpack.c.b16 %v4066, %v4065
      %v4093 = vpack.c.b16 %v4068, %v4067
      %v4094 = vpack.c.b16 %v4070, %v4069
      %v4095 = vpack.c.b16 %v4072, %v4071
      %v4096 = vpack.c.b16 %v4074, %v4073
      %v4097 = vpack.c.b16 %v4076, %v4075
      %v4098 = vpack.c.b16 %v4078, %v4077
      %v4099 = vpack.c.b16 %v4080, %v4079
      %v4100 = vpack.c.b16 %v4082, %v4081
      %v4101 = vpack.c.b16 %v4084, %v4083
      %v4102 = vpack.c.b16 %v4086, %v4085
      %4119 = vmatprep.subr.bf16.mxu0 0
      %4120 = vmatpush1.bf16.msra.mxu0 %v4087
      %4121 = vmatprep.subr.bf16.mxu0 0
      %4122 = vmatpush1.bf16.msra.mxu0 %v4088
      %4123 = vmatprep.subr.bf16.mxu0 0
      %4124 = vmatpush1.bf16.msra.mxu0 %v4089
      %4125 = vmatprep.subr.bf16.mxu0 0
      %4126 = vmatpush1.bf16.msra.mxu0 %v4090
      %4127 = vmatprep.subr.bf16.mxu0 0
      %4128 = vmatpush1.bf16.msra.mxu0 %v4091
      %4129 = vmatprep.subr.bf16.mxu0 0
      %4130 = vmatpush1.bf16.msra.mxu0 %v4092
      %4131 = vmatprep.subr.bf16.mxu0 0
      %4132 = vmatpush1.bf16.msra.mxu0 %v4093
      %4133 = vmatprep.subr.bf16.mxu0 0
      %4134 = vmatpush1.bf16.msra.mxu0 %v4094
      %4135 = vmatprep.subr.bf16.mxu0 0
      %4136 = vmatpush1.bf16.msra.mxu0 %v4095
      %4137 = vmatprep.subr.bf16.mxu0 0
      %4138 = vmatpush1.bf16.msra.mxu0 %v4096
      %4139 = vmatprep.subr.bf16.mxu0 0
      %4140 = vmatpush1.bf16.msra.mxu0 %v4097
      %4141 = vmatprep.subr.bf16.mxu0 0
      %4142 = vmatpush1.bf16.msra.mxu0 %v4098
      %4143 = vmatprep.subr.bf16.mxu0 0
      %4144 = vmatpush1.bf16.msra.mxu0 %v4099
      %4145 = vmatprep.subr.bf16.mxu0 0
      %4146 = vmatpush1.bf16.msra.mxu0 %v4100
      %4147 = vmatprep.subr.bf16.mxu0 0
      %4148 = vmatpush1.bf16.msra.mxu0 %v4101
      %4149 = vmatprep.subr.bf16.mxu0 0
      %4150 = vmatpush1.bf16.msra.mxu0 %v4102
      %4151 = vmatprep.mubr.bf16.mxu0 %v3983
      %4152 = vmatmul.mubr.bf16.gmra.mrb[0].mxu0 %v3982
      %v4153 = vpop.f32.mrb[0].mxu0
      %v4154 = vadd.f32 %v4021, %v4153
      %v4155 = vpop.f32.mrb[0].mxu0
      %v4156 = vpop.f32.mrb[0].mxu0
      %v4157 = vadd.f32 %v4021, %v4156
      %v4158 = vpop.f32.mrb[0].mxu0
      %4159 = vdwg.mxu0
      %v4160 = vmul.f32 %v4154, 0.1
      %v4161 = vmul.f32 %v4157, 0.1
      %v4162 = vadd.f32 %v3824, %v4160
      %v4163 = vadd.f32 %v3825, %v4161
      %4164 = vst [vmem:[#allocation2] sm:$0xff] %v4162
      %4165 = vst [vmem:[#allocation2 + $0x8] sm:$0xff] %v4163
      %p4166 = scmp.eq.s32.totalorder %s38, 1
      // Predicated region
      $region113: #{stransformers_forward.1} parent=107 // pred_check
        %p4167 = pneg %p4166
      $region114: #{stransformers_forward.1} parent=107 // pred_check_branch
        %4169 = sbr.rel (%p4167) target = $region116
      $region115: #{stransformers_forward.1} parent=107 // pred_region
        %v4170 = vmax.f32 %v4162, 0.0
        %v4171 = vmax.f32 %v4163, 0.0
        %v4172 = vpack.c.bf16 %v4171, %v4170
        %v4173 = vld [vmem:[%s20] sm:$0xf]
        %v4174 = vld [vmem:[%s20 + $0x4] sm:$0xf]
        %v4175 = vld [vmem:[%s20 + $0x8] sm:$0xf]
        %v4176 = vld [vmem:[%s20 + $0xc] sm:$0xf]
        %v4177 = vld [vmem:[%s20 + $0x10] sm:$0xf]
        %v4178 = vld [vmem:[%s20 + $0x14] sm:$0xf]
        %v4179 = vld [vmem:[%s20 + $0x18] sm:$0xf]
        %v4180 = vld [vmem:[%s20 + $0x1c] sm:$0xf]
        %v4181 = vld [vmem:[%s20 + $0x20] sm:$0xf]
        %v4182 = vld [vmem:[%s20 + $0x24] sm:$0xf]
        %v4183 = vld [vmem:[%s20 + $0x28] sm:$0xf]
        %v4184 = vld [vmem:[%s20 + $0x2c] sm:$0xf]
        %v4185 = vld [vmem:[%s20 + $0x30] sm:$0xf]
        %v4186 = vld [vmem:[%s20 + $0x34] sm:$0xf]
        %v4187 = vld [vmem:[%s20 + $0x38] sm:$0xf]
        %v4188 = vld [vmem:[%s20 + $0x3c] sm:$0xf]
        %v4189 = vld [vmem:[%s21] sm:$0x1]
        %v4191 = vlaneseq
        %v4192 = vshrl.u32 %v4191, 7
        %v4193 = vsub.s32 0, %v4192
        %v4194 = vrot.slane %v4189, %v4193
        %v4212 = vunpack.c.l.b16 %v4173
        %v4213 = vunpack.c.l.b16 %v4174
        %v4214 = vunpack.c.l.b16 %v4175
        %v4215 = vunpack.c.l.b16 %v4176
        %v4216 = vunpack.c.l.b16 %v4177
        %v4217 = vunpack.c.l.b16 %v4178
        %v4218 = vunpack.c.l.b16 %v4179
        %v4219 = vunpack.c.l.b16 %v4180
        %v4220 = vunpack.c.l.b16 %v4181
        %v4221 = vunpack.c.l.b16 %v4182
        %v4222 = vunpack.c.l.b16 %v4183
        %v4223 = vunpack.c.l.b16 %v4184
        %v4224 = vunpack.c.l.b16 %v4185
        %v4225 = vunpack.c.l.b16 %v4186
        %v4226 = vunpack.c.l.b16 %v4187
        %v4227 = vunpack.c.l.b16 %v4188
        %v4228 = vpack.c.b16 %v4213, %v4212
        %v4229 = vpack.c.b16 %v4215, %v4214
        %v4230 = vpack.c.b16 %v4217, %v4216
        %v4231 = vpack.c.b16 %v4219, %v4218
        %v4232 = vpack.c.b16 %v4221, %v4220
        %v4233 = vpack.c.b16 %v4223, %v4222
        %v4234 = vpack.c.b16 %v4225, %v4224
        %v4235 = vpack.c.b16 %v4227, %v4226
        %4244 = vmatprep.subr.bf16.mxu0 0
        %4245 = vmatpush1.bf16.msra.mxu0 %v4228
        %4246 = vmatprep.subr.bf16.mxu0 0
        %4247 = vmatpush1.bf16.msra.mxu0 %v4229
        %4248 = vmatprep.subr.bf16.mxu0 0
        %4249 = vmatpush1.bf16.msra.mxu0 %v4230
        %4250 = vmatprep.subr.bf16.mxu0 0
        %4251 = vmatpush1.bf16.msra.mxu0 %v4231
        %4252 = vmatprep.subr.bf16.mxu0 0
        %4253 = vmatpush1.bf16.msra.mxu0 %v4232
        %4254 = vmatprep.subr.bf16.mxu0 0
        %4255 = vmatpush1.bf16.msra.mxu0 %v4233
        %4256 = vmatprep.subr.bf16.mxu0 0
        %4257 = vmatpush1.bf16.msra.mxu0 %v4234
        %4258 = vmatprep.subr.bf16.mxu0 0
        %4259 = vmatpush1.bf16.msra.mxu0 %v4235
        %4260 = vmatprep.subr.bf16.mxu0 0
        %4261 = vmatpush1.bf16.msra.mxu0 0
        %4262 = vmatprep.subr.bf16.mxu0 0
        %4263 = vmatpush1.bf16.msra.mxu0 0
        %4264 = vmatprep.subr.bf16.mxu0 0
        %4265 = vmatpush1.bf16.msra.mxu0 0
        %4266 = vmatprep.subr.bf16.mxu0 0
        %4267 = vmatpush1.bf16.msra.mxu0 0
        %4268 = vmatprep.subr.bf16.mxu0 0
        %4269 = vmatpush1.bf16.msra.mxu0 0
        %4270 = vmatprep.subr.bf16.mxu0 0
        %4271 = vmatpush1.bf16.msra.mxu0 0
        %4272 = vmatprep.subr.bf16.mxu0 0
        %4273 = vmatpush1.bf16.msra.mxu0 0
        %4274 = vmatprep.subr.bf16.mxu0 0
        %4275 = vmatpush1.bf16.msra.mxu0 0
        %4276 = vmatprep.mubr.bf16.mxu0 0
        %4277 = vmatmul.mubr.bf16.gmra.mrb[0].mxu0 %v4172
        %v4278 = vpop.f32.mrb[0].mxu0
        %v4279 = vadd.f32 %v4194, %v4278
        %v4280 = vpop.f32.mrb[0].mxu0
        %v4281 = vpop.f32.mrb[0].mxu0
        %v4282 = vadd.f32 %v4194, %v4281
        %v4283 = vpop.f32.mrb[0].mxu0
        %4284 = vdwg.mxu0
        %vm4285 = vcmask 31744
        %v4286 = vsel %vm4285, %v4279, -inf
        %4287 = vmax.xlane.f32.xlu0 %v4286
        %v4288 = vpop.xlane.xlu0 %4287
        %v4289 = vsel %vm4285, %v4282, -inf
        %4290 = vmax.xlane.f32.xlu0 %v4289
        %v4291 = vpop.xlane.xlu0 %4290
        %v4292 = vsub.f32 %v4279, %v4288
        %v4293 = vsub.f32 %v4282, %v4291
        %v4294 = vmul.f32 %v4292, 1.442695
        %v4295 = vpow.pop %v4294
        %v4296 = vmul.f32 %v4293, 1.442695
        %v4297 = vpow.pop %v4296
        %v4298 = vsel %vm4285, %v4295, 0.0
        %4299 = vadd.xlane.f32.xlu0 %v4298
        %v4300 = vpop.xlane.xlu0 %4299
        %v4301 = vsel %vm4285, %v4297, 0.0
        %4302 = vadd.xlane.f32.xlu0 %v4301
        %v4303 = vpop.xlane.xlu0 %4302
        %v4304 = vlog2.pop %v4300
        %v4305 = vmul.f32 %v4304, 0.6931472
        %v4306 = vlog2.pop %v4303
        %v4307 = vmul.f32 %v4306, 0.6931472
        %v4308 = vsub.f32 %v4292, %v4305
        %v4309 = vsub.f32 %v4293, %v4307
        %4310 = vst.msk [vmem:[%s913] sm:$0xff] %vm4285, %v4308
        %4311 = vst.msk [vmem:[%s913 + $0x8] sm:$0xff] %vm4285, %v4309
      $region116: #{stransformers_forward.1} parent=107 // pred_fallthru
        _
      %p4312 = scmp.lt.s32.totalorder %s37, 0
      %s4313 = scalar_select %p4312, %s37, 0
      %s4314 = smul.addr %s4313, 2
      %s4315 = smul.addr %s4314, 8
      %s4316 = scalar_lea.vmem %s22, %s4315
      // Predicated region
      $region117: #{stransformers_forward.1} parent=107 // pred_check
        %p4317 = pneg %p590
      $region118: #{stransformers_forward.1} parent=107 // pred_check_branch
        %4319 = sbr.rel (%p4317) target = $region120
      $region119: #{stransformers_forward.1} parent=107 // pred_region
        _
      $region120: #{stransformers_forward.1} parent=107 // pred_fallthru
        _
      // Predicated region
      $region121: #{stransformers_forward.1} parent=107 // pred_check
        %p4320 = pneg %p590
      $region122: #{stransformers_forward.1} parent=107 // pred_check_branch
        %4322 = sbr.rel (%p4320) target = $region124
      $region123: #{stransformers_forward.1} parent=107 // pred_region
        %p4323 = scmp.lt.s32.totalorder %s37, 0
        %s4324 = scalar_select %p4323, %s37, 0
        %s4325 = smul.addr %s4324, 2
        %s4326 = smul.addr %s4325, 8
        %s4327 = scalar_lea.vmem %s22, %s4326
      $region124: #{stransformers_forward.1} parent=107 // pred_fallthru
        _
    $region108: #{stransformers_forward.1} parent=5 // pred_fallthru
      _
    %p4328 = scmp.le.s32.totalorder 2, %s28
    // Predicated region
    $region125: #{stransformers_forward.1} parent=5 // pred_check
      %p4329 = pneg %p4328
    $region126: #{stransformers_forward.1} parent=5 // pred_check_branch
      %4331 = sbr.rel (%p4329) target = $region128
    $region127: #{stransformers_forward.1} parent=5 // pred_region
      %s4332 = ssub.s32 %s28, 2
    $region128: #{stransformers_forward.1} parent=5 // pred_fallthru
      _
  $region6: #{stransformers_forward.1} parent=0 // loop_footer
    %s32 = sadd.s32 1, %s28
  $region7: #{stransformers_forward.1} parent=0 // loop_footer_branch
    %27 = sbr.rel target = $region3
  $region8: #{stransformers_forward.1} parent=0 // loop_exit
    _

</llo_original>
